<compile_context>
chip_gen: v7x
topology: tpu7x:2x2x1
jax: 0.10.0
libtpu: 0.0.40
codegen_flags: <defaults>
</compile_context>

<pallas_src>
import math
import jax
import jax.numpy as jnp
from jax.experimental import pallas as pl
from jax.experimental.pallas import tpu as pltpu

# ----------------------------- configuration -------------------------------
N_NODES = 8                      # nodes per graph
NDIM = 32
EDIM = 32                        # edim == dim -> e = lgx.view(-1, H, d_k) branch
NUM_HEADS = 8
DIM = max(NDIM, EDIM)
D_K = DIM // NUM_HEADS
FFN_HIDDEN = 4 * NDIM
EPS = 1e-5                       # torch.nn.LayerNorm default

BATCH = 16                       # graphs per pallas_call
GRAPHS_PER_STEP = 8              # graphs folded into one grid step
ROWS = GRAPHS_PER_STEP * N_NODES         # 64 dst rows per step
SRC_LANES = N_NODES * DIM                # 256-lane-dense (src, feature) axis
SCORE_LANES = N_NODES * NUM_HEADS        # 64   (src, head) axis
MM_DTYPE = jnp.bfloat16          # matmul operand dtype (accumulation stays f32)


def _layernorm(t, gamma, beta):
    mean = jnp.mean(t, axis=-1, keepdims=True)
    var = jnp.mean((t - mean) ** 2, axis=-1, keepdims=True)
    return (t - mean) * jax.lax.rsqrt(var + EPS) * gamma + beta


# ------------------------------ Pallas kernel ------------------------------
def rgat_kernel(x_ref, xf_ref, e_ref, adjh_ref,
                rep_ref, tileq_ref, headsum_ref, headexp_ref, srcsum_ref,
                wq_ref, bq_ref, wkbd_ref, wvbd_ref, wo_ref, bo_ref,
                g1_ref, be1_ref, w1_ref, bf1_ref, w2_ref, bf2_ref,
                g2_ref, be2_ref,
                out_ref):
    f32 = jnp.float32
    x = x_ref[...]            # [ROWS, NDIM]        node feats (dst rows)
    xf = xf_ref[...]          # [G, N*NDIM]         one row per graph (lane-dense)
    e2 = e_ref[...]           # [ROWS, N*DIM]       edge feats, lane-dense
    adjh = adjh_ref[...]      # [ROWS, N*H]         0/1 edge mask, per (src, head)

    # --- Q/K/V projections (MXU, bf16 operands, f32 accumulation) ---
    q = jnp.dot(x.astype(MM_DTYPE), wq_ref[...], preferred_element_type=f32) + bq_ref[...]
    # k/v are produced directly in the lane-dense per-graph layout
    # krow[g, j*DIM + d] = (x[g, j] @ Wk)[d]  -- no in-kernel reshape needed.
    krow = jnp.dot(xf.astype(MM_DTYPE), wkbd_ref[...], preferred_element_type=f32)
    vrow = jnp.dot(xf.astype(MM_DTYPE), wvbd_ref[...], preferred_element_type=f32)

    # --- replicate each graph's k/v row to that graph's N dst rows (MXU copy) ---
    rep = rep_ref[...]                                                 # [ROWS, G] 0/1
    kb = jnp.dot(rep, krow, preferred_element_type=f32)                # [ROWS, N*DIM]
    vb = jnp.dot(rep, vrow, preferred_element_type=f32)                # [ROWS, N*DIM]

    # --- lane-tile q across the N source slots (MXU copy, no relayout) ---
    qt = jnp.dot(q, tileq_ref[...], preferred_element_type=f32)        # [ROWS, N*DIM]

    # --- scores for every (dst, src, head) in one shot ---
    tmp = (e2 + kb) * qt                                               # VPU, lane-dense
    s = jnp.dot(tmp, headsum_ref[...], preferred_element_type=f32)     # [ROWS, N*H]
    s = jnp.exp(jnp.clip(s * (1.0 / math.sqrt(D_K)), -10.0, 10.0))     # EUP
    s = s * adjh                                # mask non-edges at per-head granularity

    # expand (masked) scores back onto (src, feature) lanes
    sexp = jnp.dot(s, headexp_ref[...], preferred_element_type=f32)    # [ROWS, N*DIM]

    # --- aggregation: z and wv are the same src-group reduction (MXU) ---
    z = jnp.dot(sexp, srcsum_ref[...], preferred_element_type=f32)            # [ROWS, DIM]
    wv = jnp.dot(sexp * (e2 + vb), srcsum_ref[...], preferred_element_type=f32)
    z = jnp.where(z == 0.0, 1.0, z)             # guard nodes with no in-edges
    o = wv * pl.reciprocal(z, approx=True)      # EUP reciprocal, one broadcast multiply

    # --- output projection + residual + LayerNorm ---
    o = jnp.dot(o.astype(MM_DTYPE), wo_ref[...], preferred_element_type=f32) + bo_ref[...]
    t = _layernorm(x + o, g1_ref[...], be1_ref[...])

    # --- FFN + residual + LayerNorm ---
    h = jnp.dot(t.astype(MM_DTYPE), w1_ref[...], preferred_element_type=f32) + bf1_ref[...]
    h = jnp.maximum(h, 0.0)
    f = jnp.dot(h.astype(MM_DTYPE), w2_ref[...], preferred_element_type=f32) + bf2_ref[...]
    out_ref[...] = _layernorm(t + f, g2_ref[...], be2_ref[...])


# --------------------- host-side constant selector matrices ----------------
def _selector_constants():
    n, d, hh, dk = N_NODES, DIM, NUM_HEADS, D_K
    eye_d = jnp.eye(d, dtype=jnp.float32)
    tileq = jnp.tile(eye_d, (1, n))              # [DIM, N*DIM]  q -> q tiled per src
    srcsum = jnp.tile(eye_d, (n, 1))             # [N*DIM, DIM]  sum over src groups
    r = jnp.arange(n * d)
    c = jnp.arange(n * hh)
    headsum = ((r[:, None] // d == c[None, :] // hh) &
               ((r[:, None] % d) // dk == c[None, :] % hh)).astype(jnp.float32)  # [N*DIM, N*H]
    headexp = headsum.T                          # [N*H, N*DIM]  score expansion
    rep = (jnp.arange(ROWS)[:, None] // N_NODES ==
           jnp.arange(GRAPHS_PER_STEP)[None, :]).astype(jnp.float32)             # [ROWS, G]
    return rep, tileq, headsum, headexp, srcsum


# --------------------------------- wrapper ----------------------------------
def rgat_pallas(x, e_dense, adj, p):
    B = x.shape[0]
    assert B % GRAPHS_PER_STEP == 0
    n_steps = B // GRAPHS_PER_STEP

    # host-side glue: lane-dense layouts of the graph (pure reshapes / broadcasts)
    x_rows = x.reshape(B * N_NODES, NDIM)
    x_flat = x.reshape(B, N_NODES * NDIM)
    e2 = e_dense.reshape(B * N_NODES, N_NODES * DIM)
    adjh = jnp.broadcast_to(adj[..., None], (B, N_NODES, N_NODES, NUM_HEADS)
                            ).reshape(B * N_NODES, SCORE_LANES)

    rep, tileq, headsum, headexp, srcsum = _selector_constants()
    eye_n = jnp.eye(N_NODES, dtype=jnp.float32)
    bf = lambda w: w.astype(MM_DTYPE)

    args = (x_rows, x_flat, e2, adjh,
            rep, tileq, headsum, headexp, srcsum,
            bf(p['wq']), p['bq'],
            bf(jnp.kron(eye_n, p['wk'])),        # block-diagonal Wk: xf @ Wk_bd = k, lane-dense
            bf(jnp.kron(eye_n, p['wv'])),
            bf(p['wo']), p['bo'],
            p['g1'], p['be1'],
            bf(p['w1']), p['bf1'], bf(p['w2']), p['bf2'],
            p['g2'], p['be2'])

    row_spec = pl.BlockSpec((ROWS, NDIM), lambda g: (g, 0))
    flat_spec = pl.BlockSpec((GRAPHS_PER_STEP, N_NODES * NDIM), lambda g: (g, 0))
    edge_spec = pl.BlockSpec((ROWS, SRC_LANES), lambda g: (g, 0))
    adjh_spec = pl.BlockSpec((ROWS, SCORE_LANES), lambda g: (g, 0))

    def full(a):   # whole array resident every step (weights / selector constants)
        return pl.BlockSpec(a.shape, lambda g, _nd=a.ndim: (0,) * _nd)

    in_specs = [row_spec, flat_spec, edge_spec, adjh_spec] + [full(a) for a in args[4:]]

    out = pl.pallas_call(
        rgat_kernel,
        out_shape=jax.ShapeDtypeStruct((B * N_NODES, NDIM), jnp.float32),
        grid=(n_steps,),
        in_specs=in_specs,
        out_specs=pl.BlockSpec((ROWS, NDIM), lambda g: (g, 0)),
        compiler_params=pltpu.CompilerParams(
            dimension_semantics=("parallel",)),     # shards batch chunks across v7x TCs
    )(*args)
    return out.reshape(B, N_NODES, NDIM)


# --------------------------- pure-JAX f32 reference --------------------------
def rgat_reference(x, e_dense, adj, p):
    B = x.shape[0]
    q = x @ p['wq'] + p['bq']
    k = x @ p['wk']
    v = x @ p['wv']
    q4 = q.reshape(B, N_NODES, NUM_HEADS, D_K)
    k4 = k.reshape(B, N_NODES, NUM_HEADS, D_K)
    v4 = v.reshape(B, N_NODES, NUM_HEADS, D_K)
    e5 = e_dense.reshape(B, N_NODES, N_NODES, NUM_HEADS, D_K)

    s = (jnp.einsum('bjhd,bihd->bijh', k4, q4)
         + jnp.einsum('bijhd,bihd->bijh', e5, q4)) / math.sqrt(D_K)
    s = jnp.exp(jnp.clip(s, -10.0, 10.0)) * adj[:, :, :, None]
    z = jnp.sum(s, axis=2)
    wv = (jnp.einsum('bijh,bjhd->bihd', s, v4)
          + jnp.einsum('bijh,bijhd->bihd', s, e5))
    z = jnp.where(z == 0.0, 1.0, z)
    o = (wv / z[..., None]).reshape(B, N_NODES, DIM)

    t = _layernorm(x + o @ p['wo'] + p['bo'], p['g1'], p['be1'])
    h1 = jnp.maximum(t @ p['w1'] + p['bf1'], 0.0)
    return _layernorm(t + h1 @ p['w2'] + p['bf2'], p['g2'], p['be2'])


# --------------------------------- driver ------------------------------------
if __name__ == "__main__":
    key = jax.random.PRNGKey(0)
    ks = jax.random.split(key, 20)

    # random per-graph structure: directed edges + guaranteed self-loops
    # (dense emulation of the DGL graph; exact for <=1 edge per (src,dst) pair)
    adj = (jax.random.uniform(ks[0], (BATCH, N_NODES, N_NODES)) < 0.35).astype(jnp.float32)
    adj = jnp.maximum(adj, jnp.eye(N_NODES, dtype=jnp.float32)[None])
    e_dense = 0.5 * jax.random.normal(ks[1], (BATCH, N_NODES, N_NODES, DIM), jnp.float32)
    e_dense = e_dense * adj[..., None]          # zero where no edge

    x = jax.random.normal(ks[2], (BATCH, N_NODES, NDIM), jnp.float32)

    def lin_w(k_, shape):   # (in, out): pre-transposed vs torch nn.Linear weight
        return 0.1 * jax.random.normal(k_, shape, jnp.float32)

    params = {
        'wq': lin_w(ks[3], (NDIM, DIM)),
        'bq': 0.1 * jax.random.normal(ks[4], (1, DIM), jnp.float32),
        'wk': lin_w(ks[5], (NDIM, DIM)),
        'wv': lin_w(ks[6], (NDIM, DIM)),
        'wo': lin_w(ks[7], (DIM, NDIM)),
        'bo': 0.1 * jax.random.normal(ks[8], (1, NDIM), jnp.float32),
        'g1': 1.0 + 0.1 * jax.random.normal(ks[9], (1, NDIM), jnp.float32),
        'be1': 0.1 * jax.random.normal(ks[10], (1, NDIM), jnp.float32),
        'w1': lin_w(ks[11], (NDIM, FFN_HIDDEN)),
        'bf1': 0.1 * jax.random.normal(ks[12], (1, FFN_HIDDEN), jnp.float32),
        'w2': lin_w(ks[13], (FFN_HIDDEN, NDIM)),
        'bf2': 0.1 * jax.random.normal(ks[14], (1, NDIM), jnp.float32),
        'g2': 1.0 + 0.1 * jax.random.normal(ks[15], (1, NDIM), jnp.float32),
        'be2': 0.1 * jax.random.normal(ks[16], (1, NDIM), jnp.float32),
    }

    out = jax.block_until_ready(rgat_pallas(x, e_dense, adj, params))
    ref = jax.block_until_ready(rgat_reference(x, e_dense, adj, params))

    assert out.shape == (BATCH, N_NODES, NDIM)
    assert bool(jnp.all(jnp.isfinite(out)))
    err = float(jnp.max(jnp.abs(out - ref)))
    # tolerance reflects bf16 matmul operands + approx reciprocal in the kernel vs the
    # pure-f32 reference; all elementwise / softmax / LayerNorm math is f32 in both.
    assert jnp.allclose(out, ref, rtol=5e-2, atol=8e-2), f"max abs err {err}"
    print("KERNEL_OK")
</pallas_src>

<mosaic_0001>
module attributes {stable_mosaic.version = 11 : i64} {
  func.func @rgat_kernel(%arg0: i32, %arg1: memref<64x32xf32, #tpu.memory_space<vmem>>, %arg2: memref<8x256xf32, #tpu.memory_space<vmem>>, %arg3: memref<64x256xf32, #tpu.memory_space<vmem>>, %arg4: memref<64x64xf32, #tpu.memory_space<vmem>>, %arg5: memref<64x8xf32, #tpu.memory_space<vmem>>, %arg6: memref<32x256xf32, #tpu.memory_space<vmem>>, %arg7: memref<256x64xf32, #tpu.memory_space<vmem>>, %arg8: memref<64x256xf32, #tpu.memory_space<vmem>>, %arg9: memref<256x32xf32, #tpu.memory_space<vmem>>, %arg10: memref<32x32xbf16, #tpu.memory_space<vmem>>, %arg11: memref<1x32xf32, #tpu.memory_space<vmem>>, %arg12: memref<256x256xbf16, #tpu.memory_space<vmem>>, %arg13: memref<256x256xbf16, #tpu.memory_space<vmem>>, %arg14: memref<32x32xbf16, #tpu.memory_space<vmem>>, %arg15: memref<1x32xf32, #tpu.memory_space<vmem>>, %arg16: memref<1x32xf32, #tpu.memory_space<vmem>>, %arg17: memref<1x32xf32, #tpu.memory_space<vmem>>, %arg18: memref<32x128xbf16, #tpu.memory_space<vmem>>, %arg19: memref<1x128xf32, #tpu.memory_space<vmem>>, %arg20: memref<128x32xbf16, #tpu.memory_space<vmem>>, %arg21: memref<1x32xf32, #tpu.memory_space<vmem>>, %arg22: memref<1x32xf32, #tpu.memory_space<vmem>>, %arg23: memref<1x32xf32, #tpu.memory_space<vmem>>, %arg24: memref<64x32xf32, #tpu.memory_space<vmem>>) attributes {dimension_semantics = [#tpu.dimension_semantics<parallel>], iteration_bounds = array<i64: 2>, scalar_prefetch = 0 : i64, scratch_operands = 0 : i64, tpu.core_type = #tpu.core_type<tc>, window_params = [{transform_indices = @transform_0, window_bounds = array<i64: 64, 32>}, {transform_indices = @transform_1, window_bounds = array<i64: 8, 256>}, {transform_indices = @transform_2, window_bounds = array<i64: 64, 256>}, {transform_indices = @transform_3, window_bounds = array<i64: 64, 64>}, {pipeline_mode = #tpu.pipeline_mode<synchronous>, transform_indices = @transform_4, window_bounds = array<i64: 64, 8>}, {pipeline_mode = #tpu.pipeline_mode<synchronous>, transform_indices = @transform_5, window_bounds = array<i64: 32, 256>}, {pipeline_mode = #tpu.pipeline_mode<synchronous>, transform_indices = @transform_6, window_bounds = array<i64: 256, 64>}, {pipeline_mode = #tpu.pipeline_mode<synchronous>, transform_indices = @transform_7, window_bounds = array<i64: 64, 256>}, {pipeline_mode = #tpu.pipeline_mode<synchronous>, transform_indices = @transform_8, window_bounds = array<i64: 256, 32>}, {pipeline_mode = #tpu.pipeline_mode<synchronous>, transform_indices = @transform_9, window_bounds = array<i64: 32, 32>}, {pipeline_mode = #tpu.pipeline_mode<synchronous>, transform_indices = @transform_10, window_bounds = array<i64: 1, 32>}, {pipeline_mode = #tpu.pipeline_mode<synchronous>, transform_indices = @transform_11, window_bounds = array<i64: 256, 256>}, {pipeline_mode = #tpu.pipeline_mode<synchronous>, transform_indices = @transform_12, window_bounds = array<i64: 256, 256>}, {pipeline_mode = #tpu.pipeline_mode<synchronous>, transform_indices = @transform_13, window_bounds = array<i64: 32, 32>}, {pipeline_mode = #tpu.pipeline_mode<synchronous>, transform_indices = @transform_14, window_bounds = array<i64: 1, 32>}, {pipeline_mode = #tpu.pipeline_mode<synchronous>, transform_indices = @transform_15, window_bounds = array<i64: 1, 32>}, {pipeline_mode = #tpu.pipeline_mode<synchronous>, transform_indices = @transform_16, window_bounds = array<i64: 1, 32>}, {pipeline_mode = #tpu.pipeline_mode<synchronous>, transform_indices = @transform_17, window_bounds = array<i64: 32, 128>}, {pipeline_mode = #tpu.pipeline_mode<synchronous>, transform_indices = @transform_18, window_bounds = array<i64: 1, 128>}, {pipeline_mode = #tpu.pipeline_mode<synchronous>, transform_indices = @transform_19, window_bounds = array<i64: 128, 32>}, {pipeline_mode = #tpu.pipeline_mode<synchronous>, transform_indices = @transform_20, window_bounds = array<i64: 1, 32>}, {pipeline_mode = #tpu.pipeline_mode<synchronous>, transform_indices = @transform_21, window_bounds = array<i64: 1, 32>}, {pipeline_mode = #tpu.pipeline_mode<synchronous>, transform_indices = @transform_22, window_bounds = array<i64: 1, 32>}, {transform_indices = @transform_23, window_bounds = array<i64: 64, 32>}]} {
    %c0 = arith.constant 0 : index
    %c0_0 = arith.constant 0 : index
    %0 = vector.load %arg1[%c0, %c0_0] : memref<64x32xf32, #tpu.memory_space<vmem>>, vector<64x32xf32>
    %c0_1 = arith.constant 0 : index
    %c0_2 = arith.constant 0 : index
    %1 = vector.load %arg2[%c0_1, %c0_2] : memref<8x256xf32, #tpu.memory_space<vmem>>, vector<8x256xf32>
    %c0_3 = arith.constant 0 : index
    %c0_4 = arith.constant 0 : index
    %2 = vector.load %arg3[%c0_3, %c0_4] : memref<64x256xf32, #tpu.memory_space<vmem>>, vector<64x256xf32>
    %c0_5 = arith.constant 0 : index
    %c0_6 = arith.constant 0 : index
    %3 = vector.load %arg4[%c0_5, %c0_6] : memref<64x64xf32, #tpu.memory_space<vmem>>, vector<64x64xf32>
    %4 = arith.truncf %0 : vector<64x32xf32> to vector<64x32xbf16>
    %c0_7 = arith.constant 0 : index
    %c0_8 = arith.constant 0 : index
    %5 = vector.load %arg10[%c0_7, %c0_8] : memref<32x32xbf16, #tpu.memory_space<vmem>>, vector<32x32xbf16>
    %cst = arith.constant dense<0.000000e+00> : vector<64x32xf32>
    %6 = tpu.matmul %4, %5, %cst {dimension_numbers = #tpu.dot_dimension_numbers<[1], [0], [0], [1], [0, 0, 1, 1], [], []>} : vector<64x32xbf16>, vector<32x32xbf16>, vector<64x32xf32> -> vector<64x32xf32>
    %c0_9 = arith.constant 0 : index
    %c0_10 = arith.constant 0 : index
    %7 = vector.load %arg11[%c0_9, %c0_10] : memref<1x32xf32, #tpu.memory_space<vmem>>, vector<1x32xf32>
    %8 = vector.broadcast %7 : vector<1x32xf32> to vector<64x32xf32>
    %9 = arith.addf %6, %8 : vector<64x32xf32>
    %10 = arith.truncf %1 : vector<8x256xf32> to vector<8x256xbf16>
    %c0_11 = arith.constant 0 : index
    %c0_12 = arith.constant 0 : index
    %11 = vector.load %arg12[%c0_11, %c0_12] : memref<256x256xbf16, #tpu.memory_space<vmem>>, vector<256x256xbf16>
    %cst_13 = arith.constant dense<0.000000e+00> : vector<8x256xf32>
    %12 = tpu.matmul %10, %11, %cst_13 {dimension_numbers = #tpu.dot_dimension_numbers<[1], [0], [0], [1], [0, 0, 1, 1], [], []>} : vector<8x256xbf16>, vector<256x256xbf16>, vector<8x256xf32> -> vector<8x256xf32>
    %13 = arith.truncf %1 : vector<8x256xf32> to vector<8x256xbf16>
    %c0_14 = arith.constant 0 : index
    %c0_15 = arith.constant 0 : index
    %14 = vector.load %arg13[%c0_14, %c0_15] : memref<256x256xbf16, #tpu.memory_space<vmem>>, vector<256x256xbf16>
    %cst_16 = arith.constant dense<0.000000e+00> : vector<8x256xf32>
    %15 = tpu.matmul %13, %14, %cst_16 {dimension_numbers = #tpu.dot_dimension_numbers<[1], [0], [0], [1], [0, 0, 1, 1], [], []>} : vector<8x256xbf16>, vector<256x256xbf16>, vector<8x256xf32> -> vector<8x256xf32>
    %c0_17 = arith.constant 0 : index
    %c0_18 = arith.constant 0 : index
    %16 = vector.load %arg5[%c0_17, %c0_18] : memref<64x8xf32, #tpu.memory_space<vmem>>, vector<64x8xf32>
    %cst_19 = arith.constant dense<0.000000e+00> : vector<64x256xf32>
    %17 = tpu.matmul %16, %12, %cst_19 {dimension_numbers = #tpu.dot_dimension_numbers<[1], [0], [0], [1], [0, 0, 1, 1], [], []>} : vector<64x8xf32>, vector<8x256xf32>, vector<64x256xf32> -> vector<64x256xf32>
    %cst_20 = arith.constant dense<0.000000e+00> : vector<64x256xf32>
    %18 = tpu.matmul %16, %15, %cst_20 {dimension_numbers = #tpu.dot_dimension_numbers<[1], [0], [0], [1], [0, 0, 1, 1], [], []>} : vector<64x8xf32>, vector<8x256xf32>, vector<64x256xf32> -> vector<64x256xf32>
    %c0_21 = arith.constant 0 : index
    %c0_22 = arith.constant 0 : index
    %19 = vector.load %arg6[%c0_21, %c0_22] : memref<32x256xf32, #tpu.memory_space<vmem>>, vector<32x256xf32>
    %cst_23 = arith.constant dense<0.000000e+00> : vector<64x256xf32>
    %20 = tpu.matmul %9, %19, %cst_23 {dimension_numbers = #tpu.dot_dimension_numbers<[1], [0], [0], [1], [0, 0, 1, 1], [], []>} : vector<64x32xf32>, vector<32x256xf32>, vector<64x256xf32> -> vector<64x256xf32>
    %21 = arith.addf %2, %17 : vector<64x256xf32>
    %22 = arith.mulf %21, %20 : vector<64x256xf32>
    %c0_24 = arith.constant 0 : index
    %c0_25 = arith.constant 0 : index
    %23 = vector.load %arg7[%c0_24, %c0_25] : memref<256x64xf32, #tpu.memory_space<vmem>>, vector<256x64xf32>
    %cst_26 = arith.constant dense<0.000000e+00> : vector<64x64xf32>
    %24 = tpu.matmul %22, %23, %cst_26 {dimension_numbers = #tpu.dot_dimension_numbers<[1], [0], [0], [1], [0, 0, 1, 1], [], []>} : vector<64x256xf32>, vector<256x64xf32>, vector<64x64xf32> -> vector<64x64xf32>
    %cst_27 = arith.constant 5.000000e-01 : f32
    %25 = vector.broadcast %cst_27 : f32 to vector<64x64xf32>
    %26 = arith.mulf %24, %25 : vector<64x64xf32>
    %cst_28 = arith.constant -1.000000e+01 : f32
    %cst_29 = arith.constant 1.000000e+01 : f32
    %27 = vector.broadcast %cst_28 : f32 to vector<64x64xf32>
    %28 = arith.maximumf %27, %26 : vector<64x64xf32>
    %29 = vector.broadcast %cst_29 : f32 to vector<64x64xf32>
    %30 = arith.minimumf %29, %28 : vector<64x64xf32>
    %31 = math.exp %30 : vector<64x64xf32>
    %32 = arith.mulf %31, %3 : vector<64x64xf32>
    %c0_30 = arith.constant 0 : index
    %c0_31 = arith.constant 0 : index
    %33 = vector.load %arg8[%c0_30, %c0_31] : memref<64x256xf32, #tpu.memory_space<vmem>>, vector<64x256xf32>
    %cst_32 = arith.constant dense<0.000000e+00> : vector<64x256xf32>
    %34 = tpu.matmul %32, %33, %cst_32 {dimension_numbers = #tpu.dot_dimension_numbers<[1], [0], [0], [1], [0, 0, 1, 1], [], []>} : vector<64x64xf32>, vector<64x256xf32>, vector<64x256xf32> -> vector<64x256xf32>
    %c0_33 = arith.constant 0 : index
    %c0_34 = arith.constant 0 : index
    %35 = vector.load %arg9[%c0_33, %c0_34] : memref<256x32xf32, #tpu.memory_space<vmem>>, vector<256x32xf32>
    %cst_35 = arith.constant dense<0.000000e+00> : vector<64x32xf32>
    %36 = tpu.matmul %34, %35, %cst_35 {dimension_numbers = #tpu.dot_dimension_numbers<[1], [0], [0], [1], [0, 0, 1, 1], [], []>} : vector<64x256xf32>, vector<256x32xf32>, vector<64x32xf32> -> vector<64x32xf32>
    %37 = arith.addf %2, %18 : vector<64x256xf32>
    %38 = arith.mulf %34, %37 : vector<64x256xf32>
    %c0_36 = arith.constant 0 : index
    %c0_37 = arith.constant 0 : index
    %39 = vector.load %arg9[%c0_36, %c0_37] : memref<256x32xf32, #tpu.memory_space<vmem>>, vector<256x32xf32>
    %cst_38 = arith.constant dense<0.000000e+00> : vector<64x32xf32>
    %40 = tpu.matmul %38, %39, %cst_38 {dimension_numbers = #tpu.dot_dimension_numbers<[1], [0], [0], [1], [0, 0, 1, 1], [], []>} : vector<64x256xf32>, vector<256x32xf32>, vector<64x32xf32> -> vector<64x32xf32>
    %cst_39 = arith.constant 0.000000e+00 : f32
    %41 = vector.broadcast %cst_39 : f32 to vector<64x32xf32>
    %42 = arith.cmpf oeq, %36, %41 : vector<64x32xf32>
    %cst_40 = arith.constant 1.000000e+00 : f32
    %43 = vector.broadcast %cst_40 : f32 to vector<64x32xf32>
    %44 = arith.select %42, %43, %36 : vector<64x32xi1>, vector<64x32xf32>
    %45 = tpu.reciprocal %44 {approx = true} : vector<64x32xf32> -> vector<64x32xf32>
    %46 = arith.mulf %40, %45 : vector<64x32xf32>
    %47 = arith.truncf %46 : vector<64x32xf32> to vector<64x32xbf16>
    %c0_41 = arith.constant 0 : index
    %c0_42 = arith.constant 0 : index
    %48 = vector.load %arg14[%c0_41, %c0_42] : memref<32x32xbf16, #tpu.memory_space<vmem>>, vector<32x32xbf16>
    %cst_43 = arith.constant dense<0.000000e+00> : vector<64x32xf32>
    %49 = tpu.matmul %47, %48, %cst_43 {dimension_numbers = #tpu.dot_dimension_numbers<[1], [0], [0], [1], [0, 0, 1, 1], [], []>} : vector<64x32xbf16>, vector<32x32xbf16>, vector<64x32xf32> -> vector<64x32xf32>
    %c0_44 = arith.constant 0 : index
    %c0_45 = arith.constant 0 : index
    %50 = vector.load %arg15[%c0_44, %c0_45] : memref<1x32xf32, #tpu.memory_space<vmem>>, vector<1x32xf32>
    %51 = vector.broadcast %50 : vector<1x32xf32> to vector<64x32xf32>
    %52 = arith.addf %49, %51 : vector<64x32xf32>
    %53 = arith.addf %0, %52 : vector<64x32xf32>
    %c0_46 = arith.constant 0 : index
    %c0_47 = arith.constant 0 : index
    %54 = vector.load %arg16[%c0_46, %c0_47] : memref<1x32xf32, #tpu.memory_space<vmem>>, vector<1x32xf32>
    %c0_48 = arith.constant 0 : index
    %c0_49 = arith.constant 0 : index
    %55 = vector.load %arg17[%c0_48, %c0_49] : memref<1x32xf32, #tpu.memory_space<vmem>>, vector<1x32xf32>
    %cst_50 = arith.constant dense<0.000000e+00> : vector<64xf32>
    %56 = vector.multi_reduction <add>, %53, %cst_50 [1] : vector<64x32xf32> to vector<64xf32>
    %57 = vector.shape_cast %56 : vector<64xf32> to vector<64x1xf32>
    %cst_51 = arith.constant 3.200000e+01 : f32
    %58 = vector.broadcast %cst_51 : f32 to vector<64x1xf32>
    %59 = arith.divf %57, %58 : vector<64x1xf32>
    %60 = vector.broadcast %59 : vector<64x1xf32> to vector<64x32xf32>
    %61 = arith.subf %53, %60 : vector<64x32xf32>
    %62 = arith.mulf %61, %61 : vector<64x32xf32>
    %cst_52 = arith.constant dense<0.000000e+00> : vector<64xf32>
    %63 = vector.multi_reduction <add>, %62, %cst_52 [1] : vector<64x32xf32> to vector<64xf32>
    %64 = vector.shape_cast %63 : vector<64xf32> to vector<64x1xf32>
    %cst_53 = arith.constant 3.200000e+01 : f32
    %65 = vector.broadcast %cst_53 : f32 to vector<64x1xf32>
    %66 = arith.divf %64, %65 : vector<64x1xf32>
    %67 = vector.broadcast %59 : vector<64x1xf32> to vector<64x32xf32>
    %68 = arith.subf %53, %67 : vector<64x32xf32>
    %cst_54 = arith.constant 9.99999974E-6 : f32
    %69 = vector.broadcast %cst_54 : f32 to vector<64x1xf32>
    %70 = arith.addf %66, %69 : vector<64x1xf32>
    %71 = math.rsqrt %70 : vector<64x1xf32>
    %72 = vector.broadcast %71 : vector<64x1xf32> to vector<64x32xf32>
    %73 = arith.mulf %68, %72 : vector<64x32xf32>
    %74 = vector.broadcast %54 : vector<1x32xf32> to vector<64x32xf32>
    %75 = arith.mulf %73, %74 : vector<64x32xf32>
    %76 = vector.broadcast %55 : vector<1x32xf32> to vector<64x32xf32>
    %77 = arith.addf %75, %76 : vector<64x32xf32>
    %78 = arith.truncf %77 : vector<64x32xf32> to vector<64x32xbf16>
    %c0_55 = arith.constant 0 : index
    %c0_56 = arith.constant 0 : index
    %79 = vector.load %arg18[%c0_55, %c0_56] : memref<32x128xbf16, #tpu.memory_space<vmem>>, vector<32x128xbf16>
    %cst_57 = arith.constant dense<0.000000e+00> : vector<64x128xf32>
    %80 = tpu.matmul %78, %79, %cst_57 {dimension_numbers = #tpu.dot_dimension_numbers<[1], [0], [0], [1], [0, 0, 1, 1], [], []>} : vector<64x32xbf16>, vector<32x128xbf16>, vector<64x128xf32> -> vector<64x128xf32>
    %c0_58 = arith.constant 0 : index
    %c0_59 = arith.constant 0 : index
    %81 = vector.load %arg19[%c0_58, %c0_59] : memref<1x128xf32, #tpu.memory_space<vmem>>, vector<1x128xf32>
    %82 = vector.broadcast %81 : vector<1x128xf32> to vector<64x128xf32>
    %83 = arith.addf %80, %82 : vector<64x128xf32>
    %cst_60 = arith.constant 0.000000e+00 : f32
    %84 = vector.broadcast %cst_60 : f32 to vector<64x128xf32>
    %85 = arith.maximumf %83, %84 : vector<64x128xf32>
    %86 = arith.truncf %85 : vector<64x128xf32> to vector<64x128xbf16>
    %c0_61 = arith.constant 0 : index
    %c0_62 = arith.constant 0 : index
    %87 = vector.load %arg20[%c0_61, %c0_62] : memref<128x32xbf16, #tpu.memory_space<vmem>>, vector<128x32xbf16>
    %cst_63 = arith.constant dense<0.000000e+00> : vector<64x32xf32>
    %88 = tpu.matmul %86, %87, %cst_63 {dimension_numbers = #tpu.dot_dimension_numbers<[1], [0], [0], [1], [0, 0, 1, 1], [], []>} : vector<64x128xbf16>, vector<128x32xbf16>, vector<64x32xf32> -> vector<64x32xf32>
    %c0_64 = arith.constant 0 : index
    %c0_65 = arith.constant 0 : index
    %89 = vector.load %arg21[%c0_64, %c0_65] : memref<1x32xf32, #tpu.memory_space<vmem>>, vector<1x32xf32>
    %90 = vector.broadcast %89 : vector<1x32xf32> to vector<64x32xf32>
    %91 = arith.addf %88, %90 : vector<64x32xf32>
    %92 = arith.addf %77, %91 : vector<64x32xf32>
    %c0_66 = arith.constant 0 : index
    %c0_67 = arith.constant 0 : index
    %93 = vector.load %arg22[%c0_66, %c0_67] : memref<1x32xf32, #tpu.memory_space<vmem>>, vector<1x32xf32>
    %c0_68 = arith.constant 0 : index
    %c0_69 = arith.constant 0 : index
    %94 = vector.load %arg23[%c0_68, %c0_69] : memref<1x32xf32, #tpu.memory_space<vmem>>, vector<1x32xf32>
    %cst_70 = arith.constant dense<0.000000e+00> : vector<64xf32>
    %95 = vector.multi_reduction <add>, %92, %cst_70 [1] : vector<64x32xf32> to vector<64xf32>
    %96 = vector.shape_cast %95 : vector<64xf32> to vector<64x1xf32>
    %cst_71 = arith.constant 3.200000e+01 : f32
    %97 = vector.broadcast %cst_71 : f32 to vector<64x1xf32>
    %98 = arith.divf %96, %97 : vector<64x1xf32>
    %99 = vector.broadcast %98 : vector<64x1xf32> to vector<64x32xf32>
    %100 = arith.subf %92, %99 : vector<64x32xf32>
    %101 = arith.mulf %100, %100 : vector<64x32xf32>
    %cst_72 = arith.constant dense<0.000000e+00> : vector<64xf32>
    %102 = vector.multi_reduction <add>, %101, %cst_72 [1] : vector<64x32xf32> to vector<64xf32>
    %103 = vector.shape_cast %102 : vector<64xf32> to vector<64x1xf32>
    %cst_73 = arith.constant 3.200000e+01 : f32
    %104 = vector.broadcast %cst_73 : f32 to vector<64x1xf32>
    %105 = arith.divf %103, %104 : vector<64x1xf32>
    %106 = vector.broadcast %98 : vector<64x1xf32> to vector<64x32xf32>
    %107 = arith.subf %92, %106 : vector<64x32xf32>
    %cst_74 = arith.constant 9.99999974E-6 : f32
    %108 = vector.broadcast %cst_74 : f32 to vector<64x1xf32>
    %109 = arith.addf %105, %108 : vector<64x1xf32>
    %110 = math.rsqrt %109 : vector<64x1xf32>
    %111 = vector.broadcast %110 : vector<64x1xf32> to vector<64x32xf32>
    %112 = arith.mulf %107, %111 : vector<64x32xf32>
    %113 = vector.broadcast %93 : vector<1x32xf32> to vector<64x32xf32>
    %114 = arith.mulf %112, %113 : vector<64x32xf32>
    %115 = vector.broadcast %94 : vector<1x32xf32> to vector<64x32xf32>
    %116 = arith.addf %114, %115 : vector<64x32xf32>
    %c0_75 = arith.constant 0 : index
    %c0_76 = arith.constant 0 : index
    %117 = vector.load %arg24[%c0_75, %c0_76] : memref<64x32xf32, #tpu.memory_space<vmem>>, vector<64x32xf32>
    tpu.vector_store %arg24[%c0_75, %c0_76], %116 {strides = array<i32>} : memref<64x32xf32, #tpu.memory_space<vmem>>, vector<64x32xf32>,
    return
  }
  func.func @transform_0(%arg0: i32) -> (i32, i32) {
    %c0_i32 = arith.constant 0 : i32
    %c0_i32_0 = arith.constant 0 : i32
    return %arg0, %c0_i32 : i32, i32
  }
  func.func @transform_1(%arg0: i32) -> (i32, i32) {
    %c0_i32 = arith.constant 0 : i32
    %c0_i32_0 = arith.constant 0 : i32
    return %arg0, %c0_i32 : i32, i32
  }
  func.func @transform_2(%arg0: i32) -> (i32, i32) {
    %c0_i32 = arith.constant 0 : i32
    %c0_i32_0 = arith.constant 0 : i32
    return %arg0, %c0_i32 : i32, i32
  }
  func.func @transform_3(%arg0: i32) -> (i32, i32) {
    %c0_i32 = arith.constant 0 : i32
    %c0_i32_0 = arith.constant 0 : i32
    return %arg0, %c0_i32 : i32, i32
  }
  func.func @transform_4(%arg0: i32) -> (i32, i32) {
    %c0_i32 = arith.constant 0 : i32
    %c0_i32_0 = arith.constant 0 : i32
    %c0_i32_1 = arith.constant 0 : i32
    return %c0_i32, %c0_i32_0 : i32, i32
  }
  func.func @transform_5(%arg0: i32) -> (i32, i32) {
    %c0_i32 = arith.constant 0 : i32
    %c0_i32_0 = arith.constant 0 : i32
    %c0_i32_1 = arith.constant 0 : i32
    return %c0_i32, %c0_i32_0 : i32, i32
  }
  func.func @transform_6(%arg0: i32) -> (i32, i32) {
    %c0_i32 = arith.constant 0 : i32
    %c0_i32_0 = arith.constant 0 : i32
    %c0_i32_1 = arith.constant 0 : i32
    return %c0_i32, %c0_i32_0 : i32, i32
  }
  func.func @transform_7(%arg0: i32) -> (i32, i32) {
    %c0_i32 = arith.constant 0 : i32
    %c0_i32_0 = arith.constant 0 : i32
    %c0_i32_1 = arith.constant 0 : i32
    return %c0_i32, %c0_i32_0 : i32, i32
  }
  func.func @transform_8(%arg0: i32) -> (i32, i32) {
    %c0_i32 = arith.constant 0 : i32
    %c0_i32_0 = arith.constant 0 : i32
    %c0_i32_1 = arith.constant 0 : i32
    return %c0_i32, %c0_i32_0 : i32, i32
  }
  func.func @transform_9(%arg0: i32) -> (i32, i32) {
    %c0_i32 = arith.constant 0 : i32
    %c0_i32_0 = arith.constant 0 : i32
    %c0_i32_1 = arith.constant 0 : i32
    return %c0_i32, %c0_i32_0 : i32, i32
  }
  func.func @transform_10(%arg0: i32) -> (i32, i32) {
    %c0_i32 = arith.constant 0 : i32
    %c0_i32_0 = arith.constant 0 : i32
    %c0_i32_1 = arith.constant 0 : i32
    return %c0_i32, %c0_i32_0 : i32, i32
  }
  func.func @transform_11(%arg0: i32) -> (i32, i32) {
    %c0_i32 = arith.constant 0 : i32
    %c0_i32_0 = arith.constant 0 : i32
    %c0_i32_1 = arith.constant 0 : i32
    return %c0_i32, %c0_i32_0 : i32, i32
  }
  func.func @transform_12(%arg0: i32) -> (i32, i32) {
    %c0_i32 = arith.constant 0 : i32
    %c0_i32_0 = arith.constant 0 : i32
    %c0_i32_1 = arith.constant 0 : i32
    return %c0_i32, %c0_i32_0 : i32, i32
  }
  func.func @transform_13(%arg0: i32) -> (i32, i32) {
    %c0_i32 = arith.constant 0 : i32
    %c0_i32_0 = arith.constant 0 : i32
    %c0_i32_1 = arith.constant 0 : i32
    return %c0_i32, %c0_i32_0 : i32, i32
  }
  func.func @transform_14(%arg0: i32) -> (i32, i32) {
    %c0_i32 = arith.constant 0 : i32
    %c0_i32_0 = arith.constant 0 : i32
    %c0_i32_1 = arith.constant 0 : i32
    return %c0_i32, %c0_i32_0 : i32, i32
  }
  func.func @transform_15(%arg0: i32) -> (i32, i32) {
    %c0_i32 = arith.constant 0 : i32
    %c0_i32_0 = arith.constant 0 : i32
    %c0_i32_1 = arith.constant 0 : i32
    return %c0_i32, %c0_i32_0 : i32, i32
  }
  func.func @transform_16(%arg0: i32) -> (i32, i32) {
    %c0_i32 = arith.constant 0 : i32
    %c0_i32_0 = arith.constant 0 : i32
    %c0_i32_1 = arith.constant 0 : i32
    return %c0_i32, %c0_i32_0 : i32, i32
  }
  func.func @transform_17(%arg0: i32) -> (i32, i32) {
    %c0_i32 = arith.constant 0 : i32
    %c0_i32_0 = arith.constant 0 : i32
    %c0_i32_1 = arith.constant 0 : i32
    return %c0_i32, %c0_i32_0 : i32, i32
  }
  func.func @transform_18(%arg0: i32) -> (i32, i32) {
    %c0_i32 = arith.constant 0 : i32
    %c0_i32_0 = arith.constant 0 : i32
    %c0_i32_1 = arith.constant 0 : i32
    return %c0_i32, %c0_i32_0 : i32, i32
  }
  func.func @transform_19(%arg0: i32) -> (i32, i32) {
    %c0_i32 = arith.constant 0 : i32
    %c0_i32_0 = arith.constant 0 : i32
    %c0_i32_1 = arith.constant 0 : i32
    return %c0_i32, %c0_i32_0 : i32, i32
  }
  func.func @transform_20(%arg0: i32) -> (i32, i32) {
    %c0_i32 = arith.constant 0 : i32
    %c0_i32_0 = arith.constant 0 : i32
    %c0_i32_1 = arith.constant 0 : i32
    return %c0_i32, %c0_i32_0 : i32, i32
  }
  func.func @transform_21(%arg0: i32) -> (i32, i32) {
    %c0_i32 = arith.constant 0 : i32
    %c0_i32_0 = arith.constant 0 : i32
    %c0_i32_1 = arith.constant 0 : i32
    return %c0_i32, %c0_i32_0 : i32, i32
  }
  func.func @transform_22(%arg0: i32) -> (i32, i32) {
    %c0_i32 = arith.constant 0 : i32
    %c0_i32_0 = arith.constant 0 : i32
    %c0_i32_1 = arith.constant 0 : i32
    return %c0_i32, %c0_i32_0 : i32, i32
  }
  func.func @transform_23(%arg0: i32) -> (i32, i32) {
    %c0_i32 = arith.constant 0 : i32
    %c0_i32_0 = arith.constant 0 : i32
    return %arg0, %c0_i32 : i32, i32
  }
}

</mosaic_0001>

<llo_original>
// kernel: tpu_custom_call.1
$region0: #{tpu_custom_call.1}
  #allocation0 [shape = 'u32[]', space=smem, size = 0x4, offset = 0x4, fixed_abs, tag = 'smem constant byte address 0x4 - core index']
  #allocation1 [shape = 'u32[144,128]{1,0:T(1,128)}', space=vmem, size = 0x12000, scoped, tag = 'internal scratch']
  %s0 = inlined_call_operand.vmem [shape: f32[128,32], index: 0, kind: input, shape index: {}]
  %s1 = inlined_call_operand.hbm [shape: f32[16,256], index: 1, kind: input, shape index: {}]
  %s2 = inlined_call_operand.vmem [shape: f32[128,256], index: 2, kind: input, shape index: {}]
  %s3 = inlined_call_operand.vmem [shape: f32[128,64], index: 3, kind: input, shape index: {}]
  %s4 = inlined_call_operand.vmem [shape: f32[64,8], index: 4, kind: input, shape index: {}]
  %s5 = inlined_call_operand.vmem [shape: f32[32,256], index: 5, kind: input, shape index: {}]
  %s6 = inlined_call_operand.vmem [shape: f32[256,64], index: 6, kind: input, shape index: {}]
  %s7 = inlined_call_operand.vmem [shape: f32[64,256], index: 7, kind: input, shape index: {}]
  %s8 = inlined_call_operand.vmem [shape: f32[256,32], index: 8, kind: input, shape index: {}]
  %s9 = inlined_call_operand.vmem [shape: bf16[32,32], index: 9, kind: input, shape index: {}]
  %s10 = inlined_call_operand.vmem [shape: f32[1,32], index: 10, kind: input, shape index: {}]
  %s11 = inlined_call_operand.vmem [shape: bf16[256,256], index: 11, kind: input, shape index: {}]
  %s12 = inlined_call_operand.vmem [shape: bf16[256,256], index: 12, kind: input, shape index: {}]
  %s13 = inlined_call_operand.vmem [shape: bf16[32,32], index: 13, kind: input, shape index: {}]
  %s14 = inlined_call_operand.vmem [shape: f32[1,32], index: 14, kind: input, shape index: {}]
  %s15 = inlined_call_operand.vmem [shape: f32[1,32], index: 15, kind: input, shape index: {}]
  %s16 = inlined_call_operand.vmem [shape: f32[1,32], index: 16, kind: input, shape index: {}]
  %s17 = inlined_call_operand.vmem [shape: bf16[32,128], index: 17, kind: input, shape index: {}]
  %s18 = inlined_call_operand.hbm [shape: f32[1,128], index: 18, kind: input, shape index: {}]
  %s19 = inlined_call_operand.vmem [shape: bf16[128,32], index: 19, kind: input, shape index: {}]
  %s20 = inlined_call_operand.vmem [shape: f32[1,32], index: 20, kind: input, shape index: {}]
  %s21 = inlined_call_operand.vmem [shape: f32[1,32], index: 21, kind: input, shape index: {}]
  %s22 = inlined_call_operand.vmem [shape: f32[1,32], index: 22, kind: input, shape index: {}]
  %s23 = inlined_call_operand.vmem [shape: f32[128,32], index: 23, kind: output, shape index: {}]
  %s24 = sld [smem:[#allocation0]]
  $region133: #{tpu_custom_call.1} parent=0
    _
  %s26 = ssub.s32 1, %s24
  %s27 = scalar_select 0, %s26, %s24
  $region1: #{tpu_custom_call.1} parent=0
    #allocation2 [shape = 'u8[16384]{0}', space=vmem, size = 0x4000, scoped, tag = 'input window, operand 1']
    #allocation3 [shape = 's32[2]{0}', space=sflag, size = 0x8, scoped, tag = 'scoped memory for tpu_custom_call.1']
    #allocation4 [shape = 'u8[512]{0}', space=vmem, size = 0x400, scoped, tag = 'input window, operand 18, single buffered']
    #allocation5 [shape = 's32[1]{0}', space=sflag, size = 0x4, scoped, tag = 'scoped memory for tpu_custom_call.1']
    %28 = vsyncpa [#allocation3], 0
    %s29 = scalar_lea.sflag [#allocation3], 1
    %30 = vsyncpa %s29, 0
    %31 = vsyncpa [#allocation5], 0
    loop: start=0, step=1, limit=4
    $region2: #{tpu_custom_call.1} parent=1 // loop_pre_header
      _
    $region3: #{tpu_custom_call.1} parent=1 // loop_header
      %s33 = sphi 0, %s37
      %p34 = scmp.ge.s32.totalorder %s33, 4
      %s43 = sphi 0, %s45
      %s46 = sphi 0, %s43
      %s47 = sphi 0, %s46
      %s63 = sphi 0, %s47
      %s69 = sphi 0, %s71
      %s72 = sphi 0, %s69
      %s73 = sphi 0, %s72
      %s89 = sphi 0, %s73
      %s95 = sphi 0, %s97
      %s98 = sphi 0, %s95
      %s99 = sphi 0, %s98
      %s115 = sphi 0, %s99
      %s121 = sphi 0, %s123
      %s124 = sphi 0, %s121
      %s125 = sphi 0, %s124
      %s141 = sphi 0, %s125
      %s145 = sphi 0, %s145
      %s147 = sphi 0, %s145
      %s148 = sphi 0, %s147
      %s162 = sphi 0, %s148
      %s166 = sphi 0, %s166
      %s168 = sphi 0, %s166
      %s169 = sphi 0, %s168
      %s183 = sphi 0, %s169
      %s187 = sphi 0, %s187
      %s189 = sphi 0, %s187
      %s190 = sphi 0, %s189
      %s204 = sphi 0, %s190
      %s208 = sphi 0, %s208
      %s210 = sphi 0, %s208
      %s211 = sphi 0, %s210
      %s225 = sphi 0, %s211
      %s229 = sphi 0, %s229
      %s231 = sphi 0, %s229
      %s232 = sphi 0, %s231
      %s246 = sphi 0, %s232
      %s250 = sphi 0, %s250
      %s252 = sphi 0, %s250
      %s253 = sphi 0, %s252
      %s267 = sphi 0, %s253
      %s271 = sphi 0, %s271
      %s273 = sphi 0, %s271
      %s274 = sphi 0, %s273
      %s288 = sphi 0, %s274
      %s292 = sphi 0, %s292
      %s294 = sphi 0, %s292
      %s295 = sphi 0, %s294
      %s309 = sphi 0, %s295
      %s313 = sphi 0, %s313
      %s315 = sphi 0, %s313
      %s316 = sphi 0, %s315
      %s330 = sphi 0, %s316
      %s334 = sphi 0, %s334
      %s336 = sphi 0, %s334
      %s337 = sphi 0, %s336
      %s351 = sphi 0, %s337
      %s355 = sphi 0, %s355
      %s357 = sphi 0, %s355
      %s358 = sphi 0, %s357
      %s372 = sphi 0, %s358
      %s376 = sphi 0, %s376
      %s378 = sphi 0, %s376
      %s379 = sphi 0, %s378
      %s393 = sphi 0, %s379
      %s397 = sphi 0, %s397
      %s399 = sphi 0, %s397
      %s400 = sphi 0, %s399
      %s414 = sphi 0, %s400
      %s418 = sphi 0, %s418
      %s420 = sphi 0, %s418
      %s421 = sphi 0, %s420
      %s435 = sphi 0, %s421
      %s439 = sphi 0, %s439
      %s441 = sphi 0, %s439
      %s442 = sphi 0, %s441
      %s456 = sphi 0, %s442
      %s460 = sphi 0, %s460
      %s462 = sphi 0, %s460
      %s463 = sphi 0, %s462
      %s477 = sphi 0, %s463
      %s481 = sphi 0, %s481
      %s483 = sphi 0, %s481
      %s484 = sphi 0, %s483
      %s498 = sphi 0, %s484
      %s502 = sphi 0, %s502
      %s504 = sphi 0, %s502
      %s505 = sphi 0, %s504
      %s519 = sphi 0, %s505
      %s523 = sphi 0, %s523
      %s525 = sphi 0, %s523
      %s526 = sphi 0, %s525
      %s540 = sphi 0, %s526
      %s546 = sphi 0, %s548
      %s549 = sphi 0, %s546
      %s550 = sphi 0, %s549
      %s566 = sphi 0, %s550
    $region4: #{tpu_custom_call.1} parent=1 // loop_header_branch
      %36 = sbr.rel (%p34) target = $region8
    $region5: #{tpu_custom_call.1} parent=1 // loop_body
      %s38 = ssub.s32 %s33, 1
      %s39 = ssub.s32 %s33, 2
      %s40 = sadd.s32 %s33, 1
      %s41 = ssub.s32 %s33, %s40
      %p42 = scmp.eq.s32.totalorder %s41, 0
      %s44 = sadd.s32 %s43, 1
      %s45 = scalar_select %p42, %s43, %s44
      %p48 = pneg %p42
      %p49 = scmp.eq.s32.totalorder %s33, 1
      %p50 = por %p48, %p49
      %p51 = scmp.ne.s32.totalorder %s43, %s46
      %p52 = scmp.eq.s32.totalorder %s33, 0
      %p53 = por %p51, %p52
      %p54 = scmp.ne.s32.totalorder %s43, %s46
      %p55 = scmp.eq.s32.totalorder %s38, 1
      %p56 = por %p54, %p55
      %p57 = scmp.ne.s32.totalorder %s46, %s47
      %p58 = scmp.eq.s32.totalorder %s38, 0
      %p59 = por %p57, %p58
      %p60 = scmp.ne.s32.totalorder %s46, %s47
      %p61 = scmp.eq.s32.totalorder %s39, 1
      %p62 = por %p60, %p61
      %p64 = scmp.ne.s32.totalorder %s47, %s63
      %p65 = scmp.eq.s32.totalorder %s39, 0
      %p66 = por %p64, %p65
      %s67 = ssub.s32 %s33, %s40
      %p68 = scmp.eq.s32.totalorder %s67, 0
      %s70 = sadd.s32 %s69, 1
      %s71 = scalar_select %p68, %s69, %s70
      %p74 = pneg %p68
      %p75 = scmp.eq.s32.totalorder %s33, 1
      %p76 = por %p74, %p75
      %p77 = scmp.ne.s32.totalorder %s69, %s72
      %p78 = scmp.eq.s32.totalorder %s33, 0
      %p79 = por %p77, %p78
      %p80 = scmp.ne.s32.totalorder %s69, %s72
      %p81 = scmp.eq.s32.totalorder %s38, 1
      %p82 = por %p80, %p81
      %p83 = scmp.ne.s32.totalorder %s72, %s73
      %p84 = scmp.eq.s32.totalorder %s38, 0
      %p85 = por %p83, %p84
      %p86 = scmp.ne.s32.totalorder %s72, %s73
      %p87 = scmp.eq.s32.totalorder %s39, 1
      %p88 = por %p86, %p87
      %p90 = scmp.ne.s32.totalorder %s73, %s89
      %p91 = scmp.eq.s32.totalorder %s39, 0
      %p92 = por %p90, %p91
      %s93 = ssub.s32 %s33, %s40
      %p94 = scmp.eq.s32.totalorder %s93, 0
      %s96 = sadd.s32 %s95, 1
      %s97 = scalar_select %p94, %s95, %s96
      %p100 = pneg %p94
      %p101 = scmp.eq.s32.totalorder %s33, 1
      %p102 = por %p100, %p101
      %p103 = scmp.ne.s32.totalorder %s95, %s98
      %p104 = scmp.eq.s32.totalorder %s33, 0
      %p105 = por %p103, %p104
      %p106 = scmp.ne.s32.totalorder %s95, %s98
      %p107 = scmp.eq.s32.totalorder %s38, 1
      %p108 = por %p106, %p107
      %p109 = scmp.ne.s32.totalorder %s98, %s99
      %p110 = scmp.eq.s32.totalorder %s38, 0
      %p111 = por %p109, %p110
      %p112 = scmp.ne.s32.totalorder %s98, %s99
      %p113 = scmp.eq.s32.totalorder %s39, 1
      %p114 = por %p112, %p113
      %p116 = scmp.ne.s32.totalorder %s99, %s115
      %p117 = scmp.eq.s32.totalorder %s39, 0
      %p118 = por %p116, %p117
      %s119 = ssub.s32 %s33, %s40
      %p120 = scmp.eq.s32.totalorder %s119, 0
      %s122 = sadd.s32 %s121, 1
      %s123 = scalar_select %p120, %s121, %s122
      %p126 = pneg %p120
      %p127 = scmp.eq.s32.totalorder %s33, 1
      %p128 = por %p126, %p127
      %p129 = scmp.ne.s32.totalorder %s121, %s124
      %p130 = scmp.eq.s32.totalorder %s33, 0
      %p131 = por %p129, %p130
      %p132 = scmp.ne.s32.totalorder %s121, %s124
      %p133 = scmp.eq.s32.totalorder %s38, 1
      %p134 = por %p132, %p133
      %p135 = scmp.ne.s32.totalorder %s124, %s125
      %p136 = scmp.eq.s32.totalorder %s38, 0
      %p137 = por %p135, %p136
      %p138 = scmp.ne.s32.totalorder %s124, %s125
      %p139 = scmp.eq.s32.totalorder %s39, 1
      %p140 = por %p138, %p139
      %p142 = scmp.ne.s32.totalorder %s125, %s141
      %p143 = scmp.eq.s32.totalorder %s39, 0
      %p144 = por %p142, %p143
      %s146 = sadd.s32 %s145, 1
      %p149 = scmp.eq.s32.totalorder %s33, 1
      %p150 = scmp.ne.s32.totalorder %s145, %s147
      %p151 = scmp.eq.s32.totalorder %s33, 0
      %p152 = por %p150, %p151
      %p153 = scmp.ne.s32.totalorder %s145, %s147
      %p154 = scmp.eq.s32.totalorder %s38, 1
      %p155 = por %p153, %p154
      %p156 = scmp.ne.s32.totalorder %s147, %s148
      %p157 = scmp.eq.s32.totalorder %s38, 0
      %p158 = por %p156, %p157
      %p159 = scmp.ne.s32.totalorder %s147, %s148
      %p160 = scmp.eq.s32.totalorder %s39, 1
      %p161 = por %p159, %p160
      %p163 = scmp.ne.s32.totalorder %s148, %s162
      %p164 = scmp.eq.s32.totalorder %s39, 0
      %p165 = por %p163, %p164
      %s167 = sadd.s32 %s166, 1
      %p170 = scmp.eq.s32.totalorder %s33, 1
      %p171 = scmp.ne.s32.totalorder %s166, %s168
      %p172 = scmp.eq.s32.totalorder %s33, 0
      %p173 = por %p171, %p172
      %p174 = scmp.ne.s32.totalorder %s166, %s168
      %p175 = scmp.eq.s32.totalorder %s38, 1
      %p176 = por %p174, %p175
      %p177 = scmp.ne.s32.totalorder %s168, %s169
      %p178 = scmp.eq.s32.totalorder %s38, 0
      %p179 = por %p177, %p178
      %p180 = scmp.ne.s32.totalorder %s168, %s169
      %p181 = scmp.eq.s32.totalorder %s39, 1
      %p182 = por %p180, %p181
      %p184 = scmp.ne.s32.totalorder %s169, %s183
      %p185 = scmp.eq.s32.totalorder %s39, 0
      %p186 = por %p184, %p185
      %s188 = sadd.s32 %s187, 1
      %p191 = scmp.eq.s32.totalorder %s33, 1
      %p192 = scmp.ne.s32.totalorder %s187, %s189
      %p193 = scmp.eq.s32.totalorder %s33, 0
      %p194 = por %p192, %p193
      %p195 = scmp.ne.s32.totalorder %s187, %s189
      %p196 = scmp.eq.s32.totalorder %s38, 1
      %p197 = por %p195, %p196
      %p198 = scmp.ne.s32.totalorder %s189, %s190
      %p199 = scmp.eq.s32.totalorder %s38, 0
      %p200 = por %p198, %p199
      %p201 = scmp.ne.s32.totalorder %s189, %s190
      %p202 = scmp.eq.s32.totalorder %s39, 1
      %p203 = por %p201, %p202
      %p205 = scmp.ne.s32.totalorder %s190, %s204
      %p206 = scmp.eq.s32.totalorder %s39, 0
      %p207 = por %p205, %p206
      %s209 = sadd.s32 %s208, 1
      %p212 = scmp.eq.s32.totalorder %s33, 1
      %p213 = scmp.ne.s32.totalorder %s208, %s210
      %p214 = scmp.eq.s32.totalorder %s33, 0
      %p215 = por %p213, %p214
      %p216 = scmp.ne.s32.totalorder %s208, %s210
      %p217 = scmp.eq.s32.totalorder %s38, 1
      %p218 = por %p216, %p217
      %p219 = scmp.ne.s32.totalorder %s210, %s211
      %p220 = scmp.eq.s32.totalorder %s38, 0
      %p221 = por %p219, %p220
      %p222 = scmp.ne.s32.totalorder %s210, %s211
      %p223 = scmp.eq.s32.totalorder %s39, 1
      %p224 = por %p222, %p223
      %p226 = scmp.ne.s32.totalorder %s211, %s225
      %p227 = scmp.eq.s32.totalorder %s39, 0
      %p228 = por %p226, %p227
      %s230 = sadd.s32 %s229, 1
      %p233 = scmp.eq.s32.totalorder %s33, 1
      %p234 = scmp.ne.s32.totalorder %s229, %s231
      %p235 = scmp.eq.s32.totalorder %s33, 0
      %p236 = por %p234, %p235
      %p237 = scmp.ne.s32.totalorder %s229, %s231
      %p238 = scmp.eq.s32.totalorder %s38, 1
      %p239 = por %p237, %p238
      %p240 = scmp.ne.s32.totalorder %s231, %s232
      %p241 = scmp.eq.s32.totalorder %s38, 0
      %p242 = por %p240, %p241
      %p243 = scmp.ne.s32.totalorder %s231, %s232
      %p244 = scmp.eq.s32.totalorder %s39, 1
      %p245 = por %p243, %p244
      %p247 = scmp.ne.s32.totalorder %s232, %s246
      %p248 = scmp.eq.s32.totalorder %s39, 0
      %p249 = por %p247, %p248
      %s251 = sadd.s32 %s250, 1
      %p254 = scmp.eq.s32.totalorder %s33, 1
      %p255 = scmp.ne.s32.totalorder %s250, %s252
      %p256 = scmp.eq.s32.totalorder %s33, 0
      %p257 = por %p255, %p256
      %p258 = scmp.ne.s32.totalorder %s250, %s252
      %p259 = scmp.eq.s32.totalorder %s38, 1
      %p260 = por %p258, %p259
      %p261 = scmp.ne.s32.totalorder %s252, %s253
      %p262 = scmp.eq.s32.totalorder %s38, 0
      %p263 = por %p261, %p262
      %p264 = scmp.ne.s32.totalorder %s252, %s253
      %p265 = scmp.eq.s32.totalorder %s39, 1
      %p266 = por %p264, %p265
      %p268 = scmp.ne.s32.totalorder %s253, %s267
      %p269 = scmp.eq.s32.totalorder %s39, 0
      %p270 = por %p268, %p269
      %s272 = sadd.s32 %s271, 1
      %p275 = scmp.eq.s32.totalorder %s33, 1
      %p276 = scmp.ne.s32.totalorder %s271, %s273
      %p277 = scmp.eq.s32.totalorder %s33, 0
      %p278 = por %p276, %p277
      %p279 = scmp.ne.s32.totalorder %s271, %s273
      %p280 = scmp.eq.s32.totalorder %s38, 1
      %p281 = por %p279, %p280
      %p282 = scmp.ne.s32.totalorder %s273, %s274
      %p283 = scmp.eq.s32.totalorder %s38, 0
      %p284 = por %p282, %p283
      %p285 = scmp.ne.s32.totalorder %s273, %s274
      %p286 = scmp.eq.s32.totalorder %s39, 1
      %p287 = por %p285, %p286
      %p289 = scmp.ne.s32.totalorder %s274, %s288
      %p290 = scmp.eq.s32.totalorder %s39, 0
      %p291 = por %p289, %p290
      %s293 = sadd.s32 %s292, 1
      %p296 = scmp.eq.s32.totalorder %s33, 1
      %p297 = scmp.ne.s32.totalorder %s292, %s294
      %p298 = scmp.eq.s32.totalorder %s33, 0
      %p299 = por %p297, %p298
      %p300 = scmp.ne.s32.totalorder %s292, %s294
      %p301 = scmp.eq.s32.totalorder %s38, 1
      %p302 = por %p300, %p301
      %p303 = scmp.ne.s32.totalorder %s294, %s295
      %p304 = scmp.eq.s32.totalorder %s38, 0
      %p305 = por %p303, %p304
      %p306 = scmp.ne.s32.totalorder %s294, %s295
      %p307 = scmp.eq.s32.totalorder %s39, 1
      %p308 = por %p306, %p307
      %p310 = scmp.ne.s32.totalorder %s295, %s309
      %p311 = scmp.eq.s32.totalorder %s39, 0
      %p312 = por %p310, %p311
      %s314 = sadd.s32 %s313, 1
      %p317 = scmp.eq.s32.totalorder %s33, 1
      %p318 = scmp.ne.s32.totalorder %s313, %s315
      %p319 = scmp.eq.s32.totalorder %s33, 0
      %p320 = por %p318, %p319
      %p321 = scmp.ne.s32.totalorder %s313, %s315
      %p322 = scmp.eq.s32.totalorder %s38, 1
      %p323 = por %p321, %p322
      %p324 = scmp.ne.s32.totalorder %s315, %s316
      %p325 = scmp.eq.s32.totalorder %s38, 0
      %p326 = por %p324, %p325
      %p327 = scmp.ne.s32.totalorder %s315, %s316
      %p328 = scmp.eq.s32.totalorder %s39, 1
      %p329 = por %p327, %p328
      %p331 = scmp.ne.s32.totalorder %s316, %s330
      %p332 = scmp.eq.s32.totalorder %s39, 0
      %p333 = por %p331, %p332
      %s335 = sadd.s32 %s334, 1
      %p338 = scmp.eq.s32.totalorder %s33, 1
      %p339 = scmp.ne.s32.totalorder %s334, %s336
      %p340 = scmp.eq.s32.totalorder %s33, 0
      %p341 = por %p339, %p340
      %p342 = scmp.ne.s32.totalorder %s334, %s336
      %p343 = scmp.eq.s32.totalorder %s38, 1
      %p344 = por %p342, %p343
      %p345 = scmp.ne.s32.totalorder %s336, %s337
      %p346 = scmp.eq.s32.totalorder %s38, 0
      %p347 = por %p345, %p346
      %p348 = scmp.ne.s32.totalorder %s336, %s337
      %p349 = scmp.eq.s32.totalorder %s39, 1
      %p350 = por %p348, %p349
      %p352 = scmp.ne.s32.totalorder %s337, %s351
      %p353 = scmp.eq.s32.totalorder %s39, 0
      %p354 = por %p352, %p353
      %s356 = sadd.s32 %s355, 1
      %p359 = scmp.eq.s32.totalorder %s33, 1
      %p360 = scmp.ne.s32.totalorder %s355, %s357
      %p361 = scmp.eq.s32.totalorder %s33, 0
      %p362 = por %p360, %p361
      %p363 = scmp.ne.s32.totalorder %s355, %s357
      %p364 = scmp.eq.s32.totalorder %s38, 1
      %p365 = por %p363, %p364
      %p366 = scmp.ne.s32.totalorder %s357, %s358
      %p367 = scmp.eq.s32.totalorder %s38, 0
      %p368 = por %p366, %p367
      %p369 = scmp.ne.s32.totalorder %s357, %s358
      %p370 = scmp.eq.s32.totalorder %s39, 1
      %p371 = por %p369, %p370
      %p373 = scmp.ne.s32.totalorder %s358, %s372
      %p374 = scmp.eq.s32.totalorder %s39, 0
      %p375 = por %p373, %p374
      %s377 = sadd.s32 %s376, 1
      %p380 = scmp.eq.s32.totalorder %s33, 1
      %p381 = scmp.ne.s32.totalorder %s376, %s378
      %p382 = scmp.eq.s32.totalorder %s33, 0
      %p383 = por %p381, %p382
      %p384 = scmp.ne.s32.totalorder %s376, %s378
      %p385 = scmp.eq.s32.totalorder %s38, 1
      %p386 = por %p384, %p385
      %p387 = scmp.ne.s32.totalorder %s378, %s379
      %p388 = scmp.eq.s32.totalorder %s38, 0
      %p389 = por %p387, %p388
      %p390 = scmp.ne.s32.totalorder %s378, %s379
      %p391 = scmp.eq.s32.totalorder %s39, 1
      %p392 = por %p390, %p391
      %p394 = scmp.ne.s32.totalorder %s379, %s393
      %p395 = scmp.eq.s32.totalorder %s39, 0
      %p396 = por %p394, %p395
      %s398 = sadd.s32 %s397, 1
      %p401 = scmp.eq.s32.totalorder %s33, 1
      %p402 = scmp.ne.s32.totalorder %s397, %s399
      %p403 = scmp.eq.s32.totalorder %s33, 0
      %p404 = por %p402, %p403
      %p405 = scmp.ne.s32.totalorder %s397, %s399
      %p406 = scmp.eq.s32.totalorder %s38, 1
      %p407 = por %p405, %p406
      %p408 = scmp.ne.s32.totalorder %s399, %s400
      %p409 = scmp.eq.s32.totalorder %s38, 0
      %p410 = por %p408, %p409
      %p411 = scmp.ne.s32.totalorder %s399, %s400
      %p412 = scmp.eq.s32.totalorder %s39, 1
      %p413 = por %p411, %p412
      %p415 = scmp.ne.s32.totalorder %s400, %s414
      %p416 = scmp.eq.s32.totalorder %s39, 0
      %p417 = por %p415, %p416
      %s419 = sadd.s32 %s418, 1
      %p422 = scmp.eq.s32.totalorder %s33, 1
      %p423 = scmp.ne.s32.totalorder %s418, %s420
      %p424 = scmp.eq.s32.totalorder %s33, 0
      %p425 = por %p423, %p424
      %p426 = scmp.ne.s32.totalorder %s418, %s420
      %p427 = scmp.eq.s32.totalorder %s38, 1
      %p428 = por %p426, %p427
      %p429 = scmp.ne.s32.totalorder %s420, %s421
      %p430 = scmp.eq.s32.totalorder %s38, 0
      %p431 = por %p429, %p430
      %p432 = scmp.ne.s32.totalorder %s420, %s421
      %p433 = scmp.eq.s32.totalorder %s39, 1
      %p434 = por %p432, %p433
      %p436 = scmp.ne.s32.totalorder %s421, %s435
      %p437 = scmp.eq.s32.totalorder %s39, 0
      %p438 = por %p436, %p437
      %s440 = sadd.s32 %s439, 1
      %p443 = scmp.eq.s32.totalorder %s33, 1
      %p444 = scmp.ne.s32.totalorder %s439, %s441
      %p445 = scmp.eq.s32.totalorder %s33, 0
      %p446 = por %p444, %p445
      %p447 = scmp.ne.s32.totalorder %s439, %s441
      %p448 = scmp.eq.s32.totalorder %s38, 1
      %p449 = por %p447, %p448
      %p450 = scmp.ne.s32.totalorder %s441, %s442
      %p451 = scmp.eq.s32.totalorder %s38, 0
      %p452 = por %p450, %p451
      %p453 = scmp.ne.s32.totalorder %s441, %s442
      %p454 = scmp.eq.s32.totalorder %s39, 1
      %p455 = por %p453, %p454
      %p457 = scmp.ne.s32.totalorder %s442, %s456
      %p458 = scmp.eq.s32.totalorder %s39, 0
      %p459 = por %p457, %p458
      %s461 = sadd.s32 %s460, 1
      %p464 = scmp.eq.s32.totalorder %s33, 1
      %p465 = scmp.ne.s32.totalorder %s460, %s462
      %p466 = scmp.eq.s32.totalorder %s33, 0
      %p467 = por %p465, %p466
      %p468 = scmp.ne.s32.totalorder %s460, %s462
      %p469 = scmp.eq.s32.totalorder %s38, 1
      %p470 = por %p468, %p469
      %p471 = scmp.ne.s32.totalorder %s462, %s463
      %p472 = scmp.eq.s32.totalorder %s38, 0
      %p473 = por %p471, %p472
      %p474 = scmp.ne.s32.totalorder %s462, %s463
      %p475 = scmp.eq.s32.totalorder %s39, 1
      %p476 = por %p474, %p475
      %p478 = scmp.ne.s32.totalorder %s463, %s477
      %p479 = scmp.eq.s32.totalorder %s39, 0
      %p480 = por %p478, %p479
      %s482 = sadd.s32 %s481, 1
      %p485 = scmp.eq.s32.totalorder %s33, 1
      %p486 = scmp.ne.s32.totalorder %s481, %s483
      %p487 = scmp.eq.s32.totalorder %s33, 0
      %p488 = por %p486, %p487
      %p489 = scmp.ne.s32.totalorder %s481, %s483
      %p490 = scmp.eq.s32.totalorder %s38, 1
      %p491 = por %p489, %p490
      %p492 = scmp.ne.s32.totalorder %s483, %s484
      %p493 = scmp.eq.s32.totalorder %s38, 0
      %p494 = por %p492, %p493
      %p495 = scmp.ne.s32.totalorder %s483, %s484
      %p496 = scmp.eq.s32.totalorder %s39, 1
      %p497 = por %p495, %p496
      %p499 = scmp.ne.s32.totalorder %s484, %s498
      %p500 = scmp.eq.s32.totalorder %s39, 0
      %p501 = por %p499, %p500
      %s503 = sadd.s32 %s502, 1
      %p506 = scmp.eq.s32.totalorder %s33, 1
      %p507 = scmp.ne.s32.totalorder %s502, %s504
      %p508 = scmp.eq.s32.totalorder %s33, 0
      %p509 = por %p507, %p508
      %p510 = scmp.ne.s32.totalorder %s502, %s504
      %p511 = scmp.eq.s32.totalorder %s38, 1
      %p512 = por %p510, %p511
      %p513 = scmp.ne.s32.totalorder %s504, %s505
      %p514 = scmp.eq.s32.totalorder %s38, 0
      %p515 = por %p513, %p514
      %p516 = scmp.ne.s32.totalorder %s504, %s505
      %p517 = scmp.eq.s32.totalorder %s39, 1
      %p518 = por %p516, %p517
      %p520 = scmp.ne.s32.totalorder %s505, %s519
      %p521 = scmp.eq.s32.totalorder %s39, 0
      %p522 = por %p520, %p521
      %s524 = sadd.s32 %s523, 1
      %p527 = scmp.eq.s32.totalorder %s33, 1
      %p528 = scmp.ne.s32.totalorder %s523, %s525
      %p529 = scmp.eq.s32.totalorder %s33, 0
      %p530 = por %p528, %p529
      %p531 = scmp.ne.s32.totalorder %s523, %s525
      %p532 = scmp.eq.s32.totalorder %s38, 1
      %p533 = por %p531, %p532
      %p534 = scmp.ne.s32.totalorder %s525, %s526
      %p535 = scmp.eq.s32.totalorder %s38, 0
      %p536 = por %p534, %p535
      %p537 = scmp.ne.s32.totalorder %s525, %s526
      %p538 = scmp.eq.s32.totalorder %s39, 1
      %p539 = por %p537, %p538
      %p541 = scmp.ne.s32.totalorder %s526, %s540
      %p542 = scmp.eq.s32.totalorder %s39, 0
      %p543 = por %p541, %p542
      %s544 = ssub.s32 %s33, %s40
      %p545 = scmp.eq.s32.totalorder %s544, 0
      %s547 = sadd.s32 %s546, 1
      %s548 = scalar_select %p545, %s546, %s547
      %p551 = pneg %p545
      %p552 = scmp.eq.s32.totalorder %s33, 1
      %p553 = por %p551, %p552
      %p554 = scmp.ne.s32.totalorder %s546, %s549
      %p555 = scmp.eq.s32.totalorder %s33, 0
      %p556 = por %p554, %p555
      %p557 = scmp.ne.s32.totalorder %s546, %s549
      %p558 = scmp.eq.s32.totalorder %s38, 1
      %p559 = por %p557, %p558
      %p560 = scmp.ne.s32.totalorder %s549, %s550
      %p561 = scmp.eq.s32.totalorder %s38, 0
      %p562 = por %p560, %p561
      %p563 = scmp.ne.s32.totalorder %s549, %s550
      %p564 = scmp.eq.s32.totalorder %s39, 1
      %p565 = por %p563, %p564
      %p567 = scmp.ne.s32.totalorder %s550, %s566
      %p568 = scmp.eq.s32.totalorder %s39, 0
      %p569 = por %p567, %p568
      %p570 = scmp.le.s32.totalorder 1, %s33
      %p571 = scmp.lt.s32.totalorder %s33, 3
      %p572 = pnand %p570, %p571
      %p573 = pneg %p572
      // Predicated region
      $region9: #{tpu_custom_call.1} parent=5 // pred_check
        _
      $region10: #{tpu_custom_call.1} parent=5 // pred_check_branch
        %575 = sbr.rel (%p572) target = $region12
      $region11: #{tpu_custom_call.1} parent=5 // pred_region
        %s576 = ssub.s32 %s33, 1
        // Predicated region
        $region13: #{tpu_custom_call.1} parent=11 // pred_check
          %p577 = pneg %p158
        $region14: #{tpu_custom_call.1} parent=11 // pred_check_branch
          %579 = sbr.rel (%p577) target = $region16
        $region15: #{tpu_custom_call.1} parent=11 // pred_region
          _
        $region16: #{tpu_custom_call.1} parent=11 // pred_fallthru
          _
        // Predicated region
        $region17: #{tpu_custom_call.1} parent=11 // pred_check
          %p580 = pneg %p179
        $region18: #{tpu_custom_call.1} parent=11 // pred_check_branch
          %582 = sbr.rel (%p580) target = $region20
        $region19: #{tpu_custom_call.1} parent=11 // pred_region
          _
        $region20: #{tpu_custom_call.1} parent=11 // pred_fallthru
          _
        // Predicated region
        $region21: #{tpu_custom_call.1} parent=11 // pred_check
          %p583 = pneg %p200
        $region22: #{tpu_custom_call.1} parent=11 // pred_check_branch
          %585 = sbr.rel (%p583) target = $region24
        $region23: #{tpu_custom_call.1} parent=11 // pred_region
          _
        $region24: #{tpu_custom_call.1} parent=11 // pred_fallthru
          _
        // Predicated region
        $region25: #{tpu_custom_call.1} parent=11 // pred_check
          %p586 = pneg %p221
        $region26: #{tpu_custom_call.1} parent=11 // pred_check_branch
          %588 = sbr.rel (%p586) target = $region28
        $region27: #{tpu_custom_call.1} parent=11 // pred_region
          _
        $region28: #{tpu_custom_call.1} parent=11 // pred_fallthru
          _
        // Predicated region
        $region29: #{tpu_custom_call.1} parent=11 // pred_check
          %p589 = pneg %p242
        $region30: #{tpu_custom_call.1} parent=11 // pred_check_branch
          %591 = sbr.rel (%p589) target = $region32
        $region31: #{tpu_custom_call.1} parent=11 // pred_region
          _
        $region32: #{tpu_custom_call.1} parent=11 // pred_fallthru
          _
        // Predicated region
        $region33: #{tpu_custom_call.1} parent=11 // pred_check
          %p592 = pneg %p263
        $region34: #{tpu_custom_call.1} parent=11 // pred_check_branch
          %594 = sbr.rel (%p592) target = $region36
        $region35: #{tpu_custom_call.1} parent=11 // pred_region
          _
        $region36: #{tpu_custom_call.1} parent=11 // pred_fallthru
          _
        // Predicated region
        $region37: #{tpu_custom_call.1} parent=11 // pred_check
          %p595 = pneg %p284
        $region38: #{tpu_custom_call.1} parent=11 // pred_check_branch
          %597 = sbr.rel (%p595) target = $region40
        $region39: #{tpu_custom_call.1} parent=11 // pred_region
          _
        $region40: #{tpu_custom_call.1} parent=11 // pred_fallthru
          _
        // Predicated region
        $region41: #{tpu_custom_call.1} parent=11 // pred_check
          %p598 = pneg %p305
        $region42: #{tpu_custom_call.1} parent=11 // pred_check_branch
          %600 = sbr.rel (%p598) target = $region44
        $region43: #{tpu_custom_call.1} parent=11 // pred_region
          _
        $region44: #{tpu_custom_call.1} parent=11 // pred_fallthru
          _
        // Predicated region
        $region45: #{tpu_custom_call.1} parent=11 // pred_check
          %p601 = pneg %p326
        $region46: #{tpu_custom_call.1} parent=11 // pred_check_branch
          %603 = sbr.rel (%p601) target = $region48
        $region47: #{tpu_custom_call.1} parent=11 // pred_region
          _
        $region48: #{tpu_custom_call.1} parent=11 // pred_fallthru
          _
        // Predicated region
        $region49: #{tpu_custom_call.1} parent=11 // pred_check
          %p604 = pneg %p347
        $region50: #{tpu_custom_call.1} parent=11 // pred_check_branch
          %606 = sbr.rel (%p604) target = $region52
        $region51: #{tpu_custom_call.1} parent=11 // pred_region
          _
        $region52: #{tpu_custom_call.1} parent=11 // pred_fallthru
          _
        // Predicated region
        $region53: #{tpu_custom_call.1} parent=11 // pred_check
          %p607 = pneg %p368
        $region54: #{tpu_custom_call.1} parent=11 // pred_check_branch
          %609 = sbr.rel (%p607) target = $region56
        $region55: #{tpu_custom_call.1} parent=11 // pred_region
          _
        $region56: #{tpu_custom_call.1} parent=11 // pred_fallthru
          _
        // Predicated region
        $region57: #{tpu_custom_call.1} parent=11 // pred_check
          %p610 = pneg %p389
        $region58: #{tpu_custom_call.1} parent=11 // pred_check_branch
          %612 = sbr.rel (%p610) target = $region60
        $region59: #{tpu_custom_call.1} parent=11 // pred_region
          _
        $region60: #{tpu_custom_call.1} parent=11 // pred_fallthru
          _
        // Predicated region
        $region61: #{tpu_custom_call.1} parent=11 // pred_check
          %p613 = pneg %p410
        $region62: #{tpu_custom_call.1} parent=11 // pred_check_branch
          %615 = sbr.rel (%p613) target = $region64
        $region63: #{tpu_custom_call.1} parent=11 // pred_region
          _
        $region64: #{tpu_custom_call.1} parent=11 // pred_fallthru
          _
        // Predicated region
        $region65: #{tpu_custom_call.1} parent=11 // pred_check
          %p616 = pneg %p431
        $region66: #{tpu_custom_call.1} parent=11 // pred_check_branch
          %618 = sbr.rel (%p616) target = $region68
        $region67: #{tpu_custom_call.1} parent=11 // pred_region
          _
        $region68: #{tpu_custom_call.1} parent=11 // pred_fallthru
          _
        // Predicated region
        $region69: #{tpu_custom_call.1} parent=11 // pred_check
          %p619 = pneg %p452
        $region70: #{tpu_custom_call.1} parent=11 // pred_check_branch
          %621 = sbr.rel (%p619) target = $region72
        $region71: #{tpu_custom_call.1} parent=11 // pred_region
          %s623 = ssub.s32 16, 16
          %624 = vsyncadd [#allocation5], %s623
          %s626 = sshll.u32 [#allocation4], 4
          %s627 = int_to_ptr.vmem [resolvable:$true] %s626
          %629 = dma.hbm_to_vmem [thread:$0]  %s18, 16, %s627, [#allocation5]
        $region72: #{tpu_custom_call.1} parent=11 // pred_fallthru
          _
        // Predicated region
        $region73: #{tpu_custom_call.1} parent=11 // pred_check
          %p630 = pneg %p473
        $region74: #{tpu_custom_call.1} parent=11 // pred_check_branch
          %632 = sbr.rel (%p630) target = $region76
        $region75: #{tpu_custom_call.1} parent=11 // pred_region
          _
        $region76: #{tpu_custom_call.1} parent=11 // pred_fallthru
          _
        // Predicated region
        $region77: #{tpu_custom_call.1} parent=11 // pred_check
          %p633 = pneg %p494
        $region78: #{tpu_custom_call.1} parent=11 // pred_check_branch
          %635 = sbr.rel (%p633) target = $region80
        $region79: #{tpu_custom_call.1} parent=11 // pred_region
          _
        $region80: #{tpu_custom_call.1} parent=11 // pred_fallthru
          _
        // Predicated region
        $region81: #{tpu_custom_call.1} parent=11 // pred_check
          %p636 = pneg %p515
        $region82: #{tpu_custom_call.1} parent=11 // pred_check_branch
          %638 = sbr.rel (%p636) target = $region84
        $region83: #{tpu_custom_call.1} parent=11 // pred_region
          _
        $region84: #{tpu_custom_call.1} parent=11 // pred_fallthru
          _
        // Predicated region
        $region85: #{tpu_custom_call.1} parent=11 // pred_check
          %p639 = pneg %p536
        $region86: #{tpu_custom_call.1} parent=11 // pred_check_branch
          %641 = sbr.rel (%p639) target = $region88
        $region87: #{tpu_custom_call.1} parent=11 // pred_region
          _
        $region88: #{tpu_custom_call.1} parent=11 // pred_fallthru
          _
      $region12: #{tpu_custom_call.1} parent=5 // pred_fallthru
        _
      %p642 = scmp.lt.s32.totalorder %s33, 2
      // Predicated region
      $region89: #{tpu_custom_call.1} parent=5 // pred_check
        %p643 = pneg %p642
      $region90: #{tpu_custom_call.1} parent=5 // pred_check_branch
        %645 = sbr.rel (%p643) target = $region92
      $region91: #{tpu_custom_call.1} parent=5 // pred_region
        // Predicated region
        $region93: #{tpu_custom_call.1} parent=91 // pred_check
          %p646 = pneg %p53
        $region94: #{tpu_custom_call.1} parent=91 // pred_check_branch
          %648 = sbr.rel (%p646) target = $region96
        $region95: #{tpu_custom_call.1} parent=91 // pred_region
          %s649 = smul.u32 8, %s33
          %p650 = scmp.lt.s32.totalorder %s649, 15
          %s651 = scalar_select %p650, %s649, 15
          %s652 = smul.addr %s651, 8
          %s653 = scalar_lea.vmem %s0, %s652
          %s654 = smul.u32 8, %s33
        $region96: #{tpu_custom_call.1} parent=91 // pred_fallthru
          _
        // Predicated region
        $region97: #{tpu_custom_call.1} parent=91 // pred_check
          %p655 = pneg %p79
        $region98: #{tpu_custom_call.1} parent=91 // pred_check_branch
          %657 = sbr.rel (%p655) target = $region100
        $region99: #{tpu_custom_call.1} parent=91 // pred_region
          %s658 = sand.u32 %s69, 1
          %s659 = scalar_lea.sflag [#allocation3], %s658
          %s660 = sand.u32 %s69, 1
          %s661 = smul.addr %s660, 16
          %s662 = scalar_lea.vmem [#allocation2], %s661
          %s664 = ssub.s32 256, 256
          %665 = vsyncadd %s659, %s664
          %s666 = smul.addr %s33, 2
          %s667 = smul.addr %s666, 128
          %s668 = scalar_lea.hbm %s1, %s667
          %s670 = sshll.u32 %s662, 4
          %s671 = int_to_ptr.vmem [resolvable:$true] %s670
          %673 = dma.hbm_to_vmem [thread:$0]  %s668, 256, %s671, %s659
        $region100: #{tpu_custom_call.1} parent=91 // pred_fallthru
          _
        // Predicated region
        $region101: #{tpu_custom_call.1} parent=91 // pred_check
          %p674 = pneg %p105
        $region102: #{tpu_custom_call.1} parent=91 // pred_check_branch
          %676 = sbr.rel (%p674) target = $region104
        $region103: #{tpu_custom_call.1} parent=91 // pred_region
          %s677 = smul.u32 8, %s33
          %p678 = scmp.lt.s32.totalorder %s677, 15
          %s679 = scalar_select %p678, %s677, 15
          %s680 = smul.addr %s679, 2
          %s681 = smul.addr %s680, 8
          %s682 = scalar_lea.vmem %s2, %s681
          %s683 = smul.u32 8, %s33
        $region104: #{tpu_custom_call.1} parent=91 // pred_fallthru
          _
        // Predicated region
        $region105: #{tpu_custom_call.1} parent=91 // pred_check
          %p684 = pneg %p131
        $region106: #{tpu_custom_call.1} parent=91 // pred_check_branch
          %686 = sbr.rel (%p684) target = $region108
        $region107: #{tpu_custom_call.1} parent=91 // pred_region
          %s687 = smul.u32 8, %s33
          %p688 = scmp.lt.s32.totalorder %s687, 15
          %s689 = scalar_select %p688, %s687, 15
          %s690 = smul.addr %s689, 8
          %s691 = scalar_lea.vmem %s3, %s690
          %s692 = smul.u32 8, %s33
        $region108: #{tpu_custom_call.1} parent=91 // pred_fallthru
          _
      $region92: #{tpu_custom_call.1} parent=5 // pred_fallthru
        _
      %p693 = scmp.le.s32.totalorder 1, %s33
      %p694 = scmp.lt.s32.totalorder %s33, 3
      %p695 = pnand %p693, %p694
      %p696 = pneg %p695
      // Predicated region
      $region109: #{tpu_custom_call.1} parent=5 // pred_check
        _
      $region110: #{tpu_custom_call.1} parent=5 // pred_check_branch
        %698 = sbr.rel (%p695) target = $region112
      $region111: #{tpu_custom_call.1} parent=5 // pred_region
        %s699 = ssub.s32 %s33, 1
        %s700 = sand.u32 %s72, 1
        %s701 = scalar_lea.sflag [#allocation3], %s700
        %s702 = sand.u32 %s72, 1
        %s703 = smul.addr %s702, 16
        %s704 = scalar_lea.vmem [#allocation2], %s703
        // Predicated region
        $region113: #{tpu_custom_call.1} parent=111 // pred_check
          %p705 = pneg %p85
        $region114: #{tpu_custom_call.1} parent=111 // pred_check_branch
          %707 = sbr.rel (%p705) target = $region116
        $region115: #{tpu_custom_call.1} parent=111 // pred_region
          %708 = dma.done %s701, 256
        $region116: #{tpu_custom_call.1} parent=111 // pred_fallthru
          _
        // Predicated region
        $region117: #{tpu_custom_call.1} parent=111 // pred_check
          %p709 = pneg %p452
        $region118: #{tpu_custom_call.1} parent=111 // pred_check_branch
          %711 = sbr.rel (%p709) target = $region120
        $region119: #{tpu_custom_call.1} parent=111 // pred_region
          %712 = dma.done [#allocation5], 16
        $region120: #{tpu_custom_call.1} parent=111 // pred_fallthru
          _
        %s713 = smul.u32 8, %s38
        %p714 = scmp.lt.s32.totalorder %s713, 15
        %s715 = scalar_select %p714, %s713, 15
        %s716 = smul.addr %s715, 8
        %s717 = scalar_lea.vmem %s0, %s716
        %p718 = pneg %p59
        %p719 = pneg %p56
        %s720 = sand.u32 %s72, 1
        %s721 = scalar_lea.sflag [#allocation3], %s720
        %s722 = sand.u32 %s72, 1
        %s723 = smul.addr %s722, 16
        %s724 = scalar_lea.vmem [#allocation2], %s723
        %p725 = pneg %p85
        %p726 = pneg %p82
        %s727 = smul.u32 8, %s38
        %p728 = scmp.lt.s32.totalorder %s727, 15
        %s729 = scalar_select %p728, %s727, 15
        %s730 = smul.addr %s729, 2
        %s731 = smul.addr %s730, 8
        %s732 = scalar_lea.vmem %s2, %s731
        %p733 = pneg %p111
        %p734 = pneg %p108
        %s735 = smul.u32 8, %s38
        %p736 = scmp.lt.s32.totalorder %s735, 15
        %s737 = scalar_select %p736, %s735, 15
        %s738 = smul.addr %s737, 8
        %s739 = scalar_lea.vmem %s3, %s738
        %p740 = pneg %p137
        %p741 = pneg %p134
        %p742 = pneg %p158
        %p743 = pneg %p155
        %p744 = pneg %p179
        %p745 = pneg %p176
        %p746 = pneg %p200
        %p747 = pneg %p197
        %p748 = pneg %p221
        %p749 = pneg %p218
        %p750 = pneg %p242
        %p751 = pneg %p239
        %p752 = pneg %p263
        %p753 = pneg %p260
        %p754 = pneg %p284
        %p755 = pneg %p281
        %p756 = pneg %p305
        %p757 = pneg %p302
        %p758 = pneg %p326
        %p759 = pneg %p323
        %p760 = pneg %p347
        %p761 = pneg %p344
        %p762 = pneg %p368
        %p763 = pneg %p365
        %p764 = pneg %p389
        %p765 = pneg %p386
        %p766 = pneg %p410
        %p767 = pneg %p407
        %p768 = pneg %p431
        %p769 = pneg %p428
        %p770 = pneg %p452
        %p771 = pneg %p449
        %p772 = pneg %p473
        %p773 = pneg %p470
        %p774 = pneg %p494
        %p775 = pneg %p491
        %p776 = pneg %p515
        %p777 = pneg %p512
        %p778 = pneg %p536
        %p779 = pneg %p533
        %p780 = pneg %p562
        %p781 = pneg %p559
        %s782 = smul.u32 8, %s38
        %p783 = scmp.lt.s32.totalorder %s782, 15
        %s784 = scalar_select %p783, %s782, 15
        %s785 = smul.addr %s784, 8
        %s786 = scalar_lea.vmem %s23, %s785
        %s787 = smul.u32 8, %s38
        %p788 = scmp.lt.s32.totalorder %s787, 15
        %s789 = scalar_select %p788, %s787, 15
        %s790 = smul.addr %s789, 8
        %s791 = scalar_lea.vmem %s0, %s790
        %s792 = smul.u32 8, %s38
        %s793 = smul.u32 8, %s38
        %p794 = scmp.lt.s32.totalorder %s793, 15
        %s795 = scalar_select %p794, %s793, 15
        %s796 = smul.addr %s795, 2
        %s797 = smul.addr %s796, 8
        %s798 = scalar_lea.vmem %s2, %s797
        %s799 = smul.u32 8, %s38
        %s800 = smul.u32 8, %s38
        %p801 = scmp.lt.s32.totalorder %s800, 15
        %s802 = scalar_select %p801, %s800, 15
        %s803 = smul.addr %s802, 8
        %s804 = scalar_lea.vmem %s3, %s803
        %s805 = smul.u32 8, %s38
        %s806 = smul.u32 8, %s38
        %p807 = scmp.lt.s32.totalorder %s806, 15
        %s808 = scalar_select %p807, %s806, 15
        %s809 = smul.addr %s808, 8
        %s810 = scalar_lea.vmem %s23, %s809
        %s811 = smul.u32 8, %s38
        %v813 = vld [vmem:[%s791] sm:$0xff]
        %v814 = vld [vmem:[%s791 + $0x8] sm:$0xff]
        %v815 = vld [vmem:[%s791 + $0x10] sm:$0xff]
        %v816 = vld [vmem:[%s791 + $0x18] sm:$0xff]
        %v817 = vld [vmem:[%s791 + $0x20] sm:$0xff]
        %v818 = vld [vmem:[%s791 + $0x28] sm:$0xff]
        %v819 = vld [vmem:[%s791 + $0x30] sm:$0xff]
        %v820 = vld [vmem:[%s791 + $0x38] sm:$0xff]
        %v821 = vld [vmem:[%s704] sm:$0xff]
        %v822 = vld [vmem:[%s704 + $0x8] sm:$0xff]
        %v823 = vld [vmem:[%s798] sm:$0xff]
        %v824 = vld [vmem:[%s798 + $0x8] sm:$0xff]
        %v825 = vld [vmem:[%s798 + $0x10] sm:$0xff]
        %v826 = vld [vmem:[%s798 + $0x18] sm:$0xff]
        %v827 = vld [vmem:[%s798 + $0x20] sm:$0xff]
        %v828 = vld [vmem:[%s798 + $0x28] sm:$0xff]
        %v829 = vld [vmem:[%s798 + $0x30] sm:$0xff]
        %v830 = vld [vmem:[%s798 + $0x38] sm:$0xff]
        %v831 = vld [vmem:[%s798 + $0x40] sm:$0xff]
        %v832 = vld [vmem:[%s798 + $0x48] sm:$0xff]
        %v833 = vld [vmem:[%s798 + $0x50] sm:$0xff]
        %v834 = vld [vmem:[%s798 + $0x58] sm:$0xff]
        %v835 = vld [vmem:[%s798 + $0x60] sm:$0xff]
        %v836 = vld [vmem:[%s798 + $0x68] sm:$0xff]
        %v837 = vld [vmem:[%s798 + $0x70] sm:$0xff]
        %v838 = vld [vmem:[%s798 + $0x78] sm:$0xff]
        %v839 = vld [vmem:[%s804] sm:$0xff]
        %v840 = vld [vmem:[%s804 + $0x8] sm:$0xff]
        %v841 = vld [vmem:[%s804 + $0x10] sm:$0xff]
        %v842 = vld [vmem:[%s804 + $0x18] sm:$0xff]
        %v843 = vld [vmem:[%s804 + $0x20] sm:$0xff]
        %v844 = vld [vmem:[%s804 + $0x28] sm:$0xff]
        %v845 = vld [vmem:[%s804 + $0x30] sm:$0xff]
        %v846 = vld [vmem:[%s804 + $0x38] sm:$0xff]
        %v847 = vpack.c.bf16 %v814, %v813
        %v848 = vpack.c.bf16 %v816, %v815
        %v849 = vpack.c.bf16 %v818, %v817
        %v850 = vpack.c.bf16 %v820, %v819
        %v851 = vld [vmem:[%s9] sm:$0xf]
        %v852 = vld [vmem:[%s9 + $0x4] sm:$0xf]
        %v853 = vld [vmem:[%s9 + $0x8] sm:$0xf]
        %v854 = vld [vmem:[%s9 + $0xc] sm:$0xf]
        %v855 = vld [vmem:[%s10] sm:$0x1]
        %v857 = vlaneseq
        %v858 = vshrl.u32 %v857, 7
        %v859 = vsub.s32 0, %v858
        %v860 = vrot.slane %v855, %v859
        %v866 = vunpack.c.l.b16 %v851
        %v867 = vunpack.c.l.b16 %v852
        %v868 = vunpack.c.l.b16 %v853
        %v869 = vunpack.c.l.b16 %v854
        %v870 = vpack.c.b16 %v867, %v866
        %v871 = vpack.c.b16 %v869, %v868
        %vm874 = vcmask 261120
        %v876 = vsel %vm874, %v847, 0
        %v879 = vsel %vm874, %v848, 0
        %v882 = vsel %vm874, %v849, 0
        %v885 = vsel %vm874, %v850, 0
        %887 = vmatprep.subr.bf16.mxu0 0
        %888 = vmatpush1.bf16.msra.mxu0 %v870
        %889 = vmatprep.subr.bf16.mxu0 0
        %890 = vmatpush1.bf16.msra.mxu0 %v871
        %891 = vmatprep.subr.bf16.mxu0 0
        %892 = vmatpush1.bf16.msra.mxu0 0
        %893 = vmatprep.subr.bf16.mxu0 0
        %894 = vmatpush1.bf16.msra.mxu0 0
        %895 = vmatprep.subr.bf16.mxu0 0
        %896 = vmatpush1.bf16.msra.mxu0 0
        %897 = vmatprep.subr.bf16.mxu0 0
        %898 = vmatpush1.bf16.msra.mxu0 0
        %899 = vmatprep.subr.bf16.mxu0 0
        %900 = vmatpush1.bf16.msra.mxu0 0
        %901 = vmatprep.subr.bf16.mxu0 0
        %902 = vmatpush1.bf16.msra.mxu0 0
        %903 = vmatprep.subr.bf16.mxu0 0
        %904 = vmatpush1.bf16.msra.mxu0 0
        %905 = vmatprep.subr.bf16.mxu0 0
        %906 = vmatpush1.bf16.msra.mxu0 0
        %907 = vmatprep.subr.bf16.mxu0 0
        %908 = vmatpush1.bf16.msra.mxu0 0
        %909 = vmatprep.subr.bf16.mxu0 0
        %910 = vmatpush1.bf16.msra.mxu0 0
        %911 = vmatprep.subr.bf16.mxu0 0
        %912 = vmatpush1.bf16.msra.mxu0 0
        %913 = vmatprep.subr.bf16.mxu0 0
        %914 = vmatpush1.bf16.msra.mxu0 0
        %915 = vmatprep.subr.bf16.mxu0 0
        %916 = vmatpush1.bf16.msra.mxu0 0
        %917 = vmatprep.subr.bf16.mxu0 0
        %918 = vmatpush1.bf16.msra.mxu0 0
        %919 = vmatprep.mubr.bf16.mxu0 0
        %920 = vmatmul.mubr.bf16.gmra.mrb[0].mxu0 %v876
        %v921 = vpop.f32.mrb[0].mxu0
        %v922 = vadd.f32 %v860, %v921
        %v923 = vpop.f32.mrb[0].mxu0
        %v924 = vpop.f32.mrb[0].mxu0
        %v925 = vadd.f32 %v860, %v924
        %v926 = vpop.f32.mrb[0].mxu0
        %927 = vmatprep.mubr.bf16.mxu0 0
        %928 = vmatmul.mubr.bf16.gmra.mrb[0].mxu0 %v879
        %v929 = vpop.f32.mrb[0].mxu0
        %v930 = vadd.f32 %v860, %v929
        %v931 = vpop.f32.mrb[0].mxu0
        %v932 = vpop.f32.mrb[0].mxu0
        %v933 = vadd.f32 %v860, %v932
        %v934 = vpop.f32.mrb[0].mxu0
        %935 = vmatprep.mubr.bf16.mxu0 0
        %936 = vmatmul.mubr.bf16.gmra.mrb[0].mxu0 %v882
        %v937 = vpop.f32.mrb[0].mxu0
        %v938 = vadd.f32 %v860, %v937
        %v939 = vpop.f32.mrb[0].mxu0
        %v940 = vpop.f32.mrb[0].mxu0
        %v941 = vadd.f32 %v860, %v940
        %v942 = vpop.f32.mrb[0].mxu0
        %943 = vmatprep.mubr.bf16.mxu0 0
        %944 = vmatmul.mubr.bf16.gmra.mrb[0].mxu0 %v885
        %v945 = vpop.f32.mrb[0].mxu0
        %v946 = vadd.f32 %v860, %v945
        %v947 = vpop.f32.mrb[0].mxu0
        %v948 = vpop.f32.mrb[0].mxu0
        %v949 = vadd.f32 %v860, %v948
        %v950 = vpop.f32.mrb[0].mxu0
        %951 = vdwg.mxu0
        %v952 = vpack.c.bf16 %v821, %v821
        %v953 = vpack.c.bf16 %v822, %v822
        %v954 = vld [vmem:[%s11] sm:$0xff]
        %v955 = vld [vmem:[%s11 + $0x8] sm:$0xff]
        %v956 = vld [vmem:[%s11 + $0x10] sm:$0xff]
        %v957 = vld [vmem:[%s11 + $0x18] sm:$0xff]
        %v958 = vld [vmem:[%s11 + $0x20] sm:$0xff]
        %v959 = vld [vmem:[%s11 + $0x28] sm:$0xff]
        %v960 = vld [vmem:[%s11 + $0x30] sm:$0xff]
        %v961 = vld [vmem:[%s11 + $0x38] sm:$0xff]
        %v962 = vld [vmem:[%s11 + $0x40] sm:$0xff]
        %v963 = vld [vmem:[%s11 + $0x48] sm:$0xff]
        %v964 = vld [vmem:[%s11 + $0x50] sm:$0xff]
        %v965 = vld [vmem:[%s11 + $0x58] sm:$0xff]
        %v966 = vld [vmem:[%s11 + $0x60] sm:$0xff]
        %v967 = vld [vmem:[%s11 + $0x68] sm:$0xff]
        %v968 = vld [vmem:[%s11 + $0x70] sm:$0xff]
        %v969 = vld [vmem:[%s11 + $0x78] sm:$0xff]
        %v970 = vld [vmem:[%s11 + $0x80] sm:$0xff]
        %v971 = vld [vmem:[%s11 + $0x88] sm:$0xff]
        %v972 = vld [vmem:[%s11 + $0x90] sm:$0xff]
        %v973 = vld [vmem:[%s11 + $0x98] sm:$0xff]
        %v974 = vld [vmem:[%s11 + $0xa0] sm:$0xff]
        %v975 = vld [vmem:[%s11 + $0xa8] sm:$0xff]
        %v976 = vld [vmem:[%s11 + $0xb0] sm:$0xff]
        %v977 = vld [vmem:[%s11 + $0xb8] sm:$0xff]
        %v978 = vld [vmem:[%s11 + $0xc0] sm:$0xff]
        %v979 = vld [vmem:[%s11 + $0xc8] sm:$0xff]
        %v980 = vld [vmem:[%s11 + $0xd0] sm:$0xff]
        %v981 = vld [vmem:[%s11 + $0xd8] sm:$0xff]
        %v982 = vld [vmem:[%s11 + $0xe0] sm:$0xff]
        %v983 = vld [vmem:[%s11 + $0xe8] sm:$0xff]
        %v984 = vld [vmem:[%s11 + $0xf0] sm:$0xff]
        %v985 = vld [vmem:[%s11 + $0xf8] sm:$0xff]
        %v1018 = vunpack.c.l.b16 %v954
        %v1019 = vunpack.c.h.b16 %v954
        %v1020 = vunpack.c.l.b16 %v955
        %v1021 = vunpack.c.h.b16 %v955
        %v1022 = vunpack.c.l.b16 %v956
        %v1023 = vunpack.c.h.b16 %v956
        %v1024 = vunpack.c.l.b16 %v957
        %v1025 = vunpack.c.h.b16 %v957
        %v1026 = vunpack.c.l.b16 %v958
        %v1027 = vunpack.c.h.b16 %v958
        %v1028 = vunpack.c.l.b16 %v959
        %v1029 = vunpack.c.h.b16 %v959
        %v1030 = vunpack.c.l.b16 %v960
        %v1031 = vunpack.c.h.b16 %v960
        %v1032 = vunpack.c.l.b16 %v961
        %v1033 = vunpack.c.h.b16 %v961
        %v1034 = vunpack.c.l.b16 %v962
        %v1035 = vunpack.c.h.b16 %v962
        %v1036 = vunpack.c.l.b16 %v963
        %v1037 = vunpack.c.h.b16 %v963
        %v1038 = vunpack.c.l.b16 %v964
        %v1039 = vunpack.c.h.b16 %v964
        %v1040 = vunpack.c.l.b16 %v965
        %v1041 = vunpack.c.h.b16 %v965
        %v1042 = vunpack.c.l.b16 %v966
        %v1043 = vunpack.c.h.b16 %v966
        %v1044 = vunpack.c.l.b16 %v967
        %v1045 = vunpack.c.h.b16 %v967
        %v1046 = vunpack.c.l.b16 %v968
        %v1047 = vunpack.c.h.b16 %v968
        %v1048 = vunpack.c.l.b16 %v969
        %v1049 = vunpack.c.h.b16 %v969
        %v1050 = vunpack.c.l.b16 %v970
        %v1051 = vunpack.c.h.b16 %v970
        %v1052 = vunpack.c.l.b16 %v971
        %v1053 = vunpack.c.h.b16 %v971
        %v1054 = vunpack.c.l.b16 %v972
        %v1055 = vunpack.c.h.b16 %v972
        %v1056 = vunpack.c.l.b16 %v973
        %v1057 = vunpack.c.h.b16 %v973
        %v1058 = vunpack.c.l.b16 %v974
        %v1059 = vunpack.c.h.b16 %v974
        %v1060 = vunpack.c.l.b16 %v975
        %v1061 = vunpack.c.h.b16 %v975
        %v1062 = vunpack.c.l.b16 %v976
        %v1063 = vunpack.c.h.b16 %v976
        %v1064 = vunpack.c.l.b16 %v977
        %v1065 = vunpack.c.h.b16 %v977
        %v1066 = vunpack.c.l.b16 %v978
        %v1067 = vunpack.c.h.b16 %v978
        %v1068 = vunpack.c.l.b16 %v979
        %v1069 = vunpack.c.h.b16 %v979
        %v1070 = vunpack.c.l.b16 %v980
        %v1071 = vunpack.c.h.b16 %v980
        %v1072 = vunpack.c.l.b16 %v981
        %v1073 = vunpack.c.h.b16 %v981
        %v1074 = vunpack.c.l.b16 %v982
        %v1075 = vunpack.c.h.b16 %v982
        %v1076 = vunpack.c.l.b16 %v983
        %v1077 = vunpack.c.h.b16 %v983
        %v1078 = vunpack.c.l.b16 %v984
        %v1079 = vunpack.c.h.b16 %v984
        %v1080 = vunpack.c.l.b16 %v985
        %v1081 = vunpack.c.h.b16 %v985
        %v1082 = vpack.c.b16 %v1020, %v1018
        %v1083 = vpack.c.b16 %v1021, %v1019
        %v1084 = vpack.c.b16 %v1024, %v1022
        %v1085 = vpack.c.b16 %v1025, %v1023
        %v1086 = vpack.c.b16 %v1028, %v1026
        %v1087 = vpack.c.b16 %v1029, %v1027
        %v1088 = vpack.c.b16 %v1032, %v1030
        %v1089 = vpack.c.b16 %v1033, %v1031
        %v1090 = vpack.c.b16 %v1036, %v1034
        %v1091 = vpack.c.b16 %v1037, %v1035
        %v1092 = vpack.c.b16 %v1040, %v1038
        %v1093 = vpack.c.b16 %v1041, %v1039
        %v1094 = vpack.c.b16 %v1044, %v1042
        %v1095 = vpack.c.b16 %v1045, %v1043
        %v1096 = vpack.c.b16 %v1048, %v1046
        %v1097 = vpack.c.b16 %v1049, %v1047
        %v1098 = vpack.c.b16 %v1052, %v1050
        %v1099 = vpack.c.b16 %v1053, %v1051
        %v1100 = vpack.c.b16 %v1056, %v1054
        %v1101 = vpack.c.b16 %v1057, %v1055
        %v1102 = vpack.c.b16 %v1060, %v1058
        %v1103 = vpack.c.b16 %v1061, %v1059
        %v1104 = vpack.c.b16 %v1064, %v1062
        %v1105 = vpack.c.b16 %v1065, %v1063
        %v1106 = vpack.c.b16 %v1068, %v1066
        %v1107 = vpack.c.b16 %v1069, %v1067
        %v1108 = vpack.c.b16 %v1072, %v1070
        %v1109 = vpack.c.b16 %v1073, %v1071
        %v1110 = vpack.c.b16 %v1076, %v1074
        %v1111 = vpack.c.b16 %v1077, %v1075
        %v1112 = vpack.c.b16 %v1080, %v1078
        %v1113 = vpack.c.b16 %v1081, %v1079
        %1146 = vmatprep.subr.bf16.mxu0 %v1083
        %1147 = vmatpush1.bf16.msra.mxu0 %v1082
        %1148 = vmatprep.subr.bf16.mxu0 %v1085
        %1149 = vmatpush1.bf16.msra.mxu0 %v1084
        %1150 = vmatprep.subr.bf16.mxu0 %v1087
        %1151 = vmatpush1.bf16.msra.mxu0 %v1086
        %1152 = vmatprep.subr.bf16.mxu0 %v1089
        %1153 = vmatpush1.bf16.msra.mxu0 %v1088
        %1154 = vmatprep.subr.bf16.mxu0 %v1091
        %1155 = vmatpush1.bf16.msra.mxu0 %v1090
        %1156 = vmatprep.subr.bf16.mxu0 %v1093
        %1157 = vmatpush1.bf16.msra.mxu0 %v1092
        %1158 = vmatprep.subr.bf16.mxu0 %v1095
        %1159 = vmatpush1.bf16.msra.mxu0 %v1094
        %1160 = vmatprep.subr.bf16.mxu0 %v1097
        %1161 = vmatpush1.bf16.msra.mxu0 %v1096
        %1162 = vmatprep.subr.bf16.mxu0 %v1099
        %1163 = vmatpush1.bf16.msra.mxu0 %v1098
        %1164 = vmatprep.subr.bf16.mxu0 %v1101
        %1165 = vmatpush1.bf16.msra.mxu0 %v1100
        %1166 = vmatprep.subr.bf16.mxu0 %v1103
        %1167 = vmatpush1.bf16.msra.mxu0 %v1102
        %1168 = vmatprep.subr.bf16.mxu0 %v1105
        %1169 = vmatpush1.bf16.msra.mxu0 %v1104
        %1170 = vmatprep.subr.bf16.mxu0 %v1107
        %1171 = vmatpush1.bf16.msra.mxu0 %v1106
        %1172 = vmatprep.subr.bf16.mxu0 %v1109
        %1173 = vmatpush1.bf16.msra.mxu0 %v1108
        %1174 = vmatprep.subr.bf16.mxu0 %v1111
        %1175 = vmatpush1.bf16.msra.mxu0 %v1110
        %1176 = vmatprep.subr.bf16.mxu0 %v1113
        %1177 = vmatpush1.bf16.msra.mxu0 %v1112
        %1178 = vmatprep.mubr.bf16.mxu0 %v953
        %1179 = vmatmul.mubr.bf16.gmra.mrb[0].mxu0 %v952
        %v1180 = vpop.f32.mrb[0].mxu0
        %v1181 = vadd.f32 0.0, %v1180
        %v1182 = vpop.f32.mrb[0].mxu0
        %v1183 = vadd.f32 0.0, %v1182
        %v1184 = vpop.f32.mrb[0].mxu0
        %v1185 = vpop.f32.mrb[0].mxu0
        %1186 = vdwg.mxu0
        %v1187 = vld [vmem:[%s12] sm:$0xff]
        %v1188 = vld [vmem:[%s12 + $0x8] sm:$0xff]
        %v1189 = vld [vmem:[%s12 + $0x10] sm:$0xff]
        %v1190 = vld [vmem:[%s12 + $0x18] sm:$0xff]
        %v1191 = vld [vmem:[%s12 + $0x20] sm:$0xff]
        %v1192 = vld [vmem:[%s12 + $0x28] sm:$0xff]
        %v1193 = vld [vmem:[%s12 + $0x30] sm:$0xff]
        %v1194 = vld [vmem:[%s12 + $0x38] sm:$0xff]
        %v1195 = vld [vmem:[%s12 + $0x40] sm:$0xff]
        %v1196 = vld [vmem:[%s12 + $0x48] sm:$0xff]
        %v1197 = vld [vmem:[%s12 + $0x50] sm:$0xff]
        %v1198 = vld [vmem:[%s12 + $0x58] sm:$0xff]
        %v1199 = vld [vmem:[%s12 + $0x60] sm:$0xff]
        %v1200 = vld [vmem:[%s12 + $0x68] sm:$0xff]
        %v1201 = vld [vmem:[%s12 + $0x70] sm:$0xff]
        %v1202 = vld [vmem:[%s12 + $0x78] sm:$0xff]
        %v1203 = vld [vmem:[%s12 + $0x80] sm:$0xff]
        %v1204 = vld [vmem:[%s12 + $0x88] sm:$0xff]
        %v1205 = vld [vmem:[%s12 + $0x90] sm:$0xff]
        %v1206 = vld [vmem:[%s12 + $0x98] sm:$0xff]
        %v1207 = vld [vmem:[%s12 + $0xa0] sm:$0xff]
        %v1208 = vld [vmem:[%s12 + $0xa8] sm:$0xff]
        %v1209 = vld [vmem:[%s12 + $0xb0] sm:$0xff]
        %v1210 = vld [vmem:[%s12 + $0xb8] sm:$0xff]
        %v1211 = vld [vmem:[%s12 + $0xc0] sm:$0xff]
        %v1212 = vld [vmem:[%s12 + $0xc8] sm:$0xff]
        %v1213 = vld [vmem:[%s12 + $0xd0] sm:$0xff]
        %v1214 = vld [vmem:[%s12 + $0xd8] sm:$0xff]
        %v1215 = vld [vmem:[%s12 + $0xe0] sm:$0xff]
        %v1216 = vld [vmem:[%s12 + $0xe8] sm:$0xff]
        %v1217 = vld [vmem:[%s12 + $0xf0] sm:$0xff]
        %v1218 = vld [vmem:[%s12 + $0xf8] sm:$0xff]
        %v1251 = vunpack.c.l.b16 %v1187
        %v1252 = vunpack.c.h.b16 %v1187
        %v1253 = vunpack.c.l.b16 %v1188
        %v1254 = vunpack.c.h.b16 %v1188
        %v1255 = vunpack.c.l.b16 %v1189
        %v1256 = vunpack.c.h.b16 %v1189
        %v1257 = vunpack.c.l.b16 %v1190
        %v1258 = vunpack.c.h.b16 %v1190
        %v1259 = vunpack.c.l.b16 %v1191
        %v1260 = vunpack.c.h.b16 %v1191
        %v1261 = vunpack.c.l.b16 %v1192
        %v1262 = vunpack.c.h.b16 %v1192
        %v1263 = vunpack.c.l.b16 %v1193
        %v1264 = vunpack.c.h.b16 %v1193
        %v1265 = vunpack.c.l.b16 %v1194
        %v1266 = vunpack.c.h.b16 %v1194
        %v1267 = vunpack.c.l.b16 %v1195
        %v1268 = vunpack.c.h.b16 %v1195
        %v1269 = vunpack.c.l.b16 %v1196
        %v1270 = vunpack.c.h.b16 %v1196
        %v1271 = vunpack.c.l.b16 %v1197
        %v1272 = vunpack.c.h.b16 %v1197
        %v1273 = vunpack.c.l.b16 %v1198
        %v1274 = vunpack.c.h.b16 %v1198
        %v1275 = vunpack.c.l.b16 %v1199
        %v1276 = vunpack.c.h.b16 %v1199
        %v1277 = vunpack.c.l.b16 %v1200
        %v1278 = vunpack.c.h.b16 %v1200
        %v1279 = vunpack.c.l.b16 %v1201
        %v1280 = vunpack.c.h.b16 %v1201
        %v1281 = vunpack.c.l.b16 %v1202
        %v1282 = vunpack.c.h.b16 %v1202
        %v1283 = vunpack.c.l.b16 %v1203
        %v1284 = vunpack.c.h.b16 %v1203
        %v1285 = vunpack.c.l.b16 %v1204
        %v1286 = vunpack.c.h.b16 %v1204
        %v1287 = vunpack.c.l.b16 %v1205
        %v1288 = vunpack.c.h.b16 %v1205
        %v1289 = vunpack.c.l.b16 %v1206
        %v1290 = vunpack.c.h.b16 %v1206
        %v1291 = vunpack.c.l.b16 %v1207
        %v1292 = vunpack.c.h.b16 %v1207
        %v1293 = vunpack.c.l.b16 %v1208
        %v1294 = vunpack.c.h.b16 %v1208
        %v1295 = vunpack.c.l.b16 %v1209
        %v1296 = vunpack.c.h.b16 %v1209
        %v1297 = vunpack.c.l.b16 %v1210
        %v1298 = vunpack.c.h.b16 %v1210
        %v1299 = vunpack.c.l.b16 %v1211
        %v1300 = vunpack.c.h.b16 %v1211
        %v1301 = vunpack.c.l.b16 %v1212
        %v1302 = vunpack.c.h.b16 %v1212
        %v1303 = vunpack.c.l.b16 %v1213
        %v1304 = vunpack.c.h.b16 %v1213
        %v1305 = vunpack.c.l.b16 %v1214
        %v1306 = vunpack.c.h.b16 %v1214
        %v1307 = vunpack.c.l.b16 %v1215
        %v1308 = vunpack.c.h.b16 %v1215
        %v1309 = vunpack.c.l.b16 %v1216
        %v1310 = vunpack.c.h.b16 %v1216
        %v1311 = vunpack.c.l.b16 %v1217
        %v1312 = vunpack.c.h.b16 %v1217
        %v1313 = vunpack.c.l.b16 %v1218
        %v1314 = vunpack.c.h.b16 %v1218
        %v1315 = vpack.c.b16 %v1253, %v1251
        %v1316 = vpack.c.b16 %v1254, %v1252
        %v1317 = vpack.c.b16 %v1257, %v1255
        %v1318 = vpack.c.b16 %v1258, %v1256
        %v1319 = vpack.c.b16 %v1261, %v1259
        %v1320 = vpack.c.b16 %v1262, %v1260
        %v1321 = vpack.c.b16 %v1265, %v1263
        %v1322 = vpack.c.b16 %v1266, %v1264
        %v1323 = vpack.c.b16 %v1269, %v1267
        %v1324 = vpack.c.b16 %v1270, %v1268
        %v1325 = vpack.c.b16 %v1273, %v1271
        %v1326 = vpack.c.b16 %v1274, %v1272
        %v1327 = vpack.c.b16 %v1277, %v1275
        %v1328 = vpack.c.b16 %v1278, %v1276
        %v1329 = vpack.c.b16 %v1281, %v1279
        %v1330 = vpack.c.b16 %v1282, %v1280
        %v1331 = vpack.c.b16 %v1285, %v1283
        %v1332 = vpack.c.b16 %v1286, %v1284
        %v1333 = vpack.c.b16 %v1289, %v1287
        %v1334 = vpack.c.b16 %v1290, %v1288
        %v1335 = vpack.c.b16 %v1293, %v1291
        %v1336 = vpack.c.b16 %v1294, %v1292
        %v1337 = vpack.c.b16 %v1297, %v1295
        %v1338 = vpack.c.b16 %v1298, %v1296
        %v1339 = vpack.c.b16 %v1301, %v1299
        %v1340 = vpack.c.b16 %v1302, %v1300
        %v1341 = vpack.c.b16 %v1305, %v1303
        %v1342 = vpack.c.b16 %v1306, %v1304
        %v1343 = vpack.c.b16 %v1309, %v1307
        %v1344 = vpack.c.b16 %v1310, %v1308
        %v1345 = vpack.c.b16 %v1313, %v1311
        %v1346 = vpack.c.b16 %v1314, %v1312
        %1379 = vmatprep.subr.bf16.mxu0 %v1316
        %1380 = vmatpush1.bf16.msra.mxu0 %v1315
        %1381 = vmatprep.subr.bf16.mxu0 %v1318
        %1382 = vmatpush1.bf16.msra.mxu0 %v1317
        %1383 = vmatprep.subr.bf16.mxu0 %v1320
        %1384 = vmatpush1.bf16.msra.mxu0 %v1319
        %1385 = vmatprep.subr.bf16.mxu0 %v1322
        %1386 = vmatpush1.bf16.msra.mxu0 %v1321
        %1387 = vmatprep.subr.bf16.mxu0 %v1324
        %1388 = vmatpush1.bf16.msra.mxu0 %v1323
        %1389 = vmatprep.subr.bf16.mxu0 %v1326
        %1390 = vmatpush1.bf16.msra.mxu0 %v1325
        %1391 = vmatprep.subr.bf16.mxu0 %v1328
        %1392 = vmatpush1.bf16.msra.mxu0 %v1327
        %1393 = vmatprep.subr.bf16.mxu0 %v1330
        %1394 = vmatpush1.bf16.msra.mxu0 %v1329
        %1395 = vmatprep.subr.bf16.mxu0 %v1332
        %1396 = vmatpush1.bf16.msra.mxu0 %v1331
        %1397 = vmatprep.subr.bf16.mxu0 %v1334
        %1398 = vmatpush1.bf16.msra.mxu0 %v1333
        %1399 = vmatprep.subr.bf16.mxu0 %v1336
        %1400 = vmatpush1.bf16.msra.mxu0 %v1335
        %1401 = vmatprep.subr.bf16.mxu0 %v1338
        %1402 = vmatpush1.bf16.msra.mxu0 %v1337
        %1403 = vmatprep.subr.bf16.mxu0 %v1340
        %1404 = vmatpush1.bf16.msra.mxu0 %v1339
        %1405 = vmatprep.subr.bf16.mxu0 %v1342
        %1406 = vmatpush1.bf16.msra.mxu0 %v1341
        %1407 = vmatprep.subr.bf16.mxu0 %v1344
        %1408 = vmatpush1.bf16.msra.mxu0 %v1343
        %1409 = vmatprep.subr.bf16.mxu0 %v1346
        %1410 = vmatpush1.bf16.msra.mxu0 %v1345
        %1411 = vmatprep.mubr.bf16.mxu0 %v953
        %1412 = vmatmul.mubr.bf16.gmra.mrb[0].mxu0 %v952
        %v1413 = vpop.f32.mrb[0].mxu0
        %v1414 = vadd.f32 0.0, %v1413
        %v1415 = vpop.f32.mrb[0].mxu0
        %v1416 = vadd.f32 0.0, %v1415
        %v1417 = vpop.f32.mrb[0].mxu0
        %v1418 = vpop.f32.mrb[0].mxu0
        %1419 = vdwg.mxu0
        %v1420 = vld [vmem:[%s4] sm:$0xff]
        %v1421 = vld [vmem:[%s4 + $0x8] sm:$0xff]
        %v1422 = vld [vmem:[%s4 + $0x10] sm:$0xff]
        %v1423 = vld [vmem:[%s4 + $0x18] sm:$0xff]
        %v1424 = vld [vmem:[%s4 + $0x20] sm:$0xff]
        %v1425 = vld [vmem:[%s4 + $0x28] sm:$0xff]
        %v1426 = vld [vmem:[%s4 + $0x30] sm:$0xff]
        %v1427 = vld [vmem:[%s4 + $0x38] sm:$0xff]
        %vm1428 = vcmask 64512
        %v1430 = vsel %vm1428, %v1420, 0
        %v1433 = vsel %vm1428, %v1421, 0
        %v1436 = vsel %vm1428, %v1422, 0
        %v1439 = vsel %vm1428, %v1423, 0
        %v1442 = vsel %vm1428, %v1424, 0
        %v1445 = vsel %vm1428, %v1425, 0
        %v1448 = vsel %vm1428, %v1426, 0
        %v1451 = vsel %vm1428, %v1427, 0
        %1453 = vmatprep.subr.mxu0 %v1183
        %1454 = vmatpush1.msra.mxu0 %v1181
        %1455 = vmatprep.subr.mxu0 0.0
        %1456 = vmatpush1.msra.mxu0 0.0
        %1457 = vmatprep.subr.mxu0 0.0
        %1458 = vmatpush1.msra.mxu0 0.0
        %1459 = vmatprep.subr.mxu0 0.0
        %1460 = vmatpush1.msra.mxu0 0.0
        %1461 = vmatprep.subr.mxu0 0.0
        %1462 = vmatpush1.msra.mxu0 0.0
        %1463 = vmatprep.subr.mxu0 0.0
        %1464 = vmatpush1.msra.mxu0 0.0
        %1465 = vmatprep.subr.mxu0 0.0
        %1466 = vmatpush1.msra.mxu0 0.0
        %1467 = vmatprep.subr.mxu0 0.0
        %1468 = vmatpush1.msra.mxu0 0.0
        %1469 = vmatprep.subr.mxu0 0.0
        %1470 = vmatpush1.msra.mxu0 0.0
        %1471 = vmatprep.subr.mxu0 0.0
        %1472 = vmatpush1.msra.mxu0 0.0
        %1473 = vmatprep.subr.mxu0 0.0
        %1474 = vmatpush1.msra.mxu0 0.0
        %1475 = vmatprep.subr.mxu0 0.0
        %1476 = vmatpush1.msra.mxu0 0.0
        %1477 = vmatprep.subr.mxu0 0.0
        %1478 = vmatpush1.msra.mxu0 0.0
        %1479 = vmatprep.subr.mxu0 0.0
        %1480 = vmatpush1.msra.mxu0 0.0
        %1481 = vmatprep.subr.mxu0 0.0
        %1482 = vmatpush1.msra.mxu0 0.0
        %1483 = vmatprep.subr.mxu0 0.0
        %1484 = vmatpush1.msra.mxu0 0.0
        %1485 = vmatprep.subr.mxu0 0.0
        %1486 = vmatpush1.msra.mxu0 0.0
        %1487 = vmatprep.subr.mxu0 0.0
        %1488 = vmatpush1.msra.mxu0 0.0
        %1489 = vmatprep.subr.mxu0 0.0
        %1490 = vmatpush1.msra.mxu0 0.0
        %1491 = vmatprep.subr.mxu0 0.0
        %1492 = vmatpush1.msra.mxu0 0.0
        %1493 = vmatprep.subr.mxu0 0.0
        %1494 = vmatpush1.msra.mxu0 0.0
        %1495 = vmatprep.subr.mxu0 0.0
        %1496 = vmatpush1.msra.mxu0 0.0
        %1497 = vmatprep.subr.mxu0 0.0
        %1498 = vmatpush1.msra.mxu0 0.0
        %1499 = vmatprep.subr.mxu0 0.0
        %1500 = vmatpush1.msra.mxu0 0.0
        %1501 = vmatprep.subr.mxu0 0.0
        %1502 = vmatpush1.msra.mxu0 0.0
        %1503 = vmatprep.subr.mxu0 0.0
        %1504 = vmatpush1.msra.mxu0 0.0
        %1505 = vmatprep.subr.mxu0 0.0
        %1506 = vmatpush1.msra.mxu0 0.0
        %1507 = vmatprep.subr.mxu0 0.0
        %1508 = vmatpush1.msra.mxu0 0.0
        %1509 = vmatprep.subr.mxu0 0.0
        %1510 = vmatpush1.msra.mxu0 0.0
        %1511 = vmatprep.subr.mxu0 0.0
        %1512 = vmatpush1.msra.mxu0 0.0
        %1513 = vmatprep.subr.mxu0 0.0
        %1514 = vmatpush1.msra.mxu0 0.0
        %1515 = vmatprep.subr.mxu0 0.0
        %1516 = vmatpush1.msra.mxu0 0.0
        %1517 = vmatprep.mubr.f32.mxu0 0.0
        %1518 = vmatmul.mubr.f32.gmra.mrb[0].mxu0 %v1430
        %v1519 = vpop.f32.mrb[0].mxu0
        %v1520 = vadd.f32 0.0, %v1519
        %v1521 = vpop.f32.mrb[0].mxu0
        %v1522 = vadd.f32 0.0, %v1521
        %1523 = vmatprep.mubr.f32.mxu0 0.0
        %1524 = vmatmul.mubr.f32.gmra.mrb[0].mxu0 %v1433
        %v1525 = vpop.f32.mrb[0].mxu0
        %v1526 = vadd.f32 0.0, %v1525
        %v1527 = vpop.f32.mrb[0].mxu0
        %v1528 = vadd.f32 0.0, %v1527
        %1529 = vmatprep.mubr.f32.mxu0 0.0
        %1530 = vmatmul.mubr.f32.gmra.mrb[0].mxu0 %v1436
        %v1531 = vpop.f32.mrb[0].mxu0
        %v1532 = vadd.f32 0.0, %v1531
        %v1533 = vpop.f32.mrb[0].mxu0
        %v1534 = vadd.f32 0.0, %v1533
        %1535 = vmatprep.mubr.f32.mxu0 0.0
        %1536 = vmatmul.mubr.f32.gmra.mrb[0].mxu0 %v1439
        %v1537 = vpop.f32.mrb[0].mxu0
        %v1538 = vadd.f32 0.0, %v1537
        %v1539 = vpop.f32.mrb[0].mxu0
        %v1540 = vadd.f32 0.0, %v1539
        %1541 = vmatprep.mubr.f32.mxu0 0.0
        %1542 = vmatmul.mubr.f32.gmra.mrb[0].mxu0 %v1442
        %v1543 = vpop.f32.mrb[0].mxu0
        %v1544 = vadd.f32 0.0, %v1543
        %v1545 = vpop.f32.mrb[0].mxu0
        %v1546 = vadd.f32 0.0, %v1545
        %1547 = vmatprep.mubr.f32.mxu0 0.0
        %1548 = vmatmul.mubr.f32.gmra.mrb[0].mxu0 %v1445
        %v1549 = vpop.f32.mrb[0].mxu0
        %v1550 = vadd.f32 0.0, %v1549
        %v1551 = vpop.f32.mrb[0].mxu0
        %v1552 = vadd.f32 0.0, %v1551
        %1553 = vmatprep.mubr.f32.mxu0 0.0
        %1554 = vmatmul.mubr.f32.gmra.mrb[0].mxu0 %v1448
        %v1555 = vpop.f32.mrb[0].mxu0
        %v1556 = vadd.f32 0.0, %v1555
        %v1557 = vpop.f32.mrb[0].mxu0
        %v1558 = vadd.f32 0.0, %v1557
        %1559 = vmatprep.mubr.f32.mxu0 0.0
        %1560 = vmatmul.mubr.f32.gmra.mrb[0].mxu0 %v1451
        %v1561 = vpop.f32.mrb[0].mxu0
        %v1562 = vadd.f32 0.0, %v1561
        %v1563 = vpop.f32.mrb[0].mxu0
        %v1564 = vadd.f32 0.0, %v1563
        %1565 = vdwg.mxu0
        %1566 = vmatprep.subr.mxu0 %v1416
        %1567 = vmatpush1.msra.mxu0 %v1414
        %1568 = vmatprep.subr.mxu0 0.0
        %1569 = vmatpush1.msra.mxu0 0.0
        %1570 = vmatprep.subr.mxu0 0.0
        %1571 = vmatpush1.msra.mxu0 0.0
        %1572 = vmatprep.subr.mxu0 0.0
        %1573 = vmatpush1.msra.mxu0 0.0
        %1574 = vmatprep.subr.mxu0 0.0
        %1575 = vmatpush1.msra.mxu0 0.0
        %1576 = vmatprep.subr.mxu0 0.0
        %1577 = vmatpush1.msra.mxu0 0.0
        %1578 = vmatprep.subr.mxu0 0.0
        %1579 = vmatpush1.msra.mxu0 0.0
        %1580 = vmatprep.subr.mxu0 0.0
        %1581 = vmatpush1.msra.mxu0 0.0
        %1582 = vmatprep.subr.mxu0 0.0
        %1583 = vmatpush1.msra.mxu0 0.0
        %1584 = vmatprep.subr.mxu0 0.0
        %1585 = vmatpush1.msra.mxu0 0.0
        %1586 = vmatprep.subr.mxu0 0.0
        %1587 = vmatpush1.msra.mxu0 0.0
        %1588 = vmatprep.subr.mxu0 0.0
        %1589 = vmatpush1.msra.mxu0 0.0
        %1590 = vmatprep.subr.mxu0 0.0
        %1591 = vmatpush1.msra.mxu0 0.0
        %1592 = vmatprep.subr.mxu0 0.0
        %1593 = vmatpush1.msra.mxu0 0.0
        %1594 = vmatprep.subr.mxu0 0.0
        %1595 = vmatpush1.msra.mxu0 0.0
        %1596 = vmatprep.subr.mxu0 0.0
        %1597 = vmatpush1.msra.mxu0 0.0
        %1598 = vmatprep.subr.mxu0 0.0
        %1599 = vmatpush1.msra.mxu0 0.0
        %1600 = vmatprep.subr.mxu0 0.0
        %1601 = vmatpush1.msra.mxu0 0.0
        %1602 = vmatprep.subr.mxu0 0.0
        %1603 = vmatpush1.msra.mxu0 0.0
        %1604 = vmatprep.subr.mxu0 0.0
        %1605 = vmatpush1.msra.mxu0 0.0
        %1606 = vmatprep.subr.mxu0 0.0
        %1607 = vmatpush1.msra.mxu0 0.0
        %1608 = vmatprep.subr.mxu0 0.0
        %1609 = vmatpush1.msra.mxu0 0.0
        %1610 = vmatprep.subr.mxu0 0.0
        %1611 = vmatpush1.msra.mxu0 0.0
        %1612 = vmatprep.subr.mxu0 0.0
        %1613 = vmatpush1.msra.mxu0 0.0
        %1614 = vmatprep.subr.mxu0 0.0
        %1615 = vmatpush1.msra.mxu0 0.0
        %1616 = vmatprep.subr.mxu0 0.0
        %1617 = vmatpush1.msra.mxu0 0.0
        %1618 = vmatprep.subr.mxu0 0.0
        %1619 = vmatpush1.msra.mxu0 0.0
        %1620 = vmatprep.subr.mxu0 0.0
        %1621 = vmatpush1.msra.mxu0 0.0
        %1622 = vmatprep.subr.mxu0 0.0
        %1623 = vmatpush1.msra.mxu0 0.0
        %1624 = vmatprep.subr.mxu0 0.0
        %1625 = vmatpush1.msra.mxu0 0.0
        %1626 = vmatprep.subr.mxu0 0.0
        %1627 = vmatpush1.msra.mxu0 0.0
        %1628 = vmatprep.subr.mxu0 0.0
        %1629 = vmatpush1.msra.mxu0 0.0
        %1630 = vmatprep.mubr.f32.mxu0 0.0
        %1631 = vmatmul.mubr.f32.gmra.mrb[0].mxu0 %v1430
        %v1632 = vpop.f32.mrb[0].mxu0
        %v1633 = vadd.f32 0.0, %v1632
        %v1634 = vpop.f32.mrb[0].mxu0
        %v1635 = vadd.f32 0.0, %v1634
        %1636 = vmatprep.mubr.f32.mxu0 0.0
        %1637 = vmatmul.mubr.f32.gmra.mrb[0].mxu0 %v1433
        %v1638 = vpop.f32.mrb[0].mxu0
        %v1639 = vadd.f32 0.0, %v1638
        %v1640 = vpop.f32.mrb[0].mxu0
        %v1641 = vadd.f32 0.0, %v1640
        %1642 = vmatprep.mubr.f32.mxu0 0.0
        %1643 = vmatmul.mubr.f32.gmra.mrb[0].mxu0 %v1436
        %v1644 = vpop.f32.mrb[0].mxu0
        %v1645 = vadd.f32 0.0, %v1644
        %v1646 = vpop.f32.mrb[0].mxu0
        %v1647 = vadd.f32 0.0, %v1646
        %1648 = vmatprep.mubr.f32.mxu0 0.0
        %1649 = vmatmul.mubr.f32.gmra.mrb[0].mxu0 %v1439
        %v1650 = vpop.f32.mrb[0].mxu0
        %v1651 = vadd.f32 0.0, %v1650
        %v1652 = vpop.f32.mrb[0].mxu0
        %v1653 = vadd.f32 0.0, %v1652
        %1654 = vmatprep.mubr.f32.mxu0 0.0
        %1655 = vmatmul.mubr.f32.gmra.mrb[0].mxu0 %v1442
        %v1656 = vpop.f32.mrb[0].mxu0
        %v1657 = vadd.f32 0.0, %v1656
        %v1658 = vpop.f32.mrb[0].mxu0
        %v1659 = vadd.f32 0.0, %v1658
        %1660 = vmatprep.mubr.f32.mxu0 0.0
        %1661 = vmatmul.mubr.f32.gmra.mrb[0].mxu0 %v1445
        %v1662 = vpop.f32.mrb[0].mxu0
        %v1663 = vadd.f32 0.0, %v1662
        %v1664 = vpop.f32.mrb[0].mxu0
        %v1665 = vadd.f32 0.0, %v1664
        %1666 = vmatprep.mubr.f32.mxu0 0.0
        %1667 = vmatmul.mubr.f32.gmra.mrb[0].mxu0 %v1448
        %v1668 = vpop.f32.mrb[0].mxu0
        %v1669 = vadd.f32 0.0, %v1668
        %v1670 = vpop.f32.mrb[0].mxu0
        %v1671 = vadd.f32 0.0, %v1670
        %1672 = vmatprep.mubr.f32.mxu0 0.0
        %1673 = vmatmul.mubr.f32.gmra.mrb[0].mxu0 %v1451
        %v1674 = vpop.f32.mrb[0].mxu0
        %v1675 = vadd.f32 0.0, %v1674
        %v1676 = vpop.f32.mrb[0].mxu0
        %v1677 = vadd.f32 0.0, %v1676
        %1678 = vdwg.mxu0
        %v1679 = vld [vmem:[%s5] sm:$0xff]
        %v1680 = vld [vmem:[%s5 + $0x8] sm:$0xff]
        %v1681 = vld [vmem:[%s5 + $0x10] sm:$0xff]
        %v1682 = vld [vmem:[%s5 + $0x18] sm:$0xff]
        %v1683 = vld [vmem:[%s5 + $0x20] sm:$0xff]
        %v1684 = vld [vmem:[%s5 + $0x28] sm:$0xff]
        %v1685 = vld [vmem:[%s5 + $0x30] sm:$0xff]
        %v1686 = vld [vmem:[%s5 + $0x38] sm:$0xff]
        %v1688 = vsel %vm874, %v922, 0
        %v1691 = vsel %vm874, %v925, 0
        %v1694 = vsel %vm874, %v930, 0
        %v1697 = vsel %vm874, %v933, 0
        %v1700 = vsel %vm874, %v938, 0
        %v1703 = vsel %vm874, %v941, 0
        %v1706 = vsel %vm874, %v946, 0
        %v1709 = vsel %vm874, %v949, 0
        %1711 = vmatprep.subr.mxu0 %v1680
        %1712 = vmatpush1.msra.mxu0 %v1679
        %1713 = vmatprep.subr.mxu0 %v1682
        %1714 = vmatpush1.msra.mxu0 %v1681
        %1715 = vmatprep.subr.mxu0 %v1684
        %1716 = vmatpush1.msra.mxu0 %v1683
        %1717 = vmatprep.subr.mxu0 %v1686
        %1718 = vmatpush1.msra.mxu0 %v1685
        %1719 = vmatprep.subr.mxu0 0.0
        %1720 = vmatpush1.msra.mxu0 0.0
        %1721 = vmatprep.subr.mxu0 0.0
        %1722 = vmatpush1.msra.mxu0 0.0
        %1723 = vmatprep.subr.mxu0 0.0
        %1724 = vmatpush1.msra.mxu0 0.0
        %1725 = vmatprep.subr.mxu0 0.0
        %1726 = vmatpush1.msra.mxu0 0.0
        %1727 = vmatprep.subr.mxu0 0.0
        %1728 = vmatpush1.msra.mxu0 0.0
        %1729 = vmatprep.subr.mxu0 0.0
        %1730 = vmatpush1.msra.mxu0 0.0
        %1731 = vmatprep.subr.mxu0 0.0
        %1732 = vmatpush1.msra.mxu0 0.0
        %1733 = vmatprep.subr.mxu0 0.0
        %1734 = vmatpush1.msra.mxu0 0.0
        %1735 = vmatprep.subr.mxu0 0.0
        %1736 = vmatpush1.msra.mxu0 0.0
        %1737 = vmatprep.subr.mxu0 0.0
        %1738 = vmatpush1.msra.mxu0 0.0
        %1739 = vmatprep.subr.mxu0 0.0
        %1740 = vmatpush1.msra.mxu0 0.0
        %1741 = vmatprep.subr.mxu0 0.0
        %1742 = vmatpush1.msra.mxu0 0.0
        %1743 = vmatprep.subr.mxu0 0.0
        %1744 = vmatpush1.msra.mxu0 0.0
        %1745 = vmatprep.subr.mxu0 0.0
        %1746 = vmatpush1.msra.mxu0 0.0
        %1747 = vmatprep.subr.mxu0 0.0
        %1748 = vmatpush1.msra.mxu0 0.0
        %1749 = vmatprep.subr.mxu0 0.0
        %1750 = vmatpush1.msra.mxu0 0.0
        %1751 = vmatprep.subr.mxu0 0.0
        %1752 = vmatpush1.msra.mxu0 0.0
        %1753 = vmatprep.subr.mxu0 0.0
        %1754 = vmatpush1.msra.mxu0 0.0
        %1755 = vmatprep.subr.mxu0 0.0
        %1756 = vmatpush1.msra.mxu0 0.0
        %1757 = vmatprep.subr.mxu0 0.0
        %1758 = vmatpush1.msra.mxu0 0.0
        %1759 = vmatprep.subr.mxu0 0.0
        %1760 = vmatpush1.msra.mxu0 0.0
        %1761 = vmatprep.subr.mxu0 0.0
        %1762 = vmatpush1.msra.mxu0 0.0
        %1763 = vmatprep.subr.mxu0 0.0
        %1764 = vmatpush1.msra.mxu0 0.0
        %1765 = vmatprep.subr.mxu0 0.0
        %1766 = vmatpush1.msra.mxu0 0.0
        %1767 = vmatprep.subr.mxu0 0.0
        %1768 = vmatpush1.msra.mxu0 0.0
        %1769 = vmatprep.subr.mxu0 0.0
        %1770 = vmatpush1.msra.mxu0 0.0
        %1771 = vmatprep.subr.mxu0 0.0
        %1772 = vmatpush1.msra.mxu0 0.0
        %1773 = vmatprep.subr.mxu0 0.0
        %1774 = vmatpush1.msra.mxu0 0.0
        %1775 = vmatprep.mubr.f32.mxu0 0.0
        %1776 = vmatmul.mubr.f32.gmra.mrb[0].mxu0 %v1688
        %v1777 = vpop.f32.mrb[0].mxu0
        %v1778 = vadd.f32 0.0, %v1777
        %v1779 = vpop.f32.mrb[0].mxu0
        %v1780 = vadd.f32 0.0, %v1779
        %1781 = vmatprep.mubr.f32.mxu0 0.0
        %1782 = vmatmul.mubr.f32.gmra.mrb[0].mxu0 %v1691
        %v1783 = vpop.f32.mrb[0].mxu0
        %v1784 = vadd.f32 0.0, %v1783
        %v1785 = vpop.f32.mrb[0].mxu0
        %v1786 = vadd.f32 0.0, %v1785
        %1787 = vmatprep.mubr.f32.mxu0 0.0
        %1788 = vmatmul.mubr.f32.gmra.mrb[0].mxu0 %v1694
        %v1789 = vpop.f32.mrb[0].mxu0
        %v1790 = vadd.f32 0.0, %v1789
        %v1791 = vpop.f32.mrb[0].mxu0
        %v1792 = vadd.f32 0.0, %v1791
        %1793 = vmatprep.mubr.f32.mxu0 0.0
        %1794 = vmatmul.mubr.f32.gmra.mrb[0].mxu0 %v1697
        %v1795 = vpop.f32.mrb[0].mxu0
        %v1796 = vadd.f32 0.0, %v1795
        %v1797 = vpop.f32.mrb[0].mxu0
        %v1798 = vadd.f32 0.0, %v1797
        %1799 = vmatprep.mubr.f32.mxu0 0.0
        %1800 = vmatmul.mubr.f32.gmra.mrb[0].mxu0 %v1700
        %v1801 = vpop.f32.mrb[0].mxu0
        %v1802 = vadd.f32 0.0, %v1801
        %v1803 = vpop.f32.mrb[0].mxu0
        %v1804 = vadd.f32 0.0, %v1803
        %1805 = vmatprep.mubr.f32.mxu0 0.0
        %1806 = vmatmul.mubr.f32.gmra.mrb[0].mxu0 %v1703
        %v1807 = vpop.f32.mrb[0].mxu0
        %v1808 = vadd.f32 0.0, %v1807
        %v1809 = vpop.f32.mrb[0].mxu0
        %v1810 = vadd.f32 0.0, %v1809
        %1811 = vmatprep.mubr.f32.mxu0 0.0
        %1812 = vmatmul.mubr.f32.gmra.mrb[0].mxu0 %v1706
        %v1813 = vpop.f32.mrb[0].mxu0
        %v1814 = vadd.f32 0.0, %v1813
        %v1815 = vpop.f32.mrb[0].mxu0
        %v1816 = vadd.f32 0.0, %v1815
        %1817 = vmatprep.mubr.f32.mxu0 0.0
        %1818 = vmatmul.mubr.f32.gmra.mrb[0].mxu0 %v1709
        %v1819 = vpop.f32.mrb[0].mxu0
        %v1820 = vadd.f32 0.0, %v1819
        %v1821 = vpop.f32.mrb[0].mxu0
        %v1822 = vadd.f32 0.0, %v1821
        %1823 = vdwg.mxu0
        %v1824 = vadd.f32 %v823, %v1520
        %v1825 = vadd.f32 %v824, %v1522
        %v1826 = vadd.f32 %v825, %v1526
        %v1827 = vadd.f32 %v826, %v1528
        %v1828 = vadd.f32 %v827, %v1532
        %v1829 = vadd.f32 %v828, %v1534
        %v1830 = vadd.f32 %v829, %v1538
        %v1831 = vadd.f32 %v830, %v1540
        %v1832 = vadd.f32 %v831, %v1544
        %v1833 = vadd.f32 %v832, %v1546
        %v1834 = vadd.f32 %v833, %v1550
        %v1835 = vadd.f32 %v834, %v1552
        %v1836 = vadd.f32 %v835, %v1556
        %v1837 = vadd.f32 %v836, %v1558
        %v1838 = vadd.f32 %v837, %v1562
        %v1839 = vadd.f32 %v838, %v1564
        %v1840 = vmul.f32 %v1824, %v1778
        %v1841 = vmul.f32 %v1825, %v1780
        %v1842 = vmul.f32 %v1826, %v1784
        %v1843 = vmul.f32 %v1827, %v1786
        %v1844 = vmul.f32 %v1828, %v1790
        %v1845 = vmul.f32 %v1829, %v1792
        %v1846 = vmul.f32 %v1830, %v1796
        %v1847 = vmul.f32 %v1831, %v1798
        %v1848 = vmul.f32 %v1832, %v1802
        %v1849 = vmul.f32 %v1833, %v1804
        %v1850 = vmul.f32 %v1834, %v1808
        %v1851 = vmul.f32 %v1835, %v1810
        %v1852 = vmul.f32 %v1836, %v1814
        %v1853 = vmul.f32 %v1837, %v1816
        %v1854 = vmul.f32 %v1838, %v1820
        %v1855 = vmul.f32 %v1839, %v1822
        %v1856 = vld [vmem:[%s6] sm:$0xff]
        %v1857 = vld [vmem:[%s6 + $0x8] sm:$0xff]
        %v1858 = vld [vmem:[%s6 + $0x10] sm:$0xff]
        %v1859 = vld [vmem:[%s6 + $0x18] sm:$0xff]
        %v1860 = vld [vmem:[%s6 + $0x20] sm:$0xff]
        %v1861 = vld [vmem:[%s6 + $0x28] sm:$0xff]
        %v1862 = vld [vmem:[%s6 + $0x30] sm:$0xff]
        %v1863 = vld [vmem:[%s6 + $0x38] sm:$0xff]
        %v1864 = vld [vmem:[%s6 + $0x40] sm:$0xff]
        %v1865 = vld [vmem:[%s6 + $0x48] sm:$0xff]
        %v1866 = vld [vmem:[%s6 + $0x50] sm:$0xff]
        %v1867 = vld [vmem:[%s6 + $0x58] sm:$0xff]
        %v1868 = vld [vmem:[%s6 + $0x60] sm:$0xff]
        %v1869 = vld [vmem:[%s6 + $0x68] sm:$0xff]
        %v1870 = vld [vmem:[%s6 + $0x70] sm:$0xff]
        %v1871 = vld [vmem:[%s6 + $0x78] sm:$0xff]
        %v1872 = vld [vmem:[%s6 + $0x80] sm:$0xff]
        %v1873 = vld [vmem:[%s6 + $0x88] sm:$0xff]
        %v1874 = vld [vmem:[%s6 + $0x90] sm:$0xff]
        %v1875 = vld [vmem:[%s6 + $0x98] sm:$0xff]
        %v1876 = vld [vmem:[%s6 + $0xa0] sm:$0xff]
        %v1877 = vld [vmem:[%s6 + $0xa8] sm:$0xff]
        %v1878 = vld [vmem:[%s6 + $0xb0] sm:$0xff]
        %v1879 = vld [vmem:[%s6 + $0xb8] sm:$0xff]
        %v1880 = vld [vmem:[%s6 + $0xc0] sm:$0xff]
        %v1881 = vld [vmem:[%s6 + $0xc8] sm:$0xff]
        %v1882 = vld [vmem:[%s6 + $0xd0] sm:$0xff]
        %v1883 = vld [vmem:[%s6 + $0xd8] sm:$0xff]
        %v1884 = vld [vmem:[%s6 + $0xe0] sm:$0xff]
        %v1885 = vld [vmem:[%s6 + $0xe8] sm:$0xff]
        %v1886 = vld [vmem:[%s6 + $0xf0] sm:$0xff]
        %v1887 = vld [vmem:[%s6 + $0xf8] sm:$0xff]
        %1888 = vmatprep.subr.mxu0 0.0
        %1889 = vmatpush1.msra.mxu0 %v1856
        %1890 = vmatprep.subr.mxu0 0.0
        %1891 = vmatpush1.msra.mxu0 %v1857
        %1892 = vmatprep.subr.mxu0 0.0
        %1893 = vmatpush1.msra.mxu0 %v1858
        %1894 = vmatprep.subr.mxu0 0.0
        %1895 = vmatpush1.msra.mxu0 %v1859
        %1896 = vmatprep.subr.mxu0 0.0
        %1897 = vmatpush1.msra.mxu0 %v1860
        %1898 = vmatprep.subr.mxu0 0.0
        %1899 = vmatpush1.msra.mxu0 %v1861
        %1900 = vmatprep.subr.mxu0 0.0
        %1901 = vmatpush1.msra.mxu0 %v1862
        %1902 = vmatprep.subr.mxu0 0.0
        %1903 = vmatpush1.msra.mxu0 %v1863
        %1904 = vmatprep.subr.mxu0 0.0
        %1905 = vmatpush1.msra.mxu0 %v1864
        %1906 = vmatprep.subr.mxu0 0.0
        %1907 = vmatpush1.msra.mxu0 %v1865
        %1908 = vmatprep.subr.mxu0 0.0
        %1909 = vmatpush1.msra.mxu0 %v1866
        %1910 = vmatprep.subr.mxu0 0.0
        %1911 = vmatpush1.msra.mxu0 %v1867
        %1912 = vmatprep.subr.mxu0 0.0
        %1913 = vmatpush1.msra.mxu0 %v1868
        %1914 = vmatprep.subr.mxu0 0.0
        %1915 = vmatpush1.msra.mxu0 %v1869
        %1916 = vmatprep.subr.mxu0 0.0
        %1917 = vmatpush1.msra.mxu0 %v1870
        %1918 = vmatprep.subr.mxu0 0.0
        %1919 = vmatpush1.msra.mxu0 %v1871
        %1920 = vmatprep.subr.mxu0 0.0
        %1921 = vmatpush1.msra.mxu0 %v1872
        %1922 = vmatprep.subr.mxu0 0.0
        %1923 = vmatpush1.msra.mxu0 %v1873
        %1924 = vmatprep.subr.mxu0 0.0
        %1925 = vmatpush1.msra.mxu0 %v1874
        %1926 = vmatprep.subr.mxu0 0.0
        %1927 = vmatpush1.msra.mxu0 %v1875
        %1928 = vmatprep.subr.mxu0 0.0
        %1929 = vmatpush1.msra.mxu0 %v1876
        %1930 = vmatprep.subr.mxu0 0.0
        %1931 = vmatpush1.msra.mxu0 %v1877
        %1932 = vmatprep.subr.mxu0 0.0
        %1933 = vmatpush1.msra.mxu0 %v1878
        %1934 = vmatprep.subr.mxu0 0.0
        %1935 = vmatpush1.msra.mxu0 %v1879
        %1936 = vmatprep.subr.mxu0 0.0
        %1937 = vmatpush1.msra.mxu0 %v1880
        %1938 = vmatprep.subr.mxu0 0.0
        %1939 = vmatpush1.msra.mxu0 %v1881
        %1940 = vmatprep.subr.mxu0 0.0
        %1941 = vmatpush1.msra.mxu0 %v1882
        %1942 = vmatprep.subr.mxu0 0.0
        %1943 = vmatpush1.msra.mxu0 %v1883
        %1944 = vmatprep.subr.mxu0 0.0
        %1945 = vmatpush1.msra.mxu0 %v1884
        %1946 = vmatprep.subr.mxu0 0.0
        %1947 = vmatpush1.msra.mxu0 %v1885
        %1948 = vmatprep.subr.mxu0 0.0
        %1949 = vmatpush1.msra.mxu0 %v1886
        %1950 = vmatprep.subr.mxu0 0.0
        %1951 = vmatpush1.msra.mxu0 %v1887
        %1952 = vmatprep.mubr.f32.mxu0 %v1841
        %1953 = vmatmul.mubr.f32.gmra.mrb[0].mxu0 %v1840
        %v1954 = vpop.f32.mrb[0].mxu0
        %v1955 = vadd.f32 0.0, %v1954
        %v1956 = vpop.f32.mrb[0].mxu0
        %1957 = vmatprep.mubr.f32.mxu0 %v1843
        %1958 = vmatmul.mubr.f32.gmra.mrb[0].mxu0 %v1842
        %v1959 = vpop.f32.mrb[0].mxu0
        %v1960 = vadd.f32 0.0, %v1959
        %v1961 = vpop.f32.mrb[0].mxu0
        %1962 = vmatprep.mubr.f32.mxu0 %v1845
        %1963 = vmatmul.mubr.f32.gmra.mrb[0].mxu0 %v1844
        %v1964 = vpop.f32.mrb[0].mxu0
        %v1965 = vadd.f32 0.0, %v1964
        %v1966 = vpop.f32.mrb[0].mxu0
        %1967 = vmatprep.mubr.f32.mxu0 %v1847
        %1968 = vmatmul.mubr.f32.gmra.mrb[0].mxu0 %v1846
        %v1969 = vpop.f32.mrb[0].mxu0
        %v1970 = vadd.f32 0.0, %v1969
        %v1971 = vpop.f32.mrb[0].mxu0
        %1972 = vmatprep.mubr.f32.mxu0 %v1849
        %1973 = vmatmul.mubr.f32.gmra.mrb[0].mxu0 %v1848
        %v1974 = vpop.f32.mrb[0].mxu0
        %v1975 = vadd.f32 0.0, %v1974
        %v1976 = vpop.f32.mrb[0].mxu0
        %1977 = vmatprep.mubr.f32.mxu0 %v1851
        %1978 = vmatmul.mubr.f32.gmra.mrb[0].mxu0 %v1850
        %v1979 = vpop.f32.mrb[0].mxu0
        %v1980 = vadd.f32 0.0, %v1979
        %v1981 = vpop.f32.mrb[0].mxu0
        %1982 = vmatprep.mubr.f32.mxu0 %v1853
        %1983 = vmatmul.mubr.f32.gmra.mrb[0].mxu0 %v1852
        %v1984 = vpop.f32.mrb[0].mxu0
        %v1985 = vadd.f32 0.0, %v1984
        %v1986 = vpop.f32.mrb[0].mxu0
        %1987 = vmatprep.mubr.f32.mxu0 %v1855
        %1988 = vmatmul.mubr.f32.gmra.mrb[0].mxu0 %v1854
        %v1989 = vpop.f32.mrb[0].mxu0
        %v1990 = vadd.f32 0.0, %v1989
        %v1991 = vpop.f32.mrb[0].mxu0
        %1992 = vdwg.mxu0
        %v1993 = vmul.f32 %v1955, 0.5
        %v1994 = vmul.f32 %v1960, 0.5
        %v1995 = vmul.f32 %v1965, 0.5
        %v1996 = vmul.f32 %v1970, 0.5
        %v1997 = vmul.f32 %v1975, 0.5
        %v1998 = vmul.f32 %v1980, 0.5
        %v1999 = vmul.f32 %v1985, 0.5
        %v2000 = vmul.f32 %v1990, 0.5
        %v2001 = vmax.f32 %v1993, -10.0
        %v2002 = vmax.f32 %v1994, -10.0
        %v2003 = vmax.f32 %v1995, -10.0
        %v2004 = vmax.f32 %v1996, -10.0
        %v2005 = vmax.f32 %v1997, -10.0
        %v2006 = vmax.f32 %v1998, -10.0
        %v2007 = vmax.f32 %v1999, -10.0
        %v2008 = vmax.f32 %v2000, -10.0
        %v2009 = vmin.f32 %v2001, 10.0
        %v2010 = vmin.f32 %v2002, 10.0
        %v2011 = vmin.f32 %v2003, 10.0
        %v2012 = vmin.f32 %v2004, 10.0
        %v2013 = vmin.f32 %v2005, 10.0
        %v2014 = vmin.f32 %v2006, 10.0
        %v2015 = vmin.f32 %v2007, 10.0
        %v2016 = vmin.f32 %v2008, 10.0
        %v2017 = vmul.f32 %v2009, 1.442695
        %v2018 = vpow.pop %v2017
        %v2019 = vmul.f32 %v2010, 1.442695
        %v2020 = vpow.pop %v2019
        %v2021 = vmul.f32 %v2011, 1.442695
        %v2022 = vpow.pop %v2021
        %v2023 = vmul.f32 %v2012, 1.442695
        %v2024 = vpow.pop %v2023
        %v2025 = vmul.f32 %v2013, 1.442695
        %v2026 = vpow.pop %v2025
        %v2027 = vmul.f32 %v2014, 1.442695
        %v2028 = vpow.pop %v2027
        %v2029 = vmul.f32 %v2015, 1.442695
        %v2030 = vpow.pop %v2029
        %v2031 = vmul.f32 %v2016, 1.442695
        %v2032 = vpow.pop %v2031
        %v2033 = vmul.f32 %v2018, %v839
        %v2034 = vmul.f32 %v2020, %v840
        %v2035 = vmul.f32 %v2022, %v841
        %v2036 = vmul.f32 %v2024, %v842
        %v2037 = vmul.f32 %v2026, %v843
        %v2038 = vmul.f32 %v2028, %v844
        %v2039 = vmul.f32 %v2030, %v845
        %v2040 = vmul.f32 %v2032, %v846
        %v2041 = vld [vmem:[%s7] sm:$0xff]
        %v2042 = vld [vmem:[%s7 + $0x8] sm:$0xff]
        %v2043 = vld [vmem:[%s7 + $0x10] sm:$0xff]
        %v2044 = vld [vmem:[%s7 + $0x18] sm:$0xff]
        %v2045 = vld [vmem:[%s7 + $0x20] sm:$0xff]
        %v2046 = vld [vmem:[%s7 + $0x28] sm:$0xff]
        %v2047 = vld [vmem:[%s7 + $0x30] sm:$0xff]
        %v2048 = vld [vmem:[%s7 + $0x38] sm:$0xff]
        %v2049 = vld [vmem:[%s7 + $0x40] sm:$0xff]
        %v2050 = vld [vmem:[%s7 + $0x48] sm:$0xff]
        %v2051 = vld [vmem:[%s7 + $0x50] sm:$0xff]
        %v2052 = vld [vmem:[%s7 + $0x58] sm:$0xff]
        %v2053 = vld [vmem:[%s7 + $0x60] sm:$0xff]
        %v2054 = vld [vmem:[%s7 + $0x68] sm:$0xff]
        %v2055 = vld [vmem:[%s7 + $0x70] sm:$0xff]
        %v2056 = vld [vmem:[%s7 + $0x78] sm:$0xff]
        %vm2057 = vcmask 523264
        %v2059 = vsel %vm2057, %v2033, 0
        %v2062 = vsel %vm2057, %v2034, 0
        %v2065 = vsel %vm2057, %v2035, 0
        %v2068 = vsel %vm2057, %v2036, 0
        %v2071 = vsel %vm2057, %v2037, 0
        %v2074 = vsel %vm2057, %v2038, 0
        %v2077 = vsel %vm2057, %v2039, 0
        %v2080 = vsel %vm2057, %v2040, 0
        %2082 = vmatprep.subr.mxu0 %v2042
        %2083 = vmatpush1.msra.mxu0 %v2041
        %2084 = vmatprep.subr.mxu0 %v2044
        %2085 = vmatpush1.msra.mxu0 %v2043
        %2086 = vmatprep.subr.mxu0 %v2046
        %2087 = vmatpush1.msra.mxu0 %v2045
        %2088 = vmatprep.subr.mxu0 %v2048
        %2089 = vmatpush1.msra.mxu0 %v2047
        %2090 = vmatprep.subr.mxu0 %v2050
        %2091 = vmatpush1.msra.mxu0 %v2049
        %2092 = vmatprep.subr.mxu0 %v2052
        %2093 = vmatpush1.msra.mxu0 %v2051
        %2094 = vmatprep.subr.mxu0 %v2054
        %2095 = vmatpush1.msra.mxu0 %v2053
        %2096 = vmatprep.subr.mxu0 %v2056
        %2097 = vmatpush1.msra.mxu0 %v2055
        %2098 = vmatprep.subr.mxu0 0.0
        %2099 = vmatpush1.msra.mxu0 0.0
        %2100 = vmatprep.subr.mxu0 0.0
        %2101 = vmatpush1.msra.mxu0 0.0
        %2102 = vmatprep.subr.mxu0 0.0
        %2103 = vmatpush1.msra.mxu0 0.0
        %2104 = vmatprep.subr.mxu0 0.0
        %2105 = vmatpush1.msra.mxu0 0.0
        %2106 = vmatprep.subr.mxu0 0.0
        %2107 = vmatpush1.msra.mxu0 0.0
        %2108 = vmatprep.subr.mxu0 0.0
        %2109 = vmatpush1.msra.mxu0 0.0
        %2110 = vmatprep.subr.mxu0 0.0
        %2111 = vmatpush1.msra.mxu0 0.0
        %2112 = vmatprep.subr.mxu0 0.0
        %2113 = vmatpush1.msra.mxu0 0.0
        %2114 = vmatprep.subr.mxu0 0.0
        %2115 = vmatpush1.msra.mxu0 0.0
        %2116 = vmatprep.subr.mxu0 0.0
        %2117 = vmatpush1.msra.mxu0 0.0
        %2118 = vmatprep.subr.mxu0 0.0
        %2119 = vmatpush1.msra.mxu0 0.0
        %2120 = vmatprep.subr.mxu0 0.0
        %2121 = vmatpush1.msra.mxu0 0.0
        %2122 = vmatprep.subr.mxu0 0.0
        %2123 = vmatpush1.msra.mxu0 0.0
        %2124 = vmatprep.subr.mxu0 0.0
        %2125 = vmatpush1.msra.mxu0 0.0
        %2126 = vmatprep.subr.mxu0 0.0
        %2127 = vmatpush1.msra.mxu0 0.0
        %2128 = vmatprep.subr.mxu0 0.0
        %2129 = vmatpush1.msra.mxu0 0.0
        %2130 = vmatprep.subr.mxu0 0.0
        %2131 = vmatpush1.msra.mxu0 0.0
        %2132 = vmatprep.subr.mxu0 0.0
        %2133 = vmatpush1.msra.mxu0 0.0
        %2134 = vmatprep.subr.mxu0 0.0
        %2135 = vmatpush1.msra.mxu0 0.0
        %2136 = vmatprep.subr.mxu0 0.0
        %2137 = vmatpush1.msra.mxu0 0.0
        %2138 = vmatprep.subr.mxu0 0.0
        %2139 = vmatpush1.msra.mxu0 0.0
        %2140 = vmatprep.subr.mxu0 0.0
        %2141 = vmatpush1.msra.mxu0 0.0
        %2142 = vmatprep.subr.mxu0 0.0
        %2143 = vmatpush1.msra.mxu0 0.0
        %2144 = vmatprep.subr.mxu0 0.0
        %2145 = vmatpush1.msra.mxu0 0.0
        %2146 = vmatprep.mubr.f32.mxu0 0.0
        %2147 = vmatmul.mubr.f32.gmra.mrb[0].mxu0 %v2059
        %v2148 = vpop.f32.mrb[0].mxu0
        %v2149 = vadd.f32 0.0, %v2148
        %v2150 = vpop.f32.mrb[0].mxu0
        %v2151 = vadd.f32 0.0, %v2150
        %2152 = vmatprep.mubr.f32.mxu0 0.0
        %2153 = vmatmul.mubr.f32.gmra.mrb[0].mxu0 %v2062
        %v2154 = vpop.f32.mrb[0].mxu0
        %v2155 = vadd.f32 0.0, %v2154
        %v2156 = vpop.f32.mrb[0].mxu0
        %v2157 = vadd.f32 0.0, %v2156
        %2158 = vmatprep.mubr.f32.mxu0 0.0
        %2159 = vmatmul.mubr.f32.gmra.mrb[0].mxu0 %v2065
        %v2160 = vpop.f32.mrb[0].mxu0
        %v2161 = vadd.f32 0.0, %v2160
        %v2162 = vpop.f32.mrb[0].mxu0
        %v2163 = vadd.f32 0.0, %v2162
        %2164 = vmatprep.mubr.f32.mxu0 0.0
        %2165 = vmatmul.mubr.f32.gmra.mrb[0].mxu0 %v2068
        %v2166 = vpop.f32.mrb[0].mxu0
        %v2167 = vadd.f32 0.0, %v2166
        %v2168 = vpop.f32.mrb[0].mxu0
        %v2169 = vadd.f32 0.0, %v2168
        %2170 = vmatprep.mubr.f32.mxu0 0.0
        %2171 = vmatmul.mubr.f32.gmra.mrb[0].mxu0 %v2071
        %v2172 = vpop.f32.mrb[0].mxu0
        %v2173 = vadd.f32 0.0, %v2172
        %v2174 = vpop.f32.mrb[0].mxu0
        %v2175 = vadd.f32 0.0, %v2174
        %2176 = vmatprep.mubr.f32.mxu0 0.0
        %2177 = vmatmul.mubr.f32.gmra.mrb[0].mxu0 %v2074
        %v2178 = vpop.f32.mrb[0].mxu0
        %v2179 = vadd.f32 0.0, %v2178
        %v2180 = vpop.f32.mrb[0].mxu0
        %v2181 = vadd.f32 0.0, %v2180
        %2182 = vmatprep.mubr.f32.mxu0 0.0
        %2183 = vmatmul.mubr.f32.gmra.mrb[0].mxu0 %v2077
        %v2184 = vpop.f32.mrb[0].mxu0
        %v2185 = vadd.f32 0.0, %v2184
        %v2186 = vpop.f32.mrb[0].mxu0
        %v2187 = vadd.f32 0.0, %v2186
        %2188 = vmatprep.mubr.f32.mxu0 0.0
        %2189 = vmatmul.mubr.f32.gmra.mrb[0].mxu0 %v2080
        %v2190 = vpop.f32.mrb[0].mxu0
        %v2191 = vadd.f32 0.0, %v2190
        %v2192 = vpop.f32.mrb[0].mxu0
        %v2193 = vadd.f32 0.0, %v2192
        %2194 = vdwg.mxu0
        %v2195 = vld [vmem:[%s8] sm:$0xff]
        %v2196 = vld [vmem:[%s8 + $0x8] sm:$0xff]
        %v2197 = vld [vmem:[%s8 + $0x10] sm:$0xff]
        %v2198 = vld [vmem:[%s8 + $0x18] sm:$0xff]
        %v2199 = vld [vmem:[%s8 + $0x20] sm:$0xff]
        %v2200 = vld [vmem:[%s8 + $0x28] sm:$0xff]
        %v2201 = vld [vmem:[%s8 + $0x30] sm:$0xff]
        %v2202 = vld [vmem:[%s8 + $0x38] sm:$0xff]
        %v2203 = vld [vmem:[%s8 + $0x40] sm:$0xff]
        %v2204 = vld [vmem:[%s8 + $0x48] sm:$0xff]
        %v2205 = vld [vmem:[%s8 + $0x50] sm:$0xff]
        %v2206 = vld [vmem:[%s8 + $0x58] sm:$0xff]
        %v2207 = vld [vmem:[%s8 + $0x60] sm:$0xff]
        %v2208 = vld [vmem:[%s8 + $0x68] sm:$0xff]
        %v2209 = vld [vmem:[%s8 + $0x70] sm:$0xff]
        %v2210 = vld [vmem:[%s8 + $0x78] sm:$0xff]
        %v2211 = vld [vmem:[%s8 + $0x80] sm:$0xff]
        %v2212 = vld [vmem:[%s8 + $0x88] sm:$0xff]
        %v2213 = vld [vmem:[%s8 + $0x90] sm:$0xff]
        %v2214 = vld [vmem:[%s8 + $0x98] sm:$0xff]
        %v2215 = vld [vmem:[%s8 + $0xa0] sm:$0xff]
        %v2216 = vld [vmem:[%s8 + $0xa8] sm:$0xff]
        %v2217 = vld [vmem:[%s8 + $0xb0] sm:$0xff]
        %v2218 = vld [vmem:[%s8 + $0xb8] sm:$0xff]
        %v2219 = vld [vmem:[%s8 + $0xc0] sm:$0xff]
        %v2220 = vld [vmem:[%s8 + $0xc8] sm:$0xff]
        %v2221 = vld [vmem:[%s8 + $0xd0] sm:$0xff]
        %v2222 = vld [vmem:[%s8 + $0xd8] sm:$0xff]
        %v2223 = vld [vmem:[%s8 + $0xe0] sm:$0xff]
        %v2224 = vld [vmem:[%s8 + $0xe8] sm:$0xff]
        %v2225 = vld [vmem:[%s8 + $0xf0] sm:$0xff]
        %v2226 = vld [vmem:[%s8 + $0xf8] sm:$0xff]
        %2227 = vmatprep.subr.mxu0 0.0
        %2228 = vmatpush1.msra.mxu0 %v2195
        %2229 = vmatprep.subr.mxu0 0.0
        %2230 = vmatpush1.msra.mxu0 %v2196
        %2231 = vmatprep.subr.mxu0 0.0
        %2232 = vmatpush1.msra.mxu0 %v2197
        %2233 = vmatprep.subr.mxu0 0.0
        %2234 = vmatpush1.msra.mxu0 %v2198
        %2235 = vmatprep.subr.mxu0 0.0
        %2236 = vmatpush1.msra.mxu0 %v2199
        %2237 = vmatprep.subr.mxu0 0.0
        %2238 = vmatpush1.msra.mxu0 %v2200
        %2239 = vmatprep.subr.mxu0 0.0
        %2240 = vmatpush1.msra.mxu0 %v2201
        %2241 = vmatprep.subr.mxu0 0.0
        %2242 = vmatpush1.msra.mxu0 %v2202
        %2243 = vmatprep.subr.mxu0 0.0
        %2244 = vmatpush1.msra.mxu0 %v2203
        %2245 = vmatprep.subr.mxu0 0.0
        %2246 = vmatpush1.msra.mxu0 %v2204
        %2247 = vmatprep.subr.mxu0 0.0
        %2248 = vmatpush1.msra.mxu0 %v2205
        %2249 = vmatprep.subr.mxu0 0.0
        %2250 = vmatpush1.msra.mxu0 %v2206
        %2251 = vmatprep.subr.mxu0 0.0
        %2252 = vmatpush1.msra.mxu0 %v2207
        %2253 = vmatprep.subr.mxu0 0.0
        %2254 = vmatpush1.msra.mxu0 %v2208
        %2255 = vmatprep.subr.mxu0 0.0
        %2256 = vmatpush1.msra.mxu0 %v2209
        %2257 = vmatprep.subr.mxu0 0.0
        %2258 = vmatpush1.msra.mxu0 %v2210
        %2259 = vmatprep.subr.mxu0 0.0
        %2260 = vmatpush1.msra.mxu0 %v2211
        %2261 = vmatprep.subr.mxu0 0.0
        %2262 = vmatpush1.msra.mxu0 %v2212
        %2263 = vmatprep.subr.mxu0 0.0
        %2264 = vmatpush1.msra.mxu0 %v2213
        %2265 = vmatprep.subr.mxu0 0.0
        %2266 = vmatpush1.msra.mxu0 %v2214
        %2267 = vmatprep.subr.mxu0 0.0
        %2268 = vmatpush1.msra.mxu0 %v2215
        %2269 = vmatprep.subr.mxu0 0.0
        %2270 = vmatpush1.msra.mxu0 %v2216
        %2271 = vmatprep.subr.mxu0 0.0
        %2272 = vmatpush1.msra.mxu0 %v2217
        %2273 = vmatprep.subr.mxu0 0.0
        %2274 = vmatpush1.msra.mxu0 %v2218
        %2275 = vmatprep.subr.mxu0 0.0
        %2276 = vmatpush1.msra.mxu0 %v2219
        %2277 = vmatprep.subr.mxu0 0.0
        %2278 = vmatpush1.msra.mxu0 %v2220
        %2279 = vmatprep.subr.mxu0 0.0
        %2280 = vmatpush1.msra.mxu0 %v2221
        %2281 = vmatprep.subr.mxu0 0.0
        %2282 = vmatpush1.msra.mxu0 %v2222
        %2283 = vmatprep.subr.mxu0 0.0
        %2284 = vmatpush1.msra.mxu0 %v2223
        %2285 = vmatprep.subr.mxu0 0.0
        %2286 = vmatpush1.msra.mxu0 %v2224
        %2287 = vmatprep.subr.mxu0 0.0
        %2288 = vmatpush1.msra.mxu0 %v2225
        %2289 = vmatprep.subr.mxu0 0.0
        %2290 = vmatpush1.msra.mxu0 %v2226
        %2291 = vmatprep.mubr.f32.mxu0 %v2151
        %2292 = vmatmul.mubr.f32.gmra.mrb[0].mxu0 %v2149
        %v2293 = vpop.f32.mrb[0].mxu0
        %v2294 = vadd.f32 0.0, %v2293
        %v2295 = vpop.f32.mrb[0].mxu0
        %2296 = vmatprep.mubr.f32.mxu0 %v2157
        %2297 = vmatmul.mubr.f32.gmra.mrb[0].mxu0 %v2155
        %v2298 = vpop.f32.mrb[0].mxu0
        %v2299 = vadd.f32 0.0, %v2298
        %v2300 = vpop.f32.mrb[0].mxu0
        %2301 = vmatprep.mubr.f32.mxu0 %v2163
        %2302 = vmatmul.mubr.f32.gmra.mrb[0].mxu0 %v2161
        %v2303 = vpop.f32.mrb[0].mxu0
        %v2304 = vadd.f32 0.0, %v2303
        %v2305 = vpop.f32.mrb[0].mxu0
        %2306 = vmatprep.mubr.f32.mxu0 %v2169
        %2307 = vmatmul.mubr.f32.gmra.mrb[0].mxu0 %v2167
        %v2308 = vpop.f32.mrb[0].mxu0
        %v2309 = vadd.f32 0.0, %v2308
        %v2310 = vpop.f32.mrb[0].mxu0
        %2311 = vmatprep.mubr.f32.mxu0 %v2175
        %2312 = vmatmul.mubr.f32.gmra.mrb[0].mxu0 %v2173
        %v2313 = vpop.f32.mrb[0].mxu0
        %v2314 = vadd.f32 0.0, %v2313
        %v2315 = vpop.f32.mrb[0].mxu0
        %2316 = vmatprep.mubr.f32.mxu0 %v2181
        %2317 = vmatmul.mubr.f32.gmra.mrb[0].mxu0 %v2179
        %v2318 = vpop.f32.mrb[0].mxu0
        %v2319 = vadd.f32 0.0, %v2318
        %v2320 = vpop.f32.mrb[0].mxu0
        %2321 = vmatprep.mubr.f32.mxu0 %v2187
        %2322 = vmatmul.mubr.f32.gmra.mrb[0].mxu0 %v2185
        %v2323 = vpop.f32.mrb[0].mxu0
        %v2324 = vadd.f32 0.0, %v2323
        %v2325 = vpop.f32.mrb[0].mxu0
        %2326 = vmatprep.mubr.f32.mxu0 %v2193
        %2327 = vmatmul.mubr.f32.gmra.mrb[0].mxu0 %v2191
        %v2328 = vpop.f32.mrb[0].mxu0
        %v2329 = vadd.f32 0.0, %v2328
        %v2330 = vpop.f32.mrb[0].mxu0
        %2331 = vdwg.mxu0
        %v2332 = vadd.f32 %v823, %v1633
        %v2333 = vadd.f32 %v824, %v1635
        %v2334 = vadd.f32 %v825, %v1639
        %v2335 = vadd.f32 %v826, %v1641
        %v2336 = vadd.f32 %v827, %v1645
        %v2337 = vadd.f32 %v828, %v1647
        %v2338 = vadd.f32 %v829, %v1651
        %v2339 = vadd.f32 %v830, %v1653
        %v2340 = vadd.f32 %v831, %v1657
        %v2341 = vadd.f32 %v832, %v1659
        %v2342 = vadd.f32 %v833, %v1663
        %v2343 = vadd.f32 %v834, %v1665
        %v2344 = vadd.f32 %v835, %v1669
        %v2345 = vadd.f32 %v836, %v1671
        %v2346 = vadd.f32 %v837, %v1675
        %v2347 = vadd.f32 %v838, %v1677
        %v2348 = vmul.f32 %v2149, %v2332
        %v2349 = vmul.f32 %v2151, %v2333
        %v2350 = vmul.f32 %v2155, %v2334
        %v2351 = vmul.f32 %v2157, %v2335
        %v2352 = vmul.f32 %v2161, %v2336
        %v2353 = vmul.f32 %v2163, %v2337
        %v2354 = vmul.f32 %v2167, %v2338
        %v2355 = vmul.f32 %v2169, %v2339
        %v2356 = vmul.f32 %v2173, %v2340
        %v2357 = vmul.f32 %v2175, %v2341
        %v2358 = vmul.f32 %v2179, %v2342
        %v2359 = vmul.f32 %v2181, %v2343
        %v2360 = vmul.f32 %v2185, %v2344
        %v2361 = vmul.f32 %v2187, %v2345
        %v2362 = vmul.f32 %v2191, %v2346
        %v2363 = vmul.f32 %v2193, %v2347
        %2364 = vmatprep.subr.mxu0 0.0
        %2365 = vmatpush1.msra.mxu0 %v2195
        %2366 = vmatprep.subr.mxu0 0.0
        %2367 = vmatpush1.msra.mxu0 %v2196
        %2368 = vmatprep.subr.mxu0 0.0
        %2369 = vmatpush1.msra.mxu0 %v2197
        %2370 = vmatprep.subr.mxu0 0.0
        %2371 = vmatpush1.msra.mxu0 %v2198
        %2372 = vmatprep.subr.mxu0 0.0
        %2373 = vmatpush1.msra.mxu0 %v2199
        %2374 = vmatprep.subr.mxu0 0.0
        %2375 = vmatpush1.msra.mxu0 %v2200
        %2376 = vmatprep.subr.mxu0 0.0
        %2377 = vmatpush1.msra.mxu0 %v2201
        %2378 = vmatprep.subr.mxu0 0.0
        %2379 = vmatpush1.msra.mxu0 %v2202
        %2380 = vmatprep.subr.mxu0 0.0
        %2381 = vmatpush1.msra.mxu0 %v2203
        %2382 = vmatprep.subr.mxu0 0.0
        %2383 = vmatpush1.msra.mxu0 %v2204
        %2384 = vmatprep.subr.mxu0 0.0
        %2385 = vmatpush1.msra.mxu0 %v2205
        %2386 = vmatprep.subr.mxu0 0.0
        %2387 = vmatpush1.msra.mxu0 %v2206
        %2388 = vmatprep.subr.mxu0 0.0
        %2389 = vmatpush1.msra.mxu0 %v2207
        %2390 = vmatprep.subr.mxu0 0.0
        %2391 = vmatpush1.msra.mxu0 %v2208
        %2392 = vmatprep.subr.mxu0 0.0
        %2393 = vmatpush1.msra.mxu0 %v2209
        %2394 = vmatprep.subr.mxu0 0.0
        %2395 = vmatpush1.msra.mxu0 %v2210
        %2396 = vmatprep.subr.mxu0 0.0
        %2397 = vmatpush1.msra.mxu0 %v2211
        %2398 = vmatprep.subr.mxu0 0.0
        %2399 = vmatpush1.msra.mxu0 %v2212
        %2400 = vmatprep.subr.mxu0 0.0
        %2401 = vmatpush1.msra.mxu0 %v2213
        %2402 = vmatprep.subr.mxu0 0.0
        %2403 = vmatpush1.msra.mxu0 %v2214
        %2404 = vmatprep.subr.mxu0 0.0
        %2405 = vmatpush1.msra.mxu0 %v2215
        %2406 = vmatprep.subr.mxu0 0.0
        %2407 = vmatpush1.msra.mxu0 %v2216
        %2408 = vmatprep.subr.mxu0 0.0
        %2409 = vmatpush1.msra.mxu0 %v2217
        %2410 = vmatprep.subr.mxu0 0.0
        %2411 = vmatpush1.msra.mxu0 %v2218
        %2412 = vmatprep.subr.mxu0 0.0
        %2413 = vmatpush1.msra.mxu0 %v2219
        %2414 = vmatprep.subr.mxu0 0.0
        %2415 = vmatpush1.msra.mxu0 %v2220
        %2416 = vmatprep.subr.mxu0 0.0
        %2417 = vmatpush1.msra.mxu0 %v2221
        %2418 = vmatprep.subr.mxu0 0.0
        %2419 = vmatpush1.msra.mxu0 %v2222
        %2420 = vmatprep.subr.mxu0 0.0
        %2421 = vmatpush1.msra.mxu0 %v2223
        %2422 = vmatprep.subr.mxu0 0.0
        %2423 = vmatpush1.msra.mxu0 %v2224
        %2424 = vmatprep.subr.mxu0 0.0
        %2425 = vmatpush1.msra.mxu0 %v2225
        %2426 = vmatprep.subr.mxu0 0.0
        %2427 = vmatpush1.msra.mxu0 %v2226
        %2428 = vmatprep.mubr.f32.mxu0 %v2349
        %2429 = vmatmul.mubr.f32.gmra.mrb[0].mxu0 %v2348
        %v2430 = vpop.f32.mrb[0].mxu0
        %v2431 = vadd.f32 0.0, %v2430
        %v2432 = vpop.f32.mrb[0].mxu0
        %2433 = vmatprep.mubr.f32.mxu0 %v2351
        %2434 = vmatmul.mubr.f32.gmra.mrb[0].mxu0 %v2350
        %v2435 = vpop.f32.mrb[0].mxu0
        %v2436 = vadd.f32 0.0, %v2435
        %v2437 = vpop.f32.mrb[0].mxu0
        %2438 = vmatprep.mubr.f32.mxu0 %v2353
        %2439 = vmatmul.mubr.f32.gmra.mrb[0].mxu0 %v2352
        %v2440 = vpop.f32.mrb[0].mxu0
        %v2441 = vadd.f32 0.0, %v2440
        %v2442 = vpop.f32.mrb[0].mxu0
        %2443 = vmatprep.mubr.f32.mxu0 %v2355
        %2444 = vmatmul.mubr.f32.gmra.mrb[0].mxu0 %v2354
        %v2445 = vpop.f32.mrb[0].mxu0
        %v2446 = vadd.f32 0.0, %v2445
        %v2447 = vpop.f32.mrb[0].mxu0
        %2448 = vmatprep.mubr.f32.mxu0 %v2357
        %2449 = vmatmul.mubr.f32.gmra.mrb[0].mxu0 %v2356
        %v2450 = vpop.f32.mrb[0].mxu0
        %v2451 = vadd.f32 0.0, %v2450
        %v2452 = vpop.f32.mrb[0].mxu0
        %2453 = vmatprep.mubr.f32.mxu0 %v2359
        %2454 = vmatmul.mubr.f32.gmra.mrb[0].mxu0 %v2358
        %v2455 = vpop.f32.mrb[0].mxu0
        %v2456 = vadd.f32 0.0, %v2455
        %v2457 = vpop.f32.mrb[0].mxu0
        %2458 = vmatprep.mubr.f32.mxu0 %v2361
        %2459 = vmatmul.mubr.f32.gmra.mrb[0].mxu0 %v2360
        %v2460 = vpop.f32.mrb[0].mxu0
        %v2461 = vadd.f32 0.0, %v2460
        %v2462 = vpop.f32.mrb[0].mxu0
        %2463 = vmatprep.mubr.f32.mxu0 %v2363
        %2464 = vmatmul.mubr.f32.gmra.mrb[0].mxu0 %v2362
        %v2465 = vpop.f32.mrb[0].mxu0
        %v2466 = vadd.f32 0.0, %v2465
        %v2467 = vpop.f32.mrb[0].mxu0
        %2468 = vdwg.mxu0
        %vm2469 = vcmp.eq.f32.partialorder %v2294, 0.0
        %vm2470 = vcmp.eq.f32.partialorder %v2299, 0.0
        %vm2471 = vcmp.eq.f32.partialorder %v2304, 0.0
        %vm2472 = vcmp.eq.f32.partialorder %v2309, 0.0
        %vm2473 = vcmp.eq.f32.partialorder %v2314, 0.0
        %vm2474 = vcmp.eq.f32.partialorder %v2319, 0.0
        %vm2475 = vcmp.eq.f32.partialorder %v2324, 0.0
        %vm2476 = vcmp.eq.f32.partialorder %v2329, 0.0
        %v2477 = vsel %vm2469, 1.0, %v2294
        %v2478 = vsel %vm2470, 1.0, %v2299
        %v2479 = vsel %vm2471, 1.0, %v2304
        %v2480 = vsel %vm2472, 1.0, %v2309
        %v2481 = vsel %vm2473, 1.0, %v2314
        %v2482 = vsel %vm2474, 1.0, %v2319
        %v2483 = vsel %vm2475, 1.0, %v2324
        %v2484 = vsel %vm2476, 1.0, %v2329
        %v2485 = vrcp.pop %v2477
        %v2486 = vrcp.pop %v2478
        %v2487 = vrcp.pop %v2479
        %v2488 = vrcp.pop %v2480
        %v2489 = vrcp.pop %v2481
        %v2490 = vrcp.pop %v2482
        %v2491 = vrcp.pop %v2483
        %v2492 = vrcp.pop %v2484
        %v2493 = vmul.f32 %v2431, %v2485
        %v2494 = vmul.f32 %v2436, %v2486
        %v2495 = vmul.f32 %v2441, %v2487
        %v2496 = vmul.f32 %v2446, %v2488
        %v2497 = vmul.f32 %v2451, %v2489
        %v2498 = vmul.f32 %v2456, %v2490
        %v2499 = vmul.f32 %v2461, %v2491
        %v2500 = vmul.f32 %v2466, %v2492
        %v2501 = vpack.c.bf16 %v2494, %v2493
        %v2502 = vpack.c.bf16 %v2496, %v2495
        %v2503 = vpack.c.bf16 %v2498, %v2497
        %v2504 = vpack.c.bf16 %v2500, %v2499
        %v2505 = vld [vmem:[%s13] sm:$0xf]
        %v2506 = vld [vmem:[%s13 + $0x4] sm:$0xf]
        %v2507 = vld [vmem:[%s13 + $0x8] sm:$0xf]
        %v2508 = vld [vmem:[%s13 + $0xc] sm:$0xf]
        %v2509 = vld [vmem:[%s14] sm:$0x1]
        %v2511 = vlaneseq
        %v2512 = vshrl.u32 %v2511, 7
        %v2513 = vsub.s32 0, %v2512
        %v2514 = vrot.slane %v2509, %v2513
        %v2520 = vunpack.c.l.b16 %v2505
        %v2521 = vunpack.c.l.b16 %v2506
        %v2522 = vunpack.c.l.b16 %v2507
        %v2523 = vunpack.c.l.b16 %v2508
        %v2524 = vpack.c.b16 %v2521, %v2520
        %v2525 = vpack.c.b16 %v2523, %v2522
        %v2529 = vsel %vm874, %v2501, 0
        %v2532 = vsel %vm874, %v2502, 0
        %v2535 = vsel %vm874, %v2503, 0
        %v2538 = vsel %vm874, %v2504, 0
        %2540 = vmatprep.subr.bf16.mxu0 0
        %2541 = vmatpush1.bf16.msra.mxu0 %v2524
        %2542 = vmatprep.subr.bf16.mxu0 0
        %2543 = vmatpush1.bf16.msra.mxu0 %v2525
        %2544 = vmatprep.subr.bf16.mxu0 0
        %2545 = vmatpush1.bf16.msra.mxu0 0
        %2546 = vmatprep.subr.bf16.mxu0 0
        %2547 = vmatpush1.bf16.msra.mxu0 0
        %2548 = vmatprep.subr.bf16.mxu0 0
        %2549 = vmatpush1.bf16.msra.mxu0 0
        %2550 = vmatprep.subr.bf16.mxu0 0
        %2551 = vmatpush1.bf16.msra.mxu0 0
        %2552 = vmatprep.subr.bf16.mxu0 0
        %2553 = vmatpush1.bf16.msra.mxu0 0
        %2554 = vmatprep.subr.bf16.mxu0 0
        %2555 = vmatpush1.bf16.msra.mxu0 0
        %2556 = vmatprep.subr.bf16.mxu0 0
        %2557 = vmatpush1.bf16.msra.mxu0 0
        %2558 = vmatprep.subr.bf16.mxu0 0
        %2559 = vmatpush1.bf16.msra.mxu0 0
        %2560 = vmatprep.subr.bf16.mxu0 0
        %2561 = vmatpush1.bf16.msra.mxu0 0
        %2562 = vmatprep.subr.bf16.mxu0 0
        %2563 = vmatpush1.bf16.msra.mxu0 0
        %2564 = vmatprep.subr.bf16.mxu0 0
        %2565 = vmatpush1.bf16.msra.mxu0 0
        %2566 = vmatprep.subr.bf16.mxu0 0
        %2567 = vmatpush1.bf16.msra.mxu0 0
        %2568 = vmatprep.subr.bf16.mxu0 0
        %2569 = vmatpush1.bf16.msra.mxu0 0
        %2570 = vmatprep.subr.bf16.mxu0 0
        %2571 = vmatpush1.bf16.msra.mxu0 0
        %2572 = vmatprep.mubr.bf16.mxu0 0
        %2573 = vmatmul.mubr.bf16.gmra.mrb[0].mxu0 %v2529
        %v2574 = vpop.f32.mrb[0].mxu0
        %v2575 = vadd.f32 %v2514, %v2574
        %v2576 = vpop.f32.mrb[0].mxu0
        %v2577 = vpop.f32.mrb[0].mxu0
        %v2578 = vadd.f32 %v2514, %v2577
        %v2579 = vpop.f32.mrb[0].mxu0
        %2580 = vmatprep.mubr.bf16.mxu0 0
        %2581 = vmatmul.mubr.bf16.gmra.mrb[0].mxu0 %v2532
        %v2582 = vpop.f32.mrb[0].mxu0
        %v2583 = vadd.f32 %v2514, %v2582
        %v2584 = vpop.f32.mrb[0].mxu0
        %v2585 = vpop.f32.mrb[0].mxu0
        %v2586 = vadd.f32 %v2514, %v2585
        %v2587 = vpop.f32.mrb[0].mxu0
        %2588 = vmatprep.mubr.bf16.mxu0 0
        %2589 = vmatmul.mubr.bf16.gmra.mrb[0].mxu0 %v2535
        %v2590 = vpop.f32.mrb[0].mxu0
        %v2591 = vadd.f32 %v2514, %v2590
        %v2592 = vpop.f32.mrb[0].mxu0
        %v2593 = vpop.f32.mrb[0].mxu0
        %v2594 = vadd.f32 %v2514, %v2593
        %v2595 = vpop.f32.mrb[0].mxu0
        %2596 = vmatprep.mubr.bf16.mxu0 0
        %2597 = vmatmul.mubr.bf16.gmra.mrb[0].mxu0 %v2538
        %v2598 = vpop.f32.mrb[0].mxu0
        %v2599 = vadd.f32 %v2514, %v2598
        %v2600 = vpop.f32.mrb[0].mxu0
        %v2601 = vpop.f32.mrb[0].mxu0
        %v2602 = vadd.f32 %v2514, %v2601
        %v2603 = vpop.f32.mrb[0].mxu0
        %2604 = vdwg.mxu0
        %v2605 = vadd.f32 %v813, %v2575
        %v2606 = vadd.f32 %v814, %v2578
        %v2607 = vadd.f32 %v815, %v2583
        %v2608 = vadd.f32 %v816, %v2586
        %v2609 = vadd.f32 %v817, %v2591
        %v2610 = vadd.f32 %v818, %v2594
        %v2611 = vadd.f32 %v819, %v2599
        %v2612 = vadd.f32 %v820, %v2602
        %v2613 = vld [vmem:[%s15] sm:$0x1]
        %v2614 = vld [vmem:[%s16] sm:$0x1]
        %v2615 = vsel %vm874, %v2605, 0.0
        %2616 = vadd.xlane.f32.xlu0 %v2615
        %v2617 = vpop.xlane.xlu0 %2616
        %v2618 = vsel %vm874, %v2606, 0.0
        %2619 = vadd.xlane.f32.xlu0 %v2618
        %v2620 = vpop.xlane.xlu0 %2619
        %v2621 = vsel %vm874, %v2607, 0.0
        %2622 = vadd.xlane.f32.xlu0 %v2621
        %v2623 = vpop.xlane.xlu0 %2622
        %v2624 = vsel %vm874, %v2608, 0.0
        %2625 = vadd.xlane.f32.xlu0 %v2624
        %v2626 = vpop.xlane.xlu0 %2625
        %v2627 = vsel %vm874, %v2609, 0.0
        %2628 = vadd.xlane.f32.xlu0 %v2627
        %v2629 = vpop.xlane.xlu0 %2628
        %v2630 = vsel %vm874, %v2610, 0.0
        %2631 = vadd.xlane.f32.xlu0 %v2630
        %v2632 = vpop.xlane.xlu0 %2631
        %v2633 = vsel %vm874, %v2611, 0.0
        %2634 = vadd.xlane.f32.xlu0 %v2633
        %v2635 = vpop.xlane.xlu0 %2634
        %v2636 = vsel %vm874, %v2612, 0.0
        %2637 = vadd.xlane.f32.xlu0 %v2636
        %v2638 = vpop.xlane.xlu0 %2637
        %v2639 = vrcp.pop 32.0
        %v2640 = vmul.f32 %v2617, %v2639
        %v2641 = vmul.f32 %v2620, %v2639
        %v2642 = vmul.f32 %v2623, %v2639
        %v2643 = vmul.f32 %v2626, %v2639
        %v2644 = vmul.f32 %v2629, %v2639
        %v2645 = vmul.f32 %v2632, %v2639
        %v2646 = vmul.f32 %v2635, %v2639
        %v2647 = vmul.f32 %v2638, %v2639
        %v2648 = vsub.f32 %v2605, %v2640
        %v2649 = vsub.f32 %v2606, %v2641
        %v2650 = vsub.f32 %v2607, %v2642
        %v2651 = vsub.f32 %v2608, %v2643
        %v2652 = vsub.f32 %v2609, %v2644
        %v2653 = vsub.f32 %v2610, %v2645
        %v2654 = vsub.f32 %v2611, %v2646
        %v2655 = vsub.f32 %v2612, %v2647
        %v2656 = vmul.f32 %v2648, %v2648
        %v2657 = vmul.f32 %v2649, %v2649
        %v2658 = vmul.f32 %v2650, %v2650
        %v2659 = vmul.f32 %v2651, %v2651
        %v2660 = vmul.f32 %v2652, %v2652
        %v2661 = vmul.f32 %v2653, %v2653
        %v2662 = vmul.f32 %v2654, %v2654
        %v2663 = vmul.f32 %v2655, %v2655
        %v2664 = vsel %vm874, %v2656, 0.0
        %2665 = vadd.xlane.f32.xlu0 %v2664
        %v2666 = vpop.xlane.xlu0 %2665
        %v2667 = vsel %vm874, %v2657, 0.0
        %2668 = vadd.xlane.f32.xlu0 %v2667
        %v2669 = vpop.xlane.xlu0 %2668
        %v2670 = vsel %vm874, %v2658, 0.0
        %2671 = vadd.xlane.f32.xlu0 %v2670
        %v2672 = vpop.xlane.xlu0 %2671
        %v2673 = vsel %vm874, %v2659, 0.0
        %2674 = vadd.xlane.f32.xlu0 %v2673
        %v2675 = vpop.xlane.xlu0 %2674
        %v2676 = vsel %vm874, %v2660, 0.0
        %2677 = vadd.xlane.f32.xlu0 %v2676
        %v2678 = vpop.xlane.xlu0 %2677
        %v2679 = vsel %vm874, %v2661, 0.0
        %2680 = vadd.xlane.f32.xlu0 %v2679
        %v2681 = vpop.xlane.xlu0 %2680
        %v2682 = vsel %vm874, %v2662, 0.0
        %2683 = vadd.xlane.f32.xlu0 %v2682
        %v2684 = vpop.xlane.xlu0 %2683
        %v2685 = vsel %vm874, %v2663, 0.0
        %2686 = vadd.xlane.f32.xlu0 %v2685
        %v2687 = vpop.xlane.xlu0 %2686
        %v2688 = vmul.f32 %v2666, %v2639
        %v2689 = vmul.f32 %v2669, %v2639
        %v2690 = vmul.f32 %v2672, %v2639
        %v2691 = vmul.f32 %v2675, %v2639
        %v2692 = vmul.f32 %v2678, %v2639
        %v2693 = vmul.f32 %v2681, %v2639
        %v2694 = vmul.f32 %v2684, %v2639
        %v2695 = vmul.f32 %v2687, %v2639
        %v2696 = vadd.f32 %v2688, 1e-05
        %v2697 = vadd.f32 %v2689, 1e-05
        %v2698 = vadd.f32 %v2690, 1e-05
        %v2699 = vadd.f32 %v2691, 1e-05
        %v2700 = vadd.f32 %v2692, 1e-05
        %v2701 = vadd.f32 %v2693, 1e-05
        %v2702 = vadd.f32 %v2694, 1e-05
        %v2703 = vadd.f32 %v2695, 1e-05
        %v2704 = vrsqrt.pop %v2696
        %v2705 = vrsqrt.pop %v2697
        %v2706 = vrsqrt.pop %v2698
        %v2707 = vrsqrt.pop %v2699
        %v2708 = vrsqrt.pop %v2700
        %v2709 = vrsqrt.pop %v2701
        %v2710 = vrsqrt.pop %v2702
        %v2711 = vrsqrt.pop %v2703
        %v2712 = vmul.f32 %v2648, %v2704
        %v2713 = vmul.f32 %v2649, %v2705
        %v2714 = vmul.f32 %v2650, %v2706
        %v2715 = vmul.f32 %v2651, %v2707
        %v2716 = vmul.f32 %v2652, %v2708
        %v2717 = vmul.f32 %v2653, %v2709
        %v2718 = vmul.f32 %v2654, %v2710
        %v2719 = vmul.f32 %v2655, %v2711
        %v2721 = vlaneseq
        %v2722 = vshrl.u32 %v2721, 7
        %v2723 = vsub.s32 0, %v2722
        %v2724 = vrot.slane %v2613, %v2723
        %v2726 = vmul.f32 %v2712, %v2724
        %v2727 = vmul.f32 %v2713, %v2724
        %v2728 = vmul.f32 %v2714, %v2724
        %v2729 = vmul.f32 %v2715, %v2724
        %v2730 = vmul.f32 %v2716, %v2724
        %v2731 = vmul.f32 %v2717, %v2724
        %v2732 = vmul.f32 %v2718, %v2724
        %v2733 = vmul.f32 %v2719, %v2724
        %v2735 = vlaneseq
        %v2736 = vshrl.u32 %v2735, 7
        %v2737 = vsub.s32 0, %v2736
        %v2738 = vrot.slane %v2614, %v2737
        %v2740 = vadd.f32 %v2726, %v2738
        %v2741 = vadd.f32 %v2727, %v2738
        %v2742 = vadd.f32 %v2728, %v2738
        %v2743 = vadd.f32 %v2729, %v2738
        %v2744 = vadd.f32 %v2730, %v2738
        %v2745 = vadd.f32 %v2731, %v2738
        %v2746 = vadd.f32 %v2732, %v2738
        %v2747 = vadd.f32 %v2733, %v2738
        %v2748 = vpack.c.bf16 %v2741, %v2740
        %v2749 = vpack.c.bf16 %v2743, %v2742
        %v2750 = vpack.c.bf16 %v2745, %v2744
        %v2751 = vpack.c.bf16 %v2747, %v2746
        %v2752 = vld [vmem:[%s17] sm:$0xf]
        %v2753 = vld [vmem:[%s17 + $0x4] sm:$0xf]
        %v2754 = vld [vmem:[%s17 + $0x8] sm:$0xf]
        %v2755 = vld [vmem:[%s17 + $0xc] sm:$0xf]
        %v2756 = vld [vmem:[#allocation4] sm:$0x1]
        %v2758 = vlaneseq
        %v2759 = vshrl.u32 %v2758, 7
        %v2760 = vsub.s32 0, %v2759
        %v2761 = vrot.slane %v2756, %v2760
        %v2767 = vunpack.c.l.b16 %v2752
        %v2768 = vunpack.c.l.b16 %v2753
        %v2769 = vunpack.c.l.b16 %v2754
        %v2770 = vunpack.c.l.b16 %v2755
        %v2771 = vpack.c.b16 %v2768, %v2767
        %v2772 = vpack.c.b16 %v2770, %v2769
        %v2776 = vsel %vm874, %v2748, 0
        %v2779 = vsel %vm874, %v2749, 0
        %v2782 = vsel %vm874, %v2750, 0
        %v2785 = vsel %vm874, %v2751, 0
        %2787 = vmatprep.subr.bf16.mxu0 0
        %2788 = vmatpush1.bf16.msra.mxu0 %v2771
        %2789 = vmatprep.subr.bf16.mxu0 0
        %2790 = vmatpush1.bf16.msra.mxu0 %v2772
        %2791 = vmatprep.subr.bf16.mxu0 0
        %2792 = vmatpush1.bf16.msra.mxu0 0
        %2793 = vmatprep.subr.bf16.mxu0 0
        %2794 = vmatpush1.bf16.msra.mxu0 0
        %2795 = vmatprep.subr.bf16.mxu0 0
        %2796 = vmatpush1.bf16.msra.mxu0 0
        %2797 = vmatprep.subr.bf16.mxu0 0
        %2798 = vmatpush1.bf16.msra.mxu0 0
        %2799 = vmatprep.subr.bf16.mxu0 0
        %2800 = vmatpush1.bf16.msra.mxu0 0
        %2801 = vmatprep.subr.bf16.mxu0 0
        %2802 = vmatpush1.bf16.msra.mxu0 0
        %2803 = vmatprep.subr.bf16.mxu0 0
        %2804 = vmatpush1.bf16.msra.mxu0 0
        %2805 = vmatprep.subr.bf16.mxu0 0
        %2806 = vmatpush1.bf16.msra.mxu0 0
        %2807 = vmatprep.subr.bf16.mxu0 0
        %2808 = vmatpush1.bf16.msra.mxu0 0
        %2809 = vmatprep.subr.bf16.mxu0 0
        %2810 = vmatpush1.bf16.msra.mxu0 0
        %2811 = vmatprep.subr.bf16.mxu0 0
        %2812 = vmatpush1.bf16.msra.mxu0 0
        %2813 = vmatprep.subr.bf16.mxu0 0
        %2814 = vmatpush1.bf16.msra.mxu0 0
        %2815 = vmatprep.subr.bf16.mxu0 0
        %2816 = vmatpush1.bf16.msra.mxu0 0
        %2817 = vmatprep.subr.bf16.mxu0 0
        %2818 = vmatpush1.bf16.msra.mxu0 0
        %2819 = vmatprep.mubr.bf16.mxu0 0
        %2820 = vmatmul.mubr.bf16.gmra.mrb[0].mxu0 %v2776
        %v2821 = vpop.f32.mrb[0].mxu0
        %v2822 = vadd.f32 %v2761, %v2821
        %v2823 = vpop.f32.mrb[0].mxu0
        %v2824 = vpop.f32.mrb[0].mxu0
        %v2825 = vadd.f32 %v2761, %v2824
        %v2826 = vpop.f32.mrb[0].mxu0
        %2827 = vmatprep.mubr.bf16.mxu0 0
        %2828 = vmatmul.mubr.bf16.gmra.mrb[0].mxu0 %v2779
        %v2829 = vpop.f32.mrb[0].mxu0
        %v2830 = vadd.f32 %v2761, %v2829
        %v2831 = vpop.f32.mrb[0].mxu0
        %v2832 = vpop.f32.mrb[0].mxu0
        %v2833 = vadd.f32 %v2761, %v2832
        %v2834 = vpop.f32.mrb[0].mxu0
        %2835 = vmatprep.mubr.bf16.mxu0 0
        %2836 = vmatmul.mubr.bf16.gmra.mrb[0].mxu0 %v2782
        %v2837 = vpop.f32.mrb[0].mxu0
        %v2838 = vadd.f32 %v2761, %v2837
        %v2839 = vpop.f32.mrb[0].mxu0
        %v2840 = vpop.f32.mrb[0].mxu0
        %v2841 = vadd.f32 %v2761, %v2840
        %v2842 = vpop.f32.mrb[0].mxu0
        %2843 = vmatprep.mubr.bf16.mxu0 0
        %2844 = vmatmul.mubr.bf16.gmra.mrb[0].mxu0 %v2785
        %v2845 = vpop.f32.mrb[0].mxu0
        %v2846 = vadd.f32 %v2761, %v2845
        %v2847 = vpop.f32.mrb[0].mxu0
        %v2848 = vpop.f32.mrb[0].mxu0
        %v2849 = vadd.f32 %v2761, %v2848
        %v2850 = vpop.f32.mrb[0].mxu0
        %2851 = vdwg.mxu0
        %v2852 = vmax.f32 %v2822, 0.0
        %v2853 = vmax.f32 %v2825, 0.0
        %v2854 = vmax.f32 %v2830, 0.0
        %v2855 = vmax.f32 %v2833, 0.0
        %v2856 = vmax.f32 %v2838, 0.0
        %v2857 = vmax.f32 %v2841, 0.0
        %v2858 = vmax.f32 %v2846, 0.0
        %v2859 = vmax.f32 %v2849, 0.0
        %v2860 = vpack.c.bf16 %v2853, %v2852
        %v2861 = vpack.c.bf16 %v2855, %v2854
        %v2862 = vpack.c.bf16 %v2857, %v2856
        %v2863 = vpack.c.bf16 %v2859, %v2858
        %v2864 = vld [vmem:[%s19] sm:$0xf]
        %v2865 = vld [vmem:[%s19 + $0x4] sm:$0xf]
        %v2866 = vld [vmem:[%s19 + $0x8] sm:$0xf]
        %v2867 = vld [vmem:[%s19 + $0xc] sm:$0xf]
        %v2868 = vld [vmem:[%s19 + $0x10] sm:$0xf]
        %v2869 = vld [vmem:[%s19 + $0x14] sm:$0xf]
        %v2870 = vld [vmem:[%s19 + $0x18] sm:$0xf]
        %v2871 = vld [vmem:[%s19 + $0x1c] sm:$0xf]
        %v2872 = vld [vmem:[%s19 + $0x20] sm:$0xf]
        %v2873 = vld [vmem:[%s19 + $0x24] sm:$0xf]
        %v2874 = vld [vmem:[%s19 + $0x28] sm:$0xf]
        %v2875 = vld [vmem:[%s19 + $0x2c] sm:$0xf]
        %v2876 = vld [vmem:[%s19 + $0x30] sm:$0xf]
        %v2877 = vld [vmem:[%s19 + $0x34] sm:$0xf]
        %v2878 = vld [vmem:[%s19 + $0x38] sm:$0xf]
        %v2879 = vld [vmem:[%s19 + $0x3c] sm:$0xf]
        %v2880 = vld [vmem:[%s20] sm:$0x1]
        %v2882 = vlaneseq
        %v2883 = vshrl.u32 %v2882, 7
        %v2884 = vsub.s32 0, %v2883
        %v2885 = vrot.slane %v2880, %v2884
        %v2903 = vunpack.c.l.b16 %v2864
        %v2904 = vunpack.c.l.b16 %v2865
        %v2905 = vunpack.c.l.b16 %v2866
        %v2906 = vunpack.c.l.b16 %v2867
        %v2907 = vunpack.c.l.b16 %v2868
        %v2908 = vunpack.c.l.b16 %v2869
        %v2909 = vunpack.c.l.b16 %v2870
        %v2910 = vunpack.c.l.b16 %v2871
        %v2911 = vunpack.c.l.b16 %v2872
        %v2912 = vunpack.c.l.b16 %v2873
        %v2913 = vunpack.c.l.b16 %v2874
        %v2914 = vunpack.c.l.b16 %v2875
        %v2915 = vunpack.c.l.b16 %v2876
        %v2916 = vunpack.c.l.b16 %v2877
        %v2917 = vunpack.c.l.b16 %v2878
        %v2918 = vunpack.c.l.b16 %v2879
        %v2919 = vpack.c.b16 %v2904, %v2903
        %v2920 = vpack.c.b16 %v2906, %v2905
        %v2921 = vpack.c.b16 %v2908, %v2907
        %v2922 = vpack.c.b16 %v2910, %v2909
        %v2923 = vpack.c.b16 %v2912, %v2911
        %v2924 = vpack.c.b16 %v2914, %v2913
        %v2925 = vpack.c.b16 %v2916, %v2915
        %v2926 = vpack.c.b16 %v2918, %v2917
        %2935 = vmatprep.subr.bf16.mxu0 0
        %2936 = vmatpush1.bf16.msra.mxu0 %v2919
        %2937 = vmatprep.subr.bf16.mxu0 0
        %2938 = vmatpush1.bf16.msra.mxu0 %v2920
        %2939 = vmatprep.subr.bf16.mxu0 0
        %2940 = vmatpush1.bf16.msra.mxu0 %v2921
        %2941 = vmatprep.subr.bf16.mxu0 0
        %2942 = vmatpush1.bf16.msra.mxu0 %v2922
        %2943 = vmatprep.subr.bf16.mxu0 0
        %2944 = vmatpush1.bf16.msra.mxu0 %v2923
        %2945 = vmatprep.subr.bf16.mxu0 0
        %2946 = vmatpush1.bf16.msra.mxu0 %v2924
        %2947 = vmatprep.subr.bf16.mxu0 0
        %2948 = vmatpush1.bf16.msra.mxu0 %v2925
        %2949 = vmatprep.subr.bf16.mxu0 0
        %2950 = vmatpush1.bf16.msra.mxu0 %v2926
        %2951 = vmatprep.subr.bf16.mxu0 0
        %2952 = vmatpush1.bf16.msra.mxu0 0
        %2953 = vmatprep.subr.bf16.mxu0 0
        %2954 = vmatpush1.bf16.msra.mxu0 0
        %2955 = vmatprep.subr.bf16.mxu0 0
        %2956 = vmatpush1.bf16.msra.mxu0 0
        %2957 = vmatprep.subr.bf16.mxu0 0
        %2958 = vmatpush1.bf16.msra.mxu0 0
        %2959 = vmatprep.subr.bf16.mxu0 0
        %2960 = vmatpush1.bf16.msra.mxu0 0
        %2961 = vmatprep.subr.bf16.mxu0 0
        %2962 = vmatpush1.bf16.msra.mxu0 0
        %2963 = vmatprep.subr.bf16.mxu0 0
        %2964 = vmatpush1.bf16.msra.mxu0 0
        %2965 = vmatprep.subr.bf16.mxu0 0
        %2966 = vmatpush1.bf16.msra.mxu0 0
        %2967 = vmatprep.mubr.bf16.mxu0 0
        %2968 = vmatmul.mubr.bf16.gmra.mrb[0].mxu0 %v2860
        %v2969 = vpop.f32.mrb[0].mxu0
        %v2970 = vadd.f32 %v2885, %v2969
        %v2971 = vpop.f32.mrb[0].mxu0
        %v2972 = vpop.f32.mrb[0].mxu0
        %v2973 = vadd.f32 %v2885, %v2972
        %v2974 = vpop.f32.mrb[0].mxu0
        %2975 = vmatprep.mubr.bf16.mxu0 0
        %2976 = vmatmul.mubr.bf16.gmra.mrb[0].mxu0 %v2861
        %v2977 = vpop.f32.mrb[0].mxu0
        %v2978 = vadd.f32 %v2885, %v2977
        %v2979 = vpop.f32.mrb[0].mxu0
        %v2980 = vpop.f32.mrb[0].mxu0
        %v2981 = vadd.f32 %v2885, %v2980
        %v2982 = vpop.f32.mrb[0].mxu0
        %2983 = vmatprep.mubr.bf16.mxu0 0
        %2984 = vmatmul.mubr.bf16.gmra.mrb[0].mxu0 %v2862
        %v2985 = vpop.f32.mrb[0].mxu0
        %v2986 = vadd.f32 %v2885, %v2985
        %v2987 = vpop.f32.mrb[0].mxu0
        %v2988 = vpop.f32.mrb[0].mxu0
        %v2989 = vadd.f32 %v2885, %v2988
        %v2990 = vpop.f32.mrb[0].mxu0
        %2991 = vmatprep.mubr.bf16.mxu0 0
        %2992 = vmatmul.mubr.bf16.gmra.mrb[0].mxu0 %v2863
        %v2993 = vpop.f32.mrb[0].mxu0
        %v2994 = vadd.f32 %v2885, %v2993
        %v2995 = vpop.f32.mrb[0].mxu0
        %v2996 = vpop.f32.mrb[0].mxu0
        %v2997 = vadd.f32 %v2885, %v2996
        %v2998 = vpop.f32.mrb[0].mxu0
        %2999 = vdwg.mxu0
        %v3000 = vadd.f32 %v2740, %v2970
        %v3001 = vadd.f32 %v2741, %v2973
        %v3002 = vadd.f32 %v2742, %v2978
        %v3003 = vadd.f32 %v2743, %v2981
        %v3004 = vadd.f32 %v2744, %v2986
        %v3005 = vadd.f32 %v2745, %v2989
        %v3006 = vadd.f32 %v2746, %v2994
        %v3007 = vadd.f32 %v2747, %v2997
        %v3008 = vld [vmem:[%s21] sm:$0x1]
        %v3009 = vld [vmem:[%s22] sm:$0x1]
        %v3010 = vsel %vm874, %v3000, 0.0
        %3011 = vadd.xlane.f32.xlu0 %v3010
        %v3012 = vpop.xlane.xlu0 %3011
        %v3013 = vsel %vm874, %v3001, 0.0
        %3014 = vadd.xlane.f32.xlu0 %v3013
        %v3015 = vpop.xlane.xlu0 %3014
        %v3016 = vsel %vm874, %v3002, 0.0
        %3017 = vadd.xlane.f32.xlu0 %v3016
        %v3018 = vpop.xlane.xlu0 %3017
        %v3019 = vsel %vm874, %v3003, 0.0
        %3020 = vadd.xlane.f32.xlu0 %v3019
        %v3021 = vpop.xlane.xlu0 %3020
        %v3022 = vsel %vm874, %v3004, 0.0
        %3023 = vadd.xlane.f32.xlu0 %v3022
        %v3024 = vpop.xlane.xlu0 %3023
        %v3025 = vsel %vm874, %v3005, 0.0
        %3026 = vadd.xlane.f32.xlu0 %v3025
        %v3027 = vpop.xlane.xlu0 %3026
        %v3028 = vsel %vm874, %v3006, 0.0
        %3029 = vadd.xlane.f32.xlu0 %v3028
        %v3030 = vpop.xlane.xlu0 %3029
        %v3031 = vsel %vm874, %v3007, 0.0
        %3032 = vadd.xlane.f32.xlu0 %v3031
        %v3033 = vpop.xlane.xlu0 %3032
        %v3034 = vmul.f32 %v3012, %v2639
        %v3035 = vmul.f32 %v3015, %v2639
        %v3036 = vmul.f32 %v3018, %v2639
        %v3037 = vmul.f32 %v3021, %v2639
        %v3038 = vmul.f32 %v3024, %v2639
        %v3039 = vmul.f32 %v3027, %v2639
        %v3040 = vmul.f32 %v3030, %v2639
        %v3041 = vmul.f32 %v3033, %v2639
        %v3042 = vsub.f32 %v3000, %v3034
        %v3043 = vsub.f32 %v3001, %v3035
        %v3044 = vsub.f32 %v3002, %v3036
        %v3045 = vsub.f32 %v3003, %v3037
        %v3046 = vsub.f32 %v3004, %v3038
        %v3047 = vsub.f32 %v3005, %v3039
        %v3048 = vsub.f32 %v3006, %v3040
        %v3049 = vsub.f32 %v3007, %v3041
        %v3050 = vmul.f32 %v3042, %v3042
        %v3051 = vmul.f32 %v3043, %v3043
        %v3052 = vmul.f32 %v3044, %v3044
        %v3053 = vmul.f32 %v3045, %v3045
        %v3054 = vmul.f32 %v3046, %v3046
        %v3055 = vmul.f32 %v3047, %v3047
        %v3056 = vmul.f32 %v3048, %v3048
        %v3057 = vmul.f32 %v3049, %v3049
        %v3058 = vsel %vm874, %v3050, 0.0
        %3059 = vadd.xlane.f32.xlu0 %v3058
        %v3060 = vpop.xlane.xlu0 %3059
        %v3061 = vsel %vm874, %v3051, 0.0
        %3062 = vadd.xlane.f32.xlu0 %v3061
        %v3063 = vpop.xlane.xlu0 %3062
        %v3064 = vsel %vm874, %v3052, 0.0
        %3065 = vadd.xlane.f32.xlu0 %v3064
        %v3066 = vpop.xlane.xlu0 %3065
        %v3067 = vsel %vm874, %v3053, 0.0
        %3068 = vadd.xlane.f32.xlu0 %v3067
        %v3069 = vpop.xlane.xlu0 %3068
        %v3070 = vsel %vm874, %v3054, 0.0
        %3071 = vadd.xlane.f32.xlu0 %v3070
        %v3072 = vpop.xlane.xlu0 %3071
        %v3073 = vsel %vm874, %v3055, 0.0
        %3074 = vadd.xlane.f32.xlu0 %v3073
        %v3075 = vpop.xlane.xlu0 %3074
        %v3076 = vsel %vm874, %v3056, 0.0
        %3077 = vadd.xlane.f32.xlu0 %v3076
        %v3078 = vpop.xlane.xlu0 %3077
        %v3079 = vsel %vm874, %v3057, 0.0
        %3080 = vadd.xlane.f32.xlu0 %v3079
        %v3081 = vpop.xlane.xlu0 %3080
        %v3082 = vmul.f32 %v3060, %v2639
        %v3083 = vmul.f32 %v3063, %v2639
        %v3084 = vmul.f32 %v3066, %v2639
        %v3085 = vmul.f32 %v3069, %v2639
        %v3086 = vmul.f32 %v3072, %v2639
        %v3087 = vmul.f32 %v3075, %v2639
        %v3088 = vmul.f32 %v3078, %v2639
        %v3089 = vmul.f32 %v3081, %v2639
        %v3090 = vadd.f32 %v3082, 1e-05
        %v3091 = vadd.f32 %v3083, 1e-05
        %v3092 = vadd.f32 %v3084, 1e-05
        %v3093 = vadd.f32 %v3085, 1e-05
        %v3094 = vadd.f32 %v3086, 1e-05
        %v3095 = vadd.f32 %v3087, 1e-05
        %v3096 = vadd.f32 %v3088, 1e-05
        %v3097 = vadd.f32 %v3089, 1e-05
        %v3098 = vrsqrt.pop %v3090
        %v3099 = vrsqrt.pop %v3091
        %v3100 = vrsqrt.pop %v3092
        %v3101 = vrsqrt.pop %v3093
        %v3102 = vrsqrt.pop %v3094
        %v3103 = vrsqrt.pop %v3095
        %v3104 = vrsqrt.pop %v3096
        %v3105 = vrsqrt.pop %v3097
        %v3106 = vmul.f32 %v3042, %v3098
        %v3107 = vmul.f32 %v3043, %v3099
        %v3108 = vmul.f32 %v3044, %v3100
        %v3109 = vmul.f32 %v3045, %v3101
        %v3110 = vmul.f32 %v3046, %v3102
        %v3111 = vmul.f32 %v3047, %v3103
        %v3112 = vmul.f32 %v3048, %v3104
        %v3113 = vmul.f32 %v3049, %v3105
        %v3115 = vlaneseq
        %v3116 = vshrl.u32 %v3115, 7
        %v3117 = vsub.s32 0, %v3116
        %v3118 = vrot.slane %v3008, %v3117
        %v3120 = vmul.f32 %v3106, %v3118
        %v3121 = vmul.f32 %v3107, %v3118
        %v3122 = vmul.f32 %v3108, %v3118
        %v3123 = vmul.f32 %v3109, %v3118
        %v3124 = vmul.f32 %v3110, %v3118
        %v3125 = vmul.f32 %v3111, %v3118
        %v3126 = vmul.f32 %v3112, %v3118
        %v3127 = vmul.f32 %v3113, %v3118
        %v3129 = vlaneseq
        %v3130 = vshrl.u32 %v3129, 7
        %v3131 = vsub.s32 0, %v3130
        %v3132 = vrot.slane %v3009, %v3131
        %v3134 = vadd.f32 %v3120, %v3132
        %v3135 = vadd.f32 %v3121, %v3132
        %v3136 = vadd.f32 %v3122, %v3132
        %v3137 = vadd.f32 %v3123, %v3132
        %v3138 = vadd.f32 %v3124, %v3132
        %v3139 = vadd.f32 %v3125, %v3132
        %v3140 = vadd.f32 %v3126, %v3132
        %v3141 = vadd.f32 %v3127, %v3132
        %3142 = vst.msk [vmem:[%s810] sm:$0xff] %vm874, %v3134
        %3143 = vst.msk [vmem:[%s810 + $0x8] sm:$0xff] %vm874, %v3135
        %3144 = vst.msk [vmem:[%s810 + $0x10] sm:$0xff] %vm874, %v3136
        %3145 = vst.msk [vmem:[%s810 + $0x18] sm:$0xff] %vm874, %v3137
        %3146 = vst.msk [vmem:[%s810 + $0x20] sm:$0xff] %vm874, %v3138
        %3147 = vst.msk [vmem:[%s810 + $0x28] sm:$0xff] %vm874, %v3139
        %3148 = vst.msk [vmem:[%s810 + $0x30] sm:$0xff] %vm874, %v3140
        %3149 = vst.msk [vmem:[%s810 + $0x38] sm:$0xff] %vm874, %v3141
        %s3150 = smul.u32 8, %s38
        %p3151 = scmp.lt.s32.totalorder %s3150, 15
        %s3152 = scalar_select %p3151, %s3150, 15
        %s3153 = smul.addr %s3152, 8
        %s3154 = scalar_lea.vmem %s23, %s3153
        // Predicated region
        $region121: #{tpu_custom_call.1} parent=111 // pred_check
          %p3155 = pneg %p559
        $region122: #{tpu_custom_call.1} parent=111 // pred_check_branch
          %3157 = sbr.rel (%p3155) target = $region124
        $region123: #{tpu_custom_call.1} parent=111 // pred_region
          %s3158 = smul.u32 8, %s38
        $region124: #{tpu_custom_call.1} parent=111 // pred_fallthru
          _
      $region112: #{tpu_custom_call.1} parent=5 // pred_fallthru
        _
      %p3159 = scmp.le.s32.totalorder 2, %s33
      // Predicated region
      $region125: #{tpu_custom_call.1} parent=5 // pred_check
        %p3160 = pneg %p3159
      $region126: #{tpu_custom_call.1} parent=5 // pred_check_branch
        %3162 = sbr.rel (%p3160) target = $region128
      $region127: #{tpu_custom_call.1} parent=5 // pred_region
        %s3163 = ssub.s32 %s33, 2
        // Predicated region
        $region129: #{tpu_custom_call.1} parent=127 // pred_check
          %p3164 = pneg %p565
        $region130: #{tpu_custom_call.1} parent=127 // pred_check_branch
          %3166 = sbr.rel (%p3164) target = $region132
        $region131: #{tpu_custom_call.1} parent=127 // pred_region
          %s3167 = smul.u32 8, %s39
          %p3168 = scmp.lt.s32.totalorder %s3167, 15
          %s3169 = scalar_select %p3168, %s3167, 15
          %s3170 = smul.addr %s3169, 8
          %s3171 = scalar_lea.vmem %s23, %s3170
        $region132: #{tpu_custom_call.1} parent=127 // pred_fallthru
          _
      $region128: #{tpu_custom_call.1} parent=5 // pred_fallthru
        _
    $region6: #{tpu_custom_call.1} parent=1 // loop_footer
      %s37 = sadd.s32 1, %s33
    $region7: #{tpu_custom_call.1} parent=1 // loop_footer_branch
      %32 = sbr.rel target = $region3
    $region8: #{tpu_custom_call.1} parent=1 // loop_exit
      _
    %3172 = vsyncpa [#allocation3], 1
    %s3173 = scalar_lea.sflag [#allocation3], 1
    %3174 = vsyncpa %s3173, 1
    %3175 = vsyncpa [#allocation5], 1

</llo_original>
